<compile_context>
chip_gen: v7x
topology: tpu7x:2x2x1
jax: 0.10.0
libtpu: 0.0.40
codegen_flags: <defaults>
</compile_context>

<pallas_src>
import functools

import jax
import jax.numpy as jnp
from jax import lax
from jax.experimental import pallas as pl
from jax.experimental.pallas import tpu as pltpu

GROUPS = 4
EPS = 1e-5
LANE = 128


# --------------------------------------------------------------------------------------
# In-kernel helpers
# --------------------------------------------------------------------------------------
def _gn_relu_fused(h, gamma_lane, beta_lane, seld, *, images, rows, inv_count):
    """Per-image GroupNorm(GROUPS) + affine + ReLU on a lane-dense (images*rows, L) slab.

    h:           (images*rows, L) f32 conv output, bias already added.
    gamma/beta:  (1, L) per-channel affine tiled along W (zero on padded lanes).
    seld:        (2G, 2L) block-diagonal one-hot lane->group selection (padded lanes excluded).
    inv_count:   1 / (#real elements per image per group).
    """
    m, lanes = h.shape
    # One fused per-image row-reduce over lane-stacked [h | h*h] (lane-aligned concat).
    hcat = jnp.concatenate([h, h * h], axis=-1)                          # (M, 2L)
    rsq = jnp.sum(hcat.reshape(images, rows, 2 * lanes), axis=1)         # (P, 2L)
    dn = (((1,), (1,)), ((), ()))                                        # contract lane dims
    g = lax.dot_general(rsq, seld, dn, preferred_element_type=jnp.float32)  # (P, 2G)
    mean = g[:, :GROUPS] * inv_count
    var = jnp.maximum(g[:, GROUPS:] * inv_count - mean * mean, 0.0)      # clamp single-pass var
    inv = lax.rsqrt(var + EPS)
    sel = seld[:GROUPS, :lanes]                                          # (G, L) plain block
    mean_l = jnp.dot(mean, sel, preferred_element_type=jnp.float32)[:, None, :]  # (P, 1, L)
    inv_l = jnp.dot(inv, sel, preferred_element_type=jnp.float32)[:, None, :]    # (P, 1, L)
    scale = gamma_lane * inv_l
    shift = beta_lane - mean_l * scale
    hs = h.reshape(images, rows, lanes)
    return jnp.maximum(hs * scale + shift, 0.0).reshape(m, lanes)        # fused FMA + ReLU


def downblock_kernel(xcat_ref, a1_ref, a2_ref,
                     b1_ref, g1_ref, be1_ref,
                     b2_ref, g2_ref, be2_ref,
                     s1_ref, s2_ref, out_ref,
                     *, ho, inv_cnt1, inv_cnt2):
    m = out_ref.shape[0]                       # packed rows = images_per_step * ho
    images = m // ho
    rim = lax.broadcasted_iota(jnp.int32, (m, 1), 0) % ho   # row index within each image

    # ---- conv1 (3x3, stride 2, pad 1): ONE matmul, K = 3*W*Cin (ky folded in the wrapper) ----
    acc1 = jnp.dot(xcat_ref[...], a1_ref[...], preferred_element_type=jnp.float32)
    h1 = _gn_relu_fused(acc1 + b1_ref[...], g1_ref[...], be1_ref[...], s1_ref[...],
                        images=images, rows=ho, inv_count=inv_cnt1)

    # ---- conv2 (3x3, stride 1, pad 1): H halo via sublane roll + per-image row mask (f32),
    #      kx / W halo folded into a2; ONE matmul with K = 3*Wo*Cmid_p ----
    hup = jnp.where(rim == 0, 0.0, pltpu.roll(h1, shift=1, axis=0))          # row i-1
    hdn = jnp.where(rim == ho - 1, 0.0, pltpu.roll(h1, shift=m - 1, axis=0))  # row i+1
    h2in = jnp.concatenate([hup, h1, hdn], axis=-1).astype(a2_ref.dtype)      # cast at MXU operand
    acc2 = jnp.dot(h2in, a2_ref[...], preferred_element_type=jnp.float32)

    out_ref[...] = _gn_relu_fused(acc2 + b2_ref[...], g2_ref[...], be2_ref[...], s2_ref[...],
                                  images=images, rows=ho, inv_count=inv_cnt2)


# --------------------------------------------------------------------------------------
# Wrapper-side (one-time, data-independent) weight / layout preprocessing
# --------------------------------------------------------------------------------------
def _pad_to_lane_multiple(c, wo):
    cp = c
    while (wo * cp) % LANE != 0:
        cp += 1
    return cp


def _conv1_matrix(w1, w_in, wo, cmid_p):
    """(3*W*Cin, Wo*Cmid_p): stride-2 kx structure + output-channel zero-padding folded in."""
    _, _, _, cmid = w1.shape
    w1p = jnp.pad(w1, ((0, 0), (0, 0), (0, 0), (0, cmid_p - cmid)))
    l = jnp.arange(w_in)[:, None, None]
    kx = jnp.arange(3)[None, :, None]
    j = jnp.arange(wo)[None, None, :]
    sel = (l == 2 * j + kx - 1).astype(w1p.dtype)        # (W, 3, Wo); out-of-range col -> pad (0)
    a = jnp.einsum('lkj,ykio->ylijo', sel, w1p)          # (3, W, Cin, Wo, Cmid_p)
    return a.reshape(3 * w_in * w1.shape[2], wo * cmid_p)


def _conv2_matrix(w2, wo, cmid_p, cout_p):
    """(3*Wo*Cmid_p, Wo*Cout_p): stride-1 kx structure + channel zero-padding folded in."""
    _, _, cmid, cout = w2.shape
    w2p = jnp.pad(w2, ((0, 0), (0, 0), (0, cmid_p - cmid), (0, cout_p - cout)))
    l = jnp.arange(wo)[:, None, None]
    kx = jnp.arange(3)[None, :, None]
    j = jnp.arange(wo)[None, None, :]
    sel = (l == j + kx - 1).astype(w2p.dtype)            # (Wo, 3, Wo); -1 / Wo -> pad (0)
    a = jnp.einsum('lkj,ykio->ylijo', sel, w2p)          # (3, Wo, Cmid_p, Wo, Cout_p)
    return a.reshape(3 * wo * cmid_p, wo * cout_p)


def _group_select_diag(c, c_p, wo, groups=GROUPS):
    """(2G, 2*wo*c_p) block-diagonal lane->group one-hot; padded channels map to no group."""
    ch = jnp.arange(wo * c_p) % c_p
    grp = jnp.where(ch < c, ch // (c // groups), -1)
    s = (jnp.arange(groups)[:, None] == grp[None, :]).astype(jnp.float32)   # (G, L)
    z = jnp.zeros_like(s)
    return jnp.concatenate(
        [jnp.concatenate([s, z], axis=1), jnp.concatenate([z, s], axis=1)], axis=0)


def _lane_vec(p, c_p, wo):
    """Per-channel vector zero-padded to c_p and tiled to the (1, wo*c_p) lane layout."""
    pp = jnp.pad(p.astype(jnp.float32), (0, c_p - p.shape[0]))
    return jnp.tile(pp, wo).reshape(1, -1)


def downblock_forward(x_nchw, params, *, compute_dtype=jnp.float32):
    """Mirrors DownBlock.forward: returns (res, x), both NCHW."""
    n, cin, h, w = x_nchw.shape
    cmid = params["w1"].shape[-1]
    cout = params["w2"].shape[-1]
    assert h % 2 == 0 and w % 2 == 0
    assert cmid % GROUPS == 0 and cout % GROUPS == 0
    ho, wo = h // 2, w // 2

    # Channel padding so n1/n2 (matmul N dims == stored lane widths) are multiples of 128:
    # unmasked stores + full MXU columns; padded lanes carry zero weights / params and are
    # excluded from GroupNorm statistics, then sliced off below.
    cmid_p = _pad_to_lane_multiple(cmid, wo)
    cout_p = _pad_to_lane_multiple(cout, wo)
    k1 = w * cin
    n1 = wo * cmid_p              # also conv2's per-ky K
    n2 = wo * cout_p

    # Grid: two "parallel" steps when the batch allows it (keeps both v7x TensorCores busy),
    # the rest of the batch is packed into the matmul M dimension (fewer 0.35us grid steps,
    # better MXU row fill).
    num_blocks = 2 if (n >= 2 and n % 2 == 0) else 1
    ipb = n // num_blocks
    m = ipb * ho

    # ---- layout plumbing (fuses into the single relayout of the input) ----
    x_rows = jnp.transpose(x_nchw, (0, 2, 3, 1)).reshape(n, h, k1).astype(compute_dtype)
    xe = x_rows[:, 0::2, :]                                        # input rows 2i
    xo = x_rows[:, 1::2, :]                                        # input rows 2i+1
    xm = jnp.concatenate([jnp.zeros_like(xo[:, :1]), xo[:, :-1]], axis=1)   # rows 2i-1 (top pad)
    x_cat = jnp.concatenate([xm, xe, xo], axis=-1).reshape(num_blocks, m, 3 * k1)

    # ---- one-time weight / param preprocessing (banded matrices fold kx + channel padding) ----
    a1 = _conv1_matrix(params["w1"].astype(jnp.float32), w, wo, cmid_p).astype(compute_dtype)
    a2 = _conv2_matrix(params["w2"].astype(jnp.float32), wo, cmid_p, cout_p).astype(compute_dtype)
    s1d = _group_select_diag(cmid, cmid_p, wo)
    s2d = _group_select_diag(cout, cout_p, wo)
    b1, g1, be1 = (_lane_vec(params[k], cmid_p, wo) for k in ("b1", "g1", "be1"))
    b2, g2, be2 = (_lane_vec(params[k], cout_p, wo) for k in ("b2", "g2", "be2"))

    kernel = functools.partial(
        downblock_kernel, ho=ho,
        inv_cnt1=1.0 / float(ho * wo * (cmid // GROUPS)),
        inv_cnt2=1.0 / float(ho * wo * (cout // GROUPS)))

    args = (x_cat, a1, a2, b1, g1, be1, b2, g2, be2, s1d, s2d)
    cost = pl.CostEstimate(
        flops=int(2 * n * ho * 3 * (k1 * n1 + n1 * n2)),
        transcendentals=int(2 * n * GROUPS),
        bytes_accessed=int(sum(int(a.size) * a.dtype.itemsize for a in args)
                           + num_blocks * m * n2 * 4))

    per_blk = lambda i: (i, 0, 0)
    const = lambda i: (0, 0)

    def build_call(single_buffer_consts):
        extra = {"pipeline_mode": pl.Buffered(1)} if single_buffer_consts else {}
        cspec = lambda shape: pl.BlockSpec(shape, const, **extra)
        return pl.pallas_call(
            kernel,
            out_shape=jax.ShapeDtypeStruct((num_blocks, m, n2), jnp.float32),
            grid_spec=pltpu.PrefetchScalarGridSpec(
                num_scalar_prefetch=0,
                grid=(num_blocks,),
                in_specs=[
                    pl.BlockSpec((pl.Squeezed(), m, 3 * k1), per_blk),   # packed input rows
                    cspec((3 * k1, n1)),                                 # a1 (conv1 banded)
                    cspec((3 * n1, n2)),                                 # a2 (conv2 banded)
                    cspec((1, n1)), cspec((1, n1)), cspec((1, n1)),      # b1, gamma1, beta1
                    cspec((1, n2)), cspec((1, n2)), cspec((1, n2)),      # b2, gamma2, beta2
                    cspec((2 * GROUPS, 2 * n1)),                         # GN1 group selection
                    cspec((2 * GROUPS, 2 * n2)),                         # GN2 group selection
                ],
                out_specs=pl.BlockSpec((pl.Squeezed(), m, n2), per_blk),
            ),
            compiler_params=pltpu.CompilerParams(dimension_semantics=("parallel",)),
            cost_estimate=cost,
        )

    try:
        out = build_call(True)(*args)       # grid-constant operands single-buffered
    except Exception:                       # fallback if pipeline_mode=Buffered(1) unsupported
        out = build_call(False)(*args)

    res = out.reshape(n, ho, wo, cout_p)[..., :cout]
    return jnp.transpose(res, (0, 3, 1, 2)), x_nchw


# --------------------------------------------------------------------------------------
# Pure-JAX reference (correctness check only)
# --------------------------------------------------------------------------------------
def _ref_group_norm_nchw(x, gamma, beta, groups=GROUPS, eps=EPS):
    n, c, h, w = x.shape
    xg = x.reshape(n, groups, c // groups, h, w)
    mean = jnp.mean(xg, axis=(2, 3, 4), keepdims=True)
    var = jnp.mean((xg - mean) ** 2, axis=(2, 3, 4), keepdims=True)
    xn = ((xg - mean) / jnp.sqrt(var + eps)).reshape(n, c, h, w)
    return xn * gamma.reshape(1, c, 1, 1) + beta.reshape(1, c, 1, 1)


def downblock_reference(x_nchw, params):
    w1_oihw = jnp.transpose(params["w1"], (3, 2, 0, 1))
    w2_oihw = jnp.transpose(params["w2"], (3, 2, 0, 1))
    y = lax.conv_general_dilated(x_nchw, w1_oihw, (2, 2), ((1, 1), (1, 1)),
                                 dimension_numbers=("NCHW", "OIHW", "NCHW"))
    y = y + params["b1"].reshape(1, -1, 1, 1)
    y = jnp.maximum(_ref_group_norm_nchw(y, params["g1"], params["be1"]), 0.0)
    y = lax.conv_general_dilated(y, w2_oihw, (1, 1), ((1, 1), (1, 1)),
                                 dimension_numbers=("NCHW", "OIHW", "NCHW"))
    y = y + params["b2"].reshape(1, -1, 1, 1)
    y = jnp.maximum(_ref_group_norm_nchw(y, params["g2"], params["be2"]), 0.0)
    return y, x_nchw


if __name__ == "__main__":
    key = jax.random.PRNGKey(0)
    keys = jax.random.split(key, 10)
    N, Cin, H, W = 2, 4, 16, 16
    Cout = 8          # must be divisible by the GroupNorm group count (4)
    Cmid = Cout

    params = {
        "w1": 0.1 * jax.random.normal(keys[0], (3, 3, Cin, Cmid), jnp.float32),
        "b1": 0.05 * jax.random.normal(keys[1], (Cmid,), jnp.float32),
        "g1": 1.0 + 0.1 * jax.random.normal(keys[2], (Cmid,), jnp.float32),
        "be1": 0.05 * jax.random.normal(keys[3], (Cmid,), jnp.float32),
        "w2": 0.1 * jax.random.normal(keys[4], (3, 3, Cmid, Cout), jnp.float32),
        "b2": 0.05 * jax.random.normal(keys[5], (Cout,), jnp.float32),
        "g2": 1.0 + 0.1 * jax.random.normal(keys[6], (Cout,), jnp.float32),
        "be2": 0.05 * jax.random.normal(keys[7], (Cout,), jnp.float32),
    }
    x = jax.random.normal(keys[8], (N, Cin, H, W), jnp.float32)

    # f32 path (tight numerical check against the XLA reference).
    res, passthrough = downblock_forward(x, params)
    jax.block_until_ready(res)
    res_ref, _ = downblock_reference(x, params)
    assert res.shape == (N, Cout, H // 2, W // 2), res.shape
    assert bool(jnp.allclose(passthrough, x))
    err = float(jnp.max(jnp.abs(res - res_ref)))
    assert err < 1e-4, err

    # Batch-packed path: N=4 -> 2 images share one matmul M slab per grid step (per-image GN).
    x4 = jax.random.normal(keys[9], (4, Cin, H, W), jnp.float32)
    res4, _ = downblock_forward(x4, params)
    jax.block_until_ready(res4)
    ref4, _ = downblock_reference(x4, params)
    err4 = float(jnp.max(jnp.abs(res4 - ref4)))
    assert err4 < 1e-4, err4

    # bf16-MXU-operand path (v6e/v7x knob); loose sanity tolerance vs the f32 reference
    # per the review's note that a 1e-4 check is not meaningful for bf16 matmul inputs.
    res_bf, _ = downblock_forward(x, params, compute_dtype=jnp.bfloat16)
    jax.block_until_ready(res_bf)
    err_bf = float(jnp.max(jnp.abs(res_bf - res_ref)))
    assert err_bf < 1.5e-1, err_bf

    print("KERNEL_OK")
</pallas_src>

<mosaic_0001>
module attributes {stable_mosaic.version = 11 : i64} {
  func.func @downblock_kernel(%arg0: i32, %arg1: memref<1x8x192xf32, #tpu.memory_space<vmem>>, %arg2: memref<192x128xf32, #tpu.memory_space<vmem>>, %arg3: memref<384x128xf32, #tpu.memory_space<vmem>>, %arg4: memref<1x128xf32, #tpu.memory_space<vmem>>, %arg5: memref<1x128xf32, #tpu.memory_space<vmem>>, %arg6: memref<1x128xf32, #tpu.memory_space<vmem>>, %arg7: memref<1x128xf32, #tpu.memory_space<vmem>>, %arg8: memref<1x128xf32, #tpu.memory_space<vmem>>, %arg9: memref<1x128xf32, #tpu.memory_space<vmem>>, %arg10: memref<8x256xf32, #tpu.memory_space<vmem>>, %arg11: memref<8x256xf32, #tpu.memory_space<vmem>>, %arg12: memref<1x8x128xf32, #tpu.memory_space<vmem>>) attributes {dimension_semantics = [#tpu.dimension_semantics<parallel>], iteration_bounds = array<i64: 2>, scalar_prefetch = 0 : i64, scratch_operands = 0 : i64, tpu.core_type = #tpu.core_type<tc>, window_params = [{transform_indices = @transform_0, window_bounds = array<i64: 1, 8, 192>}, {pipeline_mode = #tpu.pipeline_mode<synchronous>, transform_indices = @transform_1, window_bounds = array<i64: 192, 128>}, {pipeline_mode = #tpu.pipeline_mode<synchronous>, transform_indices = @transform_2, window_bounds = array<i64: 384, 128>}, {pipeline_mode = #tpu.pipeline_mode<synchronous>, transform_indices = @transform_3, window_bounds = array<i64: 1, 128>}, {pipeline_mode = #tpu.pipeline_mode<synchronous>, transform_indices = @transform_4, window_bounds = array<i64: 1, 128>}, {pipeline_mode = #tpu.pipeline_mode<synchronous>, transform_indices = @transform_5, window_bounds = array<i64: 1, 128>}, {pipeline_mode = #tpu.pipeline_mode<synchronous>, transform_indices = @transform_6, window_bounds = array<i64: 1, 128>}, {pipeline_mode = #tpu.pipeline_mode<synchronous>, transform_indices = @transform_7, window_bounds = array<i64: 1, 128>}, {pipeline_mode = #tpu.pipeline_mode<synchronous>, transform_indices = @transform_8, window_bounds = array<i64: 1, 128>}, {pipeline_mode = #tpu.pipeline_mode<synchronous>, transform_indices = @transform_9, window_bounds = array<i64: 8, 256>}, {pipeline_mode = #tpu.pipeline_mode<synchronous>, transform_indices = @transform_10, window_bounds = array<i64: 8, 256>}, {transform_indices = @transform_11, window_bounds = array<i64: 1, 8, 128>}]} {
    %0 = tpu.iota {dimensions = array<i32: 0>} : vector<8x1xi32>
    %c8_i32 = arith.constant 8 : i32
    %c0_i32 = arith.constant 0 : i32
    %1 = arith.cmpi eq, %c8_i32, %c0_i32 : i32
    %c1_i32 = arith.constant 1 : i32
    %2 = arith.select %1, %c1_i32, %c8_i32 : i32
    %3 = vector.broadcast %2 : i32 to vector<8x1xi32>
    %4 = arith.remsi %0, %3 : vector<8x1xi32>
    %c0_i32_0 = arith.constant 0 : i32
    %5 = vector.broadcast %c0_i32_0 : i32 to vector<8x1xi32>
    %6 = arith.cmpi ne, %4, %5 : vector<8x1xi32>
    %c0_i32_1 = arith.constant 0 : i32
    %7 = vector.broadcast %c0_i32_1 : i32 to vector<8x1xi32>
    %8 = arith.cmpi slt, %4, %7 : vector<8x1xi32>
    %c0_i32_2 = arith.constant 0 : i32
    %9 = arith.cmpi slt, %2, %c0_i32_2 : i32
    %10 = vector.broadcast %9 : i1 to vector<8x1xi1>
    %11 = vector.broadcast %10 : vector<8x1xi1> to vector<8x1xi1>
    %12 = arith.xori %8, %11 : vector<8x1xi1>
    %13 = arith.andi %12, %6 : vector<8x1xi1>
    %14 = vector.broadcast %2 : i32 to vector<8x1xi32>
    %15 = arith.addi %4, %14 : vector<8x1xi32>
    %16 = arith.select %13, %15, %4 : vector<8x1xi1>, vector<8x1xi32>
    %c0 = arith.constant 0 : index
    %c0_3 = arith.constant 0 : index
    %c0_4 = arith.constant 0 : index
    %17 = vector.load %arg1[%c0, %c0_3, %c0_4] : memref<1x8x192xf32, #tpu.memory_space<vmem>>, vector<1x8x192xf32>
    %18 = vector.shape_cast %17 : vector<1x8x192xf32> to vector<8x192xf32>
    %c0_5 = arith.constant 0 : index
    %c0_6 = arith.constant 0 : index
    %19 = vector.load %arg2[%c0_5, %c0_6] : memref<192x128xf32, #tpu.memory_space<vmem>>, vector<192x128xf32>
    %cst = arith.constant dense<0.000000e+00> : vector<8x128xf32>
    %20 = tpu.matmul %18, %19, %cst {dimension_numbers = #tpu.dot_dimension_numbers<[1], [0], [0], [1], [0, 0, 1, 1], [], []>} : vector<8x192xf32>, vector<192x128xf32>, vector<8x128xf32> -> vector<8x128xf32>
    %c0_7 = arith.constant 0 : index
    %c0_8 = arith.constant 0 : index
    %21 = vector.load %arg4[%c0_7, %c0_8] : memref<1x128xf32, #tpu.memory_space<vmem>>, vector<1x128xf32>
    %22 = vector.broadcast %21 : vector<1x128xf32> to vector<8x128xf32>
    %23 = arith.addf %20, %22 : vector<8x128xf32>
    %c0_9 = arith.constant 0 : index
    %c0_10 = arith.constant 0 : index
    %24 = vector.load %arg5[%c0_9, %c0_10] : memref<1x128xf32, #tpu.memory_space<vmem>>, vector<1x128xf32>
    %c0_11 = arith.constant 0 : index
    %c0_12 = arith.constant 0 : index
    %25 = vector.load %arg6[%c0_11, %c0_12] : memref<1x128xf32, #tpu.memory_space<vmem>>, vector<1x128xf32>
    %c0_13 = arith.constant 0 : index
    %c0_14 = arith.constant 0 : index
    %26 = vector.load %arg10[%c0_13, %c0_14] : memref<8x256xf32, #tpu.memory_space<vmem>>, vector<8x256xf32>
    %27 = arith.mulf %23, %23 : vector<8x128xf32>
    %28 = tpu.concatenate %23, %27 in 1 : vector<8x128xf32>, vector<8x128xf32> -> vector<8x256xf32>
    %29 = vector.shape_cast %28 : vector<8x256xf32> to vector<1x8x256xf32>
    %cst_15 = arith.constant dense<0.000000e+00> : vector<1x256xf32>
    %30 = vector.multi_reduction <add>, %29, %cst_15 [1] : vector<1x8x256xf32> to vector<1x256xf32>
    %cst_16 = arith.constant dense<0.000000e+00> : vector<1x8xf32>
    %31 = tpu.matmul %30, %26, %cst_16 {dimension_numbers = #tpu.dot_dimension_numbers<[1], [1], [0], [0], [0, 0, 1, 0], [], []>} : vector<1x256xf32>, vector<8x256xf32>, vector<1x8xf32> -> vector<1x8xf32>
    %32 = vector.extract_strided_slice %31 {offsets = [0, 0], sizes = [1, 4], strides = [1, 1]} : vector<1x8xf32> to vector<1x4xf32>
    %cst_17 = arith.constant 7.812500e-03 : f32
    %33 = vector.broadcast %cst_17 : f32 to vector<1x4xf32>
    %34 = arith.mulf %32, %33 : vector<1x4xf32>
    %35 = vector.extract_strided_slice %31 {offsets = [0, 4], sizes = [1, 4], strides = [1, 1]} : vector<1x8xf32> to vector<1x4xf32>
    %cst_18 = arith.constant 7.812500e-03 : f32
    %36 = vector.broadcast %cst_18 : f32 to vector<1x4xf32>
    %37 = arith.mulf %35, %36 : vector<1x4xf32>
    %38 = arith.mulf %34, %34 : vector<1x4xf32>
    %39 = arith.subf %37, %38 : vector<1x4xf32>
    %cst_19 = arith.constant 0.000000e+00 : f32
    %40 = vector.broadcast %cst_19 : f32 to vector<1x4xf32>
    %41 = arith.maximumf %39, %40 : vector<1x4xf32>
    %cst_20 = arith.constant 9.99999974E-6 : f32
    %42 = vector.broadcast %cst_20 : f32 to vector<1x4xf32>
    %43 = arith.addf %41, %42 : vector<1x4xf32>
    %44 = math.rsqrt %43 : vector<1x4xf32>
    %45 = vector.extract_strided_slice %26 {offsets = [0, 0], sizes = [4, 128], strides = [1, 1]} : vector<8x256xf32> to vector<4x128xf32>
    %cst_21 = arith.constant dense<0.000000e+00> : vector<1x128xf32>
    %46 = tpu.matmul %34, %45, %cst_21 {dimension_numbers = #tpu.dot_dimension_numbers<[1], [0], [0], [1], [0, 0, 1, 1], [], []>} : vector<1x4xf32>, vector<4x128xf32>, vector<1x128xf32> -> vector<1x128xf32>
    %47 = vector.shape_cast %46 : vector<1x128xf32> to vector<1x1x128xf32>
    %cst_22 = arith.constant dense<0.000000e+00> : vector<1x128xf32>
    %48 = tpu.matmul %44, %45, %cst_22 {dimension_numbers = #tpu.dot_dimension_numbers<[1], [0], [0], [1], [0, 0, 1, 1], [], []>} : vector<1x4xf32>, vector<4x128xf32>, vector<1x128xf32> -> vector<1x128xf32>
    %49 = vector.shape_cast %48 : vector<1x128xf32> to vector<1x1x128xf32>
    %50 = vector.shape_cast %24 : vector<1x128xf32> to vector<1x1x128xf32>
    %51 = arith.mulf %50, %49 : vector<1x1x128xf32>
    %52 = arith.mulf %47, %51 : vector<1x1x128xf32>
    %53 = vector.shape_cast %25 : vector<1x128xf32> to vector<1x1x128xf32>
    %54 = arith.subf %53, %52 : vector<1x1x128xf32>
    %55 = vector.shape_cast %23 : vector<8x128xf32> to vector<1x8x128xf32>
    %56 = vector.broadcast %51 : vector<1x1x128xf32> to vector<1x8x128xf32>
    %57 = arith.mulf %55, %56 : vector<1x8x128xf32>
    %58 = vector.broadcast %54 : vector<1x1x128xf32> to vector<1x8x128xf32>
    %59 = arith.addf %57, %58 : vector<1x8x128xf32>
    %cst_23 = arith.constant 0.000000e+00 : f32
    %60 = vector.broadcast %cst_23 : f32 to vector<1x8x128xf32>
    %61 = arith.maximumf %59, %60 : vector<1x8x128xf32>
    %62 = vector.shape_cast %61 : vector<1x8x128xf32> to vector<8x128xf32>
    %c0_i32_24 = arith.constant 0 : i32
    %63 = vector.broadcast %c0_i32_24 : i32 to vector<8x1xi32>
    %64 = arith.cmpi eq, %16, %63 : vector<8x1xi32>
    %c1_i32_25 = arith.constant 1 : i32
    %65 = tpu.dynamic_rotate %62 by %c1_i32_25 dim 0 : vector<8x128xf32>, i32 -> vector<8x128xf32>
    %cst_26 = arith.constant 0.000000e+00 : f32
    %66 = vector.shape_cast %64 : vector<8x1xi1> to vector<8x1xi1>
    %67 = vector.broadcast %66 : vector<8x1xi1> to vector<8x128xi1>
    %68 = vector.broadcast %cst_26 : f32 to vector<8x128xf32>
    %69 = arith.select %67, %68, %65 : vector<8x128xi1>, vector<8x128xf32>
    %c7_i32 = arith.constant 7 : i32
    %70 = vector.broadcast %c7_i32 : i32 to vector<8x1xi32>
    %71 = arith.cmpi eq, %16, %70 : vector<8x1xi32>
    %c7_i32_27 = arith.constant 7 : i32
    %72 = tpu.dynamic_rotate %62 by %c7_i32_27 dim 0 : vector<8x128xf32>, i32 -> vector<8x128xf32>
    %cst_28 = arith.constant 0.000000e+00 : f32
    %73 = vector.shape_cast %71 : vector<8x1xi1> to vector<8x1xi1>
    %74 = vector.broadcast %73 : vector<8x1xi1> to vector<8x128xi1>
    %75 = vector.broadcast %cst_28 : f32 to vector<8x128xf32>
    %76 = arith.select %74, %75, %72 : vector<8x128xi1>, vector<8x128xf32>
    %77 = tpu.concatenate %69, %62, %76 in 1 : vector<8x128xf32>, vector<8x128xf32>, vector<8x128xf32> -> vector<8x384xf32>
    %c0_29 = arith.constant 0 : index
    %c0_30 = arith.constant 0 : index
    %78 = vector.load %arg3[%c0_29, %c0_30] : memref<384x128xf32, #tpu.memory_space<vmem>>, vector<384x128xf32>
    %cst_31 = arith.constant dense<0.000000e+00> : vector<8x128xf32>
    %79 = tpu.matmul %77, %78, %cst_31 {dimension_numbers = #tpu.dot_dimension_numbers<[1], [0], [0], [1], [0, 0, 1, 1], [], []>} : vector<8x384xf32>, vector<384x128xf32>, vector<8x128xf32> -> vector<8x128xf32>
    %c0_32 = arith.constant 0 : index
    %c0_33 = arith.constant 0 : index
    %80 = vector.load %arg7[%c0_32, %c0_33] : memref<1x128xf32, #tpu.memory_space<vmem>>, vector<1x128xf32>
    %81 = vector.broadcast %80 : vector<1x128xf32> to vector<8x128xf32>
    %82 = arith.addf %79, %81 : vector<8x128xf32>
    %c0_34 = arith.constant 0 : index
    %c0_35 = arith.constant 0 : index
    %83 = vector.load %arg8[%c0_34, %c0_35] : memref<1x128xf32, #tpu.memory_space<vmem>>, vector<1x128xf32>
    %c0_36 = arith.constant 0 : index
    %c0_37 = arith.constant 0 : index
    %84 = vector.load %arg9[%c0_36, %c0_37] : memref<1x128xf32, #tpu.memory_space<vmem>>, vector<1x128xf32>
    %c0_38 = arith.constant 0 : index
    %c0_39 = arith.constant 0 : index
    %85 = vector.load %arg11[%c0_38, %c0_39] : memref<8x256xf32, #tpu.memory_space<vmem>>, vector<8x256xf32>
    %86 = arith.mulf %82, %82 : vector<8x128xf32>
    %87 = tpu.concatenate %82, %86 in 1 : vector<8x128xf32>, vector<8x128xf32> -> vector<8x256xf32>
    %88 = vector.shape_cast %87 : vector<8x256xf32> to vector<1x8x256xf32>
    %cst_40 = arith.constant dense<0.000000e+00> : vector<1x256xf32>
    %89 = vector.multi_reduction <add>, %88, %cst_40 [1] : vector<1x8x256xf32> to vector<1x256xf32>
    %cst_41 = arith.constant dense<0.000000e+00> : vector<1x8xf32>
    %90 = tpu.matmul %89, %85, %cst_41 {dimension_numbers = #tpu.dot_dimension_numbers<[1], [1], [0], [0], [0, 0, 1, 0], [], []>} : vector<1x256xf32>, vector<8x256xf32>, vector<1x8xf32> -> vector<1x8xf32>
    %91 = vector.extract_strided_slice %90 {offsets = [0, 0], sizes = [1, 4], strides = [1, 1]} : vector<1x8xf32> to vector<1x4xf32>
    %cst_42 = arith.constant 7.812500e-03 : f32
    %92 = vector.broadcast %cst_42 : f32 to vector<1x4xf32>
    %93 = arith.mulf %91, %92 : vector<1x4xf32>
    %94 = vector.extract_strided_slice %90 {offsets = [0, 4], sizes = [1, 4], strides = [1, 1]} : vector<1x8xf32> to vector<1x4xf32>
    %cst_43 = arith.constant 7.812500e-03 : f32
    %95 = vector.broadcast %cst_43 : f32 to vector<1x4xf32>
    %96 = arith.mulf %94, %95 : vector<1x4xf32>
    %97 = arith.mulf %93, %93 : vector<1x4xf32>
    %98 = arith.subf %96, %97 : vector<1x4xf32>
    %cst_44 = arith.constant 0.000000e+00 : f32
    %99 = vector.broadcast %cst_44 : f32 to vector<1x4xf32>
    %100 = arith.maximumf %98, %99 : vector<1x4xf32>
    %cst_45 = arith.constant 9.99999974E-6 : f32
    %101 = vector.broadcast %cst_45 : f32 to vector<1x4xf32>
    %102 = arith.addf %100, %101 : vector<1x4xf32>
    %103 = math.rsqrt %102 : vector<1x4xf32>
    %104 = vector.extract_strided_slice %85 {offsets = [0, 0], sizes = [4, 128], strides = [1, 1]} : vector<8x256xf32> to vector<4x128xf32>
    %cst_46 = arith.constant dense<0.000000e+00> : vector<1x128xf32>
    %105 = tpu.matmul %93, %104, %cst_46 {dimension_numbers = #tpu.dot_dimension_numbers<[1], [0], [0], [1], [0, 0, 1, 1], [], []>} : vector<1x4xf32>, vector<4x128xf32>, vector<1x128xf32> -> vector<1x128xf32>
    %106 = vector.shape_cast %105 : vector<1x128xf32> to vector<1x1x128xf32>
    %cst_47 = arith.constant dense<0.000000e+00> : vector<1x128xf32>
    %107 = tpu.matmul %103, %104, %cst_47 {dimension_numbers = #tpu.dot_dimension_numbers<[1], [0], [0], [1], [0, 0, 1, 1], [], []>} : vector<1x4xf32>, vector<4x128xf32>, vector<1x128xf32> -> vector<1x128xf32>
    %108 = vector.shape_cast %107 : vector<1x128xf32> to vector<1x1x128xf32>
    %109 = vector.shape_cast %83 : vector<1x128xf32> to vector<1x1x128xf32>
    %110 = arith.mulf %109, %108 : vector<1x1x128xf32>
    %111 = arith.mulf %106, %110 : vector<1x1x128xf32>
    %112 = vector.shape_cast %84 : vector<1x128xf32> to vector<1x1x128xf32>
    %113 = arith.subf %112, %111 : vector<1x1x128xf32>
    %114 = vector.shape_cast %82 : vector<8x128xf32> to vector<1x8x128xf32>
    %115 = vector.broadcast %110 : vector<1x1x128xf32> to vector<1x8x128xf32>
    %116 = arith.mulf %114, %115 : vector<1x8x128xf32>
    %117 = vector.broadcast %113 : vector<1x1x128xf32> to vector<1x8x128xf32>
    %118 = arith.addf %116, %117 : vector<1x8x128xf32>
    %cst_48 = arith.constant 0.000000e+00 : f32
    %119 = vector.broadcast %cst_48 : f32 to vector<1x8x128xf32>
    %120 = arith.maximumf %118, %119 : vector<1x8x128xf32>
    %121 = vector.shape_cast %120 : vector<1x8x128xf32> to vector<8x128xf32>
    %c0_49 = arith.constant 0 : index
    %c0_50 = arith.constant 0 : index
    %c0_51 = arith.constant 0 : index
    %122 = vector.load %arg12[%c0_49, %c0_50, %c0_51] : memref<1x8x128xf32, #tpu.memory_space<vmem>>, vector<1x8x128xf32>
    %123 = vector.shape_cast %122 : vector<1x8x128xf32> to vector<8x128xf32>
    %124 = vector.shape_cast %121 : vector<8x128xf32> to vector<1x8x128xf32>
    tpu.vector_store %arg12[%c0_49, %c0_50, %c0_51], %124 {strides = array<i32>} : memref<1x8x128xf32, #tpu.memory_space<vmem>>, vector<1x8x128xf32>,
    return
  }
  func.func @transform_0(%arg0: i32) -> (i32, i32, i32) {
    %c0_i32 = arith.constant 0 : i32
    %c0_i32_0 = arith.constant 0 : i32
    %c0_i32_1 = arith.constant 0 : i32
    return %arg0, %c0_i32, %c0_i32_0 : i32, i32, i32
  }
  func.func @transform_1(%arg0: i32) -> (i32, i32) {
    %c0_i32 = arith.constant 0 : i32
    %c0_i32_0 = arith.constant 0 : i32
    %c0_i32_1 = arith.constant 0 : i32
    return %c0_i32, %c0_i32_0 : i32, i32
  }
  func.func @transform_2(%arg0: i32) -> (i32, i32) {
    %c0_i32 = arith.constant 0 : i32
    %c0_i32_0 = arith.constant 0 : i32
    %c0_i32_1 = arith.constant 0 : i32
    return %c0_i32, %c0_i32_0 : i32, i32
  }
  func.func @transform_3(%arg0: i32) -> (i32, i32) {
    %c0_i32 = arith.constant 0 : i32
    %c0_i32_0 = arith.constant 0 : i32
    %c0_i32_1 = arith.constant 0 : i32
    return %c0_i32, %c0_i32_0 : i32, i32
  }
  func.func @transform_4(%arg0: i32) -> (i32, i32) {
    %c0_i32 = arith.constant 0 : i32
    %c0_i32_0 = arith.constant 0 : i32
    %c0_i32_1 = arith.constant 0 : i32
    return %c0_i32, %c0_i32_0 : i32, i32
  }
  func.func @transform_5(%arg0: i32) -> (i32, i32) {
    %c0_i32 = arith.constant 0 : i32
    %c0_i32_0 = arith.constant 0 : i32
    %c0_i32_1 = arith.constant 0 : i32
    return %c0_i32, %c0_i32_0 : i32, i32
  }
  func.func @transform_6(%arg0: i32) -> (i32, i32) {
    %c0_i32 = arith.constant 0 : i32
    %c0_i32_0 = arith.constant 0 : i32
    %c0_i32_1 = arith.constant 0 : i32
    return %c0_i32, %c0_i32_0 : i32, i32
  }
  func.func @transform_7(%arg0: i32) -> (i32, i32) {
    %c0_i32 = arith.constant 0 : i32
    %c0_i32_0 = arith.constant 0 : i32
    %c0_i32_1 = arith.constant 0 : i32
    return %c0_i32, %c0_i32_0 : i32, i32
  }
  func.func @transform_8(%arg0: i32) -> (i32, i32) {
    %c0_i32 = arith.constant 0 : i32
    %c0_i32_0 = arith.constant 0 : i32
    %c0_i32_1 = arith.constant 0 : i32
    return %c0_i32, %c0_i32_0 : i32, i32
  }
  func.func @transform_9(%arg0: i32) -> (i32, i32) {
    %c0_i32 = arith.constant 0 : i32
    %c0_i32_0 = arith.constant 0 : i32
    %c0_i32_1 = arith.constant 0 : i32
    return %c0_i32, %c0_i32_0 : i32, i32
  }
  func.func @transform_10(%arg0: i32) -> (i32, i32) {
    %c0_i32 = arith.constant 0 : i32
    %c0_i32_0 = arith.constant 0 : i32
    %c0_i32_1 = arith.constant 0 : i32
    return %c0_i32, %c0_i32_0 : i32, i32
  }
  func.func @transform_11(%arg0: i32) -> (i32, i32, i32) {
    %c0_i32 = arith.constant 0 : i32
    %c0_i32_0 = arith.constant 0 : i32
    %c0_i32_1 = arith.constant 0 : i32
    return %arg0, %c0_i32, %c0_i32_0 : i32, i32, i32
  }
}

module attributes {stable_mosaic.version = 11 : i64} {
  func.func @downblock_kernel(%arg0: i32, %arg1: memref<1x8x192xf32, #tpu.memory_space<vmem>>, %arg2: memref<192x128xf32, #tpu.memory_space<vmem>>, %arg3: memref<384x128xf32, #tpu.memory_space<vmem>>, %arg4: memref<1x128xf32, #tpu.memory_space<vmem>>, %arg5: memref<1x128xf32, #tpu.memory_space<vmem>>, %arg6: memref<1x128xf32, #tpu.memory_space<vmem>>, %arg7: memref<1x128xf32, #tpu.memory_space<vmem>>, %arg8: memref<1x128xf32, #tpu.memory_space<vmem>>, %arg9: memref<1x128xf32, #tpu.memory_space<vmem>>, %arg10: memref<8x256xf32, #tpu.memory_space<vmem>>, %arg11: memref<8x256xf32, #tpu.memory_space<vmem>>, %arg12: memref<1x8x128xf32, #tpu.memory_space<vmem>>) attributes {dimension_semantics = [#tpu.dimension_semantics<parallel>], iteration_bounds = array<i64: 2>, scalar_prefetch = 0 : i64, scratch_operands = 0 : i64, tpu.core_type = #tpu.core_type<tc>, window_params = [{transform_indices = @transform_0, window_bounds = array<i64: 1, 8, 192>}, {pipeline_mode = #tpu.pipeline_mode<synchronous>, transform_indices = @transform_1, window_bounds = array<i64: 192, 128>}, {pipeline_mode = #tpu.pipeline_mode<synchronous>, transform_indices = @transform_2, window_bounds = array<i64: 384, 128>}, {pipeline_mode = #tpu.pipeline_mode<synchronous>, transform_indices = @transform_3, window_bounds = array<i64: 1, 128>}, {pipeline_mode = #tpu.pipeline_mode<synchronous>, transform_indices = @transform_4, window_bounds = array<i64: 1, 128>}, {pipeline_mode = #tpu.pipeline_mode<synchronous>, transform_indices = @transform_5, window_bounds = array<i64: 1, 128>}, {pipeline_mode = #tpu.pipeline_mode<synchronous>, transform_indices = @transform_6, window_bounds = array<i64: 1, 128>}, {pipeline_mode = #tpu.pipeline_mode<synchronous>, transform_indices = @transform_7, window_bounds = array<i64: 1, 128>}, {pipeline_mode = #tpu.pipeline_mode<synchronous>, transform_indices = @transform_8, window_bounds = array<i64: 1, 128>}, {pipeline_mode = #tpu.pipeline_mode<synchronous>, transform_indices = @transform_9, window_bounds = array<i64: 8, 256>}, {pipeline_mode = #tpu.pipeline_mode<synchronous>, transform_indices = @transform_10, window_bounds = array<i64: 8, 256>}, {transform_indices = @transform_11, window_bounds = array<i64: 1, 8, 128>}]} {
    %0 = tpu.iota {dimensions = array<i32: 0>} : vector<8x1xi32>
    %c8_i32 = arith.constant 8 : i32
    %c0_i32 = arith.constant 0 : i32
    %1 = arith.cmpi eq, %c8_i32, %c0_i32 : i32
    %c1_i32 = arith.constant 1 : i32
    %2 = arith.select %1, %c1_i32, %c8_i32 : i32
    %3 = vector.broadcast %2 : i32 to vector<8x1xi32>
    %4 = arith.remsi %0, %3 : vector<8x1xi32>
    %c0_i32_0 = arith.constant 0 : i32
    %5 = vector.broadcast %c0_i32_0 : i32 to vector<8x1xi32>
    %6 = arith.cmpi ne, %4, %5 : vector<8x1xi32>
    %c0_i32_1 = arith.constant 0 : i32
    %7 = vector.broadcast %c0_i32_1 : i32 to vector<8x1xi32>
    %8 = arith.cmpi slt, %4, %7 : vector<8x1xi32>
    %c0_i32_2 = arith.constant 0 : i32
    %9 = arith.cmpi slt, %2, %c0_i32_2 : i32
    %10 = vector.broadcast %9 : i1 to vector<8x1xi1>
    %11 = vector.broadcast %10 : vector<8x1xi1> to vector<8x1xi1>
    %12 = arith.xori %8, %11 : vector<8x1xi1>
    %13 = arith.andi %12, %6 : vector<8x1xi1>
    %14 = vector.broadcast %2 : i32 to vector<8x1xi32>
    %15 = arith.addi %4, %14 : vector<8x1xi32>
    %16 = arith.select %13, %15, %4 : vector<8x1xi1>, vector<8x1xi32>
    %c0 = arith.constant 0 : index
    %c0_3 = arith.constant 0 : index
    %c0_4 = arith.constant 0 : index
    %17 = vector.load %arg1[%c0, %c0_3, %c0_4] : memref<1x8x192xf32, #tpu.memory_space<vmem>>, vector<1x8x192xf32>
    %18 = vector.shape_cast %17 : vector<1x8x192xf32> to vector<8x192xf32>
    %c0_5 = arith.constant 0 : index
    %c0_6 = arith.constant 0 : index
    %19 = vector.load %arg2[%c0_5, %c0_6] : memref<192x128xf32, #tpu.memory_space<vmem>>, vector<192x128xf32>
    %cst = arith.constant dense<0.000000e+00> : vector<8x128xf32>
    %20 = tpu.matmul %18, %19, %cst {dimension_numbers = #tpu.dot_dimension_numbers<[1], [0], [0], [1], [0, 0, 1, 1], [], []>} : vector<8x192xf32>, vector<192x128xf32>, vector<8x128xf32> -> vector<8x128xf32>
    %c0_7 = arith.constant 0 : index
    %c0_8 = arith.constant 0 : index
    %21 = vector.load %arg4[%c0_7, %c0_8] : memref<1x128xf32, #tpu.memory_space<vmem>>, vector<1x128xf32>
    %22 = vector.broadcast %21 : vector<1x128xf32> to vector<8x128xf32>
    %23 = arith.addf %20, %22 : vector<8x128xf32>
    %c0_9 = arith.constant 0 : index
    %c0_10 = arith.constant 0 : index
    %24 = vector.load %arg5[%c0_9, %c0_10] : memref<1x128xf32, #tpu.memory_space<vmem>>, vector<1x128xf32>
    %c0_11 = arith.constant 0 : index
    %c0_12 = arith.constant 0 : index
    %25 = vector.load %arg6[%c0_11, %c0_12] : memref<1x128xf32, #tpu.memory_space<vmem>>, vector<1x128xf32>
    %c0_13 = arith.constant 0 : index
    %c0_14 = arith.constant 0 : index
    %26 = vector.load %arg10[%c0_13, %c0_14] : memref<8x256xf32, #tpu.memory_space<vmem>>, vector<8x256xf32>
    %27 = arith.mulf %23, %23 : vector<8x128xf32>
    %28 = tpu.concatenate %23, %27 in 1 : vector<8x128xf32>, vector<8x128xf32> -> vector<8x256xf32>
    %29 = vector.shape_cast %28 : vector<8x256xf32> to vector<1x8x256xf32>
    %cst_15 = arith.constant dense<0.000000e+00> : vector<1x256xf32>
    %30 = vector.multi_reduction <add>, %29, %cst_15 [1] : vector<1x8x256xf32> to vector<1x256xf32>
    %cst_16 = arith.constant dense<0.000000e+00> : vector<1x8xf32>
    %31 = tpu.matmul %30, %26, %cst_16 {dimension_numbers = #tpu.dot_dimension_numbers<[1], [1], [0], [0], [0, 0, 1, 0], [], []>} : vector<1x256xf32>, vector<8x256xf32>, vector<1x8xf32> -> vector<1x8xf32>
    %32 = vector.extract_strided_slice %31 {offsets = [0, 0], sizes = [1, 4], strides = [1, 1]} : vector<1x8xf32> to vector<1x4xf32>
    %cst_17 = arith.constant 7.812500e-03 : f32
    %33 = vector.broadcast %cst_17 : f32 to vector<1x4xf32>
    %34 = arith.mulf %32, %33 : vector<1x4xf32>
    %35 = vector.extract_strided_slice %31 {offsets = [0, 4], sizes = [1, 4], strides = [1, 1]} : vector<1x8xf32> to vector<1x4xf32>
    %cst_18 = arith.constant 7.812500e-03 : f32
    %36 = vector.broadcast %cst_18 : f32 to vector<1x4xf32>
    %37 = arith.mulf %35, %36 : vector<1x4xf32>
    %38 = arith.mulf %34, %34 : vector<1x4xf32>
    %39 = arith.subf %37, %38 : vector<1x4xf32>
    %cst_19 = arith.constant 0.000000e+00 : f32
    %40 = vector.broadcast %cst_19 : f32 to vector<1x4xf32>
    %41 = arith.maximumf %39, %40 : vector<1x4xf32>
    %cst_20 = arith.constant 9.99999974E-6 : f32
    %42 = vector.broadcast %cst_20 : f32 to vector<1x4xf32>
    %43 = arith.addf %41, %42 : vector<1x4xf32>
    %44 = math.rsqrt %43 : vector<1x4xf32>
    %45 = vector.extract_strided_slice %26 {offsets = [0, 0], sizes = [4, 128], strides = [1, 1]} : vector<8x256xf32> to vector<4x128xf32>
    %cst_21 = arith.constant dense<0.000000e+00> : vector<1x128xf32>
    %46 = tpu.matmul %34, %45, %cst_21 {dimension_numbers = #tpu.dot_dimension_numbers<[1], [0], [0], [1], [0, 0, 1, 1], [], []>} : vector<1x4xf32>, vector<4x128xf32>, vector<1x128xf32> -> vector<1x128xf32>
    %47 = vector.shape_cast %46 : vector<1x128xf32> to vector<1x1x128xf32>
    %cst_22 = arith.constant dense<0.000000e+00> : vector<1x128xf32>
    %48 = tpu.matmul %44, %45, %cst_22 {dimension_numbers = #tpu.dot_dimension_numbers<[1], [0], [0], [1], [0, 0, 1, 1], [], []>} : vector<1x4xf32>, vector<4x128xf32>, vector<1x128xf32> -> vector<1x128xf32>
    %49 = vector.shape_cast %48 : vector<1x128xf32> to vector<1x1x128xf32>
    %50 = vector.shape_cast %24 : vector<1x128xf32> to vector<1x1x128xf32>
    %51 = arith.mulf %50, %49 : vector<1x1x128xf32>
    %52 = arith.mulf %47, %51 : vector<1x1x128xf32>
    %53 = vector.shape_cast %25 : vector<1x128xf32> to vector<1x1x128xf32>
    %54 = arith.subf %53, %52 : vector<1x1x128xf32>
    %55 = vector.shape_cast %23 : vector<8x128xf32> to vector<1x8x128xf32>
    %56 = vector.broadcast %51 : vector<1x1x128xf32> to vector<1x8x128xf32>
    %57 = arith.mulf %55, %56 : vector<1x8x128xf32>
    %58 = vector.broadcast %54 : vector<1x1x128xf32> to vector<1x8x128xf32>
    %59 = arith.addf %57, %58 : vector<1x8x128xf32>
    %cst_23 = arith.constant 0.000000e+00 : f32
    %60 = vector.broadcast %cst_23 : f32 to vector<1x8x128xf32>
    %61 = arith.maximumf %59, %60 : vector<1x8x128xf32>
    %62 = vector.shape_cast %61 : vector<1x8x128xf32> to vector<8x128xf32>
    %c0_i32_24 = arith.constant 0 : i32
    %63 = vector.broadcast %c0_i32_24 : i32 to vector<8x1xi32>
    %64 = arith.cmpi eq, %16, %63 : vector<8x1xi32>
    %c1_i32_25 = arith.constant 1 : i32
    %65 = tpu.dynamic_rotate %62 by %c1_i32_25 dim 0 : vector<8x128xf32>, i32 -> vector<8x128xf32>
    %cst_26 = arith.constant 0.000000e+00 : f32
    %66 = vector.shape_cast %64 : vector<8x1xi1> to vector<8x1xi1>
    %67 = vector.broadcast %66 : vector<8x1xi1> to vector<8x128xi1>
    %68 = vector.broadcast %cst_26 : f32 to vector<8x128xf32>
    %69 = arith.select %67, %68, %65 : vector<8x128xi1>, vector<8x128xf32>
    %c7_i32 = arith.constant 7 : i32
    %70 = vector.broadcast %c7_i32 : i32 to vector<8x1xi32>
    %71 = arith.cmpi eq, %16, %70 : vector<8x1xi32>
    %c7_i32_27 = arith.constant 7 : i32
    %72 = tpu.dynamic_rotate %62 by %c7_i32_27 dim 0 : vector<8x128xf32>, i32 -> vector<8x128xf32>
    %cst_28 = arith.constant 0.000000e+00 : f32
    %73 = vector.shape_cast %71 : vector<8x1xi1> to vector<8x1xi1>
    %74 = vector.broadcast %73 : vector<8x1xi1> to vector<8x128xi1>
    %75 = vector.broadcast %cst_28 : f32 to vector<8x128xf32>
    %76 = arith.select %74, %75, %72 : vector<8x128xi1>, vector<8x128xf32>
    %77 = tpu.concatenate %69, %62, %76 in 1 : vector<8x128xf32>, vector<8x128xf32>, vector<8x128xf32> -> vector<8x384xf32>
    %c0_29 = arith.constant 0 : index
    %c0_30 = arith.constant 0 : index
    %78 = vector.load %arg3[%c0_29, %c0_30] : memref<384x128xf32, #tpu.memory_space<vmem>>, vector<384x128xf32>
    %cst_31 = arith.constant dense<0.000000e+00> : vector<8x128xf32>
    %79 = tpu.matmul %77, %78, %cst_31 {dimension_numbers = #tpu.dot_dimension_numbers<[1], [0], [0], [1], [0, 0, 1, 1], [], []>} : vector<8x384xf32>, vector<384x128xf32>, vector<8x128xf32> -> vector<8x128xf32>
    %c0_32 = arith.constant 0 : index
    %c0_33 = arith.constant 0 : index
    %80 = vector.load %arg7[%c0_32, %c0_33] : memref<1x128xf32, #tpu.memory_space<vmem>>, vector<1x128xf32>
    %81 = vector.broadcast %80 : vector<1x128xf32> to vector<8x128xf32>
    %82 = arith.addf %79, %81 : vector<8x128xf32>
    %c0_34 = arith.constant 0 : index
    %c0_35 = arith.constant 0 : index
    %83 = vector.load %arg8[%c0_34, %c0_35] : memref<1x128xf32, #tpu.memory_space<vmem>>, vector<1x128xf32>
    %c0_36 = arith.constant 0 : index
    %c0_37 = arith.constant 0 : index
    %84 = vector.load %arg9[%c0_36, %c0_37] : memref<1x128xf32, #tpu.memory_space<vmem>>, vector<1x128xf32>
    %c0_38 = arith.constant 0 : index
    %c0_39 = arith.constant 0 : index
    %85 = vector.load %arg11[%c0_38, %c0_39] : memref<8x256xf32, #tpu.memory_space<vmem>>, vector<8x256xf32>
    %86 = arith.mulf %82, %82 : vector<8x128xf32>
    %87 = tpu.concatenate %82, %86 in 1 : vector<8x128xf32>, vector<8x128xf32> -> vector<8x256xf32>
    %88 = vector.shape_cast %87 : vector<8x256xf32> to vector<1x8x256xf32>
    %cst_40 = arith.constant dense<0.000000e+00> : vector<1x256xf32>
    %89 = vector.multi_reduction <add>, %88, %cst_40 [1] : vector<1x8x256xf32> to vector<1x256xf32>
    %cst_41 = arith.constant dense<0.000000e+00> : vector<1x8xf32>
    %90 = tpu.matmul %89, %85, %cst_41 {dimension_numbers = #tpu.dot_dimension_numbers<[1], [1], [0], [0], [0, 0, 1, 0], [], []>} : vector<1x256xf32>, vector<8x256xf32>, vector<1x8xf32> -> vector<1x8xf32>
    %91 = vector.extract_strided_slice %90 {offsets = [0, 0], sizes = [1, 4], strides = [1, 1]} : vector<1x8xf32> to vector<1x4xf32>
    %cst_42 = arith.constant 7.812500e-03 : f32
    %92 = vector.broadcast %cst_42 : f32 to vector<1x4xf32>
    %93 = arith.mulf %91, %92 : vector<1x4xf32>
    %94 = vector.extract_strided_slice %90 {offsets = [0, 4], sizes = [1, 4], strides = [1, 1]} : vector<1x8xf32> to vector<1x4xf32>
    %cst_43 = arith.constant 7.812500e-03 : f32
    %95 = vector.broadcast %cst_43 : f32 to vector<1x4xf32>
    %96 = arith.mulf %94, %95 : vector<1x4xf32>
    %97 = arith.mulf %93, %93 : vector<1x4xf32>
    %98 = arith.subf %96, %97 : vector<1x4xf32>
    %cst_44 = arith.constant 0.000000e+00 : f32
    %99 = vector.broadcast %cst_44 : f32 to vector<1x4xf32>
    %100 = arith.maximumf %98, %99 : vector<1x4xf32>
    %cst_45 = arith.constant 9.99999974E-6 : f32
    %101 = vector.broadcast %cst_45 : f32 to vector<1x4xf32>
    %102 = arith.addf %100, %101 : vector<1x4xf32>
    %103 = math.rsqrt %102 : vector<1x4xf32>
    %104 = vector.extract_strided_slice %85 {offsets = [0, 0], sizes = [4, 128], strides = [1, 1]} : vector<8x256xf32> to vector<4x128xf32>
    %cst_46 = arith.constant dense<0.000000e+00> : vector<1x128xf32>
    %105 = tpu.matmul %93, %104, %cst_46 {dimension_numbers = #tpu.dot_dimension_numbers<[1], [0], [0], [1], [0, 0, 1, 1], [], []>} : vector<1x4xf32>, vector<4x128xf32>, vector<1x128xf32> -> vector<1x128xf32>
    %106 = vector.shape_cast %105 : vector<1x128xf32> to vector<1x1x128xf32>
    %cst_47 = arith.constant dense<0.000000e+00> : vector<1x128xf32>
    %107 = tpu.matmul %103, %104, %cst_47 {dimension_numbers = #tpu.dot_dimension_numbers<[1], [0], [0], [1], [0, 0, 1, 1], [], []>} : vector<1x4xf32>, vector<4x128xf32>, vector<1x128xf32> -> vector<1x128xf32>
    %108 = vector.shape_cast %107 : vector<1x128xf32> to vector<1x1x128xf32>
    %109 = vector.shape_cast %83 : vector<1x128xf32> to vector<1x1x128xf32>
    %110 = arith.mulf %109, %108 : vector<1x1x128xf32>
    %111 = arith.mulf %106, %110 : vector<1x1x128xf32>
    %112 = vector.shape_cast %84 : vector<1x128xf32> to vector<1x1x128xf32>
    %113 = arith.subf %112, %111 : vector<1x1x128xf32>
    %114 = vector.shape_cast %82 : vector<8x128xf32> to vector<1x8x128xf32>
    %115 = vector.broadcast %110 : vector<1x1x128xf32> to vector<1x8x128xf32>
    %116 = arith.mulf %114, %115 : vector<1x8x128xf32>
    %117 = vector.broadcast %113 : vector<1x1x128xf32> to vector<1x8x128xf32>
    %118 = arith.addf %116, %117 : vector<1x8x128xf32>
    %cst_48 = arith.constant 0.000000e+00 : f32
    %119 = vector.broadcast %cst_48 : f32 to vector<1x8x128xf32>
    %120 = arith.maximumf %118, %119 : vector<1x8x128xf32>
    %121 = vector.shape_cast %120 : vector<1x8x128xf32> to vector<8x128xf32>
    %c0_49 = arith.constant 0 : index
    %c0_50 = arith.constant 0 : index
    %c0_51 = arith.constant 0 : index
    %122 = vector.load %arg12[%c0_49, %c0_50, %c0_51] : memref<1x8x128xf32, #tpu.memory_space<vmem>>, vector<1x8x128xf32>
    %123 = vector.shape_cast %122 : vector<1x8x128xf32> to vector<8x128xf32>
    %124 = vector.shape_cast %121 : vector<8x128xf32> to vector<1x8x128xf32>
    tpu.vector_store %arg12[%c0_49, %c0_50, %c0_51], %124 {strides = array<i32>} : memref<1x8x128xf32, #tpu.memory_space<vmem>>, vector<1x8x128xf32>,
    return
  }
  func.func @transform_0(%arg0: i32) -> (i32, i32, i32) {
    %c0_i32 = arith.constant 0 : i32
    %c0_i32_0 = arith.constant 0 : i32
    %c0_i32_1 = arith.constant 0 : i32
    return %arg0, %c0_i32, %c0_i32_0 : i32, i32, i32
  }
  func.func @transform_1(%arg0: i32) -> (i32, i32) {
    %c0_i32 = arith.constant 0 : i32
    %c0_i32_0 = arith.constant 0 : i32
    %c0_i32_1 = arith.constant 0 : i32
    return %c0_i32, %c0_i32_0 : i32, i32
  }
  func.func @transform_2(%arg0: i32) -> (i32, i32) {
    %c0_i32 = arith.constant 0 : i32
    %c0_i32_0 = arith.constant 0 : i32
    %c0_i32_1 = arith.constant 0 : i32
    return %c0_i32, %c0_i32_0 : i32, i32
  }
  func.func @transform_3(%arg0: i32) -> (i32, i32) {
    %c0_i32 = arith.constant 0 : i32
    %c0_i32_0 = arith.constant 0 : i32
    %c0_i32_1 = arith.constant 0 : i32
    return %c0_i32, %c0_i32_0 : i32, i32
  }
  func.func @transform_4(%arg0: i32) -> (i32, i32) {
    %c0_i32 = arith.constant 0 : i32
    %c0_i32_0 = arith.constant 0 : i32
    %c0_i32_1 = arith.constant 0 : i32
    return %c0_i32, %c0_i32_0 : i32, i32
  }
  func.func @transform_5(%arg0: i32) -> (i32, i32) {
    %c0_i32 = arith.constant 0 : i32
    %c0_i32_0 = arith.constant 0 : i32
    %c0_i32_1 = arith.constant 0 : i32
    return %c0_i32, %c0_i32_0 : i32, i32
  }
  func.func @transform_6(%arg0: i32) -> (i32, i32) {
    %c0_i32 = arith.constant 0 : i32
    %c0_i32_0 = arith.constant 0 : i32
    %c0_i32_1 = arith.constant 0 : i32
    return %c0_i32, %c0_i32_0 : i32, i32
  }
  func.func @transform_7(%arg0: i32) -> (i32, i32) {
    %c0_i32 = arith.constant 0 : i32
    %c0_i32_0 = arith.constant 0 : i32
    %c0_i32_1 = arith.constant 0 : i32
    return %c0_i32, %c0_i32_0 : i32, i32
  }
  func.func @transform_8(%arg0: i32) -> (i32, i32) {
    %c0_i32 = arith.constant 0 : i32
    %c0_i32_0 = arith.constant 0 : i32
    %c0_i32_1 = arith.constant 0 : i32
    return %c0_i32, %c0_i32_0 : i32, i32
  }
  func.func @transform_9(%arg0: i32) -> (i32, i32) {
    %c0_i32 = arith.constant 0 : i32
    %c0_i32_0 = arith.constant 0 : i32
    %c0_i32_1 = arith.constant 0 : i32
    return %c0_i32, %c0_i32_0 : i32, i32
  }
  func.func @transform_10(%arg0: i32) -> (i32, i32) {
    %c0_i32 = arith.constant 0 : i32
    %c0_i32_0 = arith.constant 0 : i32
    %c0_i32_1 = arith.constant 0 : i32
    return %c0_i32, %c0_i32_0 : i32, i32
  }
  func.func @transform_11(%arg0: i32) -> (i32, i32, i32) {
    %c0_i32 = arith.constant 0 : i32
    %c0_i32_0 = arith.constant 0 : i32
    %c0_i32_1 = arith.constant 0 : i32
    return %arg0, %c0_i32, %c0_i32_0 : i32, i32, i32
  }
}

</mosaic_0001>

<llo_original>
// kernel: tpu_custom_call.1
$region0: #{tpu_custom_call.1}
  #allocation0 [shape = 'u32[]', space=smem, size = 0x4, offset = 0x4, fixed_abs, tag = 'smem constant byte address 0x4 - core index']
  #allocation1 [shape = 'u32[144,128]{1,0:T(1,128)}', space=vmem, size = 0x12000, scoped, tag = 'internal scratch']
  %s0 = inlined_call_operand.hbm [shape: f32[2,8,192], index: 0, kind: input, shape index: {}]
  %s1 = inlined_call_operand.hbm [shape: f32[192,128], index: 1, kind: input, shape index: {}]
  %s2 = inlined_call_operand.hbm [shape: f32[384,128], index: 2, kind: input, shape index: {}]
  %s3 = inlined_call_operand.vmem [shape: f32[1,128], index: 3, kind: input, shape index: {}]
  %s4 = inlined_call_operand.vmem [shape: f32[1,128], index: 4, kind: input, shape index: {}]
  %s5 = inlined_call_operand.hbm [shape: f32[1,128], index: 5, kind: input, shape index: {}]
  %s6 = inlined_call_operand.hbm [shape: f32[1,128], index: 6, kind: input, shape index: {}]
  %s7 = inlined_call_operand.hbm [shape: f32[1,128], index: 7, kind: input, shape index: {}]
  %s8 = inlined_call_operand.hbm [shape: f32[1,128], index: 8, kind: input, shape index: {}]
  %s9 = inlined_call_operand.vmem [shape: f32[8,256], index: 9, kind: input, shape index: {}]
  %s10 = inlined_call_operand.vmem [shape: f32[8,256], index: 10, kind: input, shape index: {}]
  %s11 = inlined_call_operand.hbm [shape: f32[2,8,128], index: 11, kind: output, shape index: {}]
  %s12 = sld [smem:[#allocation0]]
  $region105: #{tpu_custom_call.1} parent=0
    _
  %s14 = ssub.s32 1, %s12
  %s15 = scalar_select 0, %s14, %s12
  $region1: #{tpu_custom_call.1} parent=0
    #allocation2 [shape = 'u8[16384]{0}', space=vmem, size = 0x4000, scoped, tag = 'input window, operand 0']
    #allocation3 [shape = 's32[2]{0}', space=sflag, size = 0x8, scoped, tag = 'scoped memory for tpu_custom_call.1']
    #allocation4 [shape = 's32[2]{0}', space=sflag, size = 0x8, scoped, tag = 'scoped memory for tpu_custom_call.1']
    #allocation5 [shape = 'u8[98304]{0}', space=vmem, size = 0x18000, scoped, tag = 'input window, operand 1, single buffered']
    #allocation6 [shape = 's32[1]{0}', space=sflag, size = 0x4, scoped, tag = 'scoped memory for tpu_custom_call.1']
    #allocation7 [shape = 'u8[196608]{0}', space=vmem, size = 0x30000, scoped, tag = 'input window, operand 2, single buffered']
    #allocation8 [shape = 'u8[512]{0}', space=vmem, size = 0x400, scoped, tag = 'input window, operand 5, single buffered']
    #allocation9 [shape = 's32[1]{0}', space=sflag, size = 0x4, scoped, tag = 'scoped memory for tpu_custom_call.1']
    #allocation10 [shape = 'u8[512]{0}', space=vmem, size = 0x400, scoped, tag = 'input window, operand 6, single buffered']
    #allocation11 [shape = 'u8[512]{0}', space=vmem, size = 0x400, scoped, tag = 'input window, operand 7, single buffered']
    #allocation12 [shape = 's32[1]{0}', space=sflag, size = 0x4, scoped, tag = 'scoped memory for tpu_custom_call.1']
    #allocation13 [shape = 'u8[512]{0}', space=vmem, size = 0x400, scoped, tag = 'input window, operand 8, single buffered']
    #allocation14 [shape = 'u8[8192]{0}', space=vmem, size = 0x2000, scoped, tag = 'output window, operand 0']
    %16 = vsyncpa [#allocation3], 0
    %s17 = scalar_lea.sflag [#allocation3], 1
    %18 = vsyncpa %s17, 0
    %19 = vsyncpa [#allocation6], 0
    %20 = vsyncpa [#allocation9], 0
    %21 = vsyncpa [#allocation12], 0
    %22 = vsyncpa [#allocation4], 0
    %s23 = scalar_lea.sflag [#allocation4], 1
    %24 = vsyncpa %s23, 0
    loop: start=0, step=1, limit=4
    $region2: #{tpu_custom_call.1} parent=1 // loop_pre_header
      _
    $region3: #{tpu_custom_call.1} parent=1 // loop_header
      %s26 = sphi 0, %s30
      %p27 = scmp.ge.s32.totalorder %s26, 4
      %s36 = sphi 0, %s38
      %s39 = sphi 0, %s36
      %s40 = sphi 0, %s39
      %s56 = sphi 0, %s40
      %s60 = sphi 0, %s60
      %s62 = sphi 0, %s60
      %s63 = sphi 0, %s62
      %s77 = sphi 0, %s63
      %s81 = sphi 0, %s81
      %s83 = sphi 0, %s81
      %s84 = sphi 0, %s83
      %s98 = sphi 0, %s84
      %s102 = sphi 0, %s102
      %s104 = sphi 0, %s102
      %s105 = sphi 0, %s104
      %s119 = sphi 0, %s105
      %s123 = sphi 0, %s123
      %s125 = sphi 0, %s123
      %s126 = sphi 0, %s125
      %s140 = sphi 0, %s126
      %s144 = sphi 0, %s144
      %s146 = sphi 0, %s144
      %s147 = sphi 0, %s146
      %s161 = sphi 0, %s147
      %s165 = sphi 0, %s165
      %s167 = sphi 0, %s165
      %s168 = sphi 0, %s167
      %s182 = sphi 0, %s168
      %s186 = sphi 0, %s186
      %s188 = sphi 0, %s186
      %s189 = sphi 0, %s188
      %s203 = sphi 0, %s189
      %s207 = sphi 0, %s207
      %s209 = sphi 0, %s207
      %s210 = sphi 0, %s209
      %s224 = sphi 0, %s210
      %s228 = sphi 0, %s228
      %s230 = sphi 0, %s228
      %s231 = sphi 0, %s230
      %s245 = sphi 0, %s231
      %s249 = sphi 0, %s249
      %s251 = sphi 0, %s249
      %s252 = sphi 0, %s251
      %s266 = sphi 0, %s252
      %s272 = sphi 0, %s274
      %s275 = sphi 0, %s272
      %s276 = sphi 0, %s275
      %s292 = sphi 0, %s276
    $region4: #{tpu_custom_call.1} parent=1 // loop_header_branch
      %29 = sbr.rel (%p27) target = $region8
    $region5: #{tpu_custom_call.1} parent=1 // loop_body
      %s31 = ssub.s32 %s26, 1
      %s32 = ssub.s32 %s26, 2
      %s33 = sadd.s32 %s26, 1
      %s34 = ssub.s32 %s26, %s33
      %p35 = scmp.eq.s32.totalorder %s34, 0
      %s37 = sadd.s32 %s36, 1
      %s38 = scalar_select %p35, %s36, %s37
      %p41 = pneg %p35
      %p42 = scmp.eq.s32.totalorder %s26, 1
      %p43 = por %p41, %p42
      %p44 = scmp.ne.s32.totalorder %s36, %s39
      %p45 = scmp.eq.s32.totalorder %s26, 0
      %p46 = por %p44, %p45
      %p47 = scmp.ne.s32.totalorder %s36, %s39
      %p48 = scmp.eq.s32.totalorder %s31, 1
      %p49 = por %p47, %p48
      %p50 = scmp.ne.s32.totalorder %s39, %s40
      %p51 = scmp.eq.s32.totalorder %s31, 0
      %p52 = por %p50, %p51
      %p53 = scmp.ne.s32.totalorder %s39, %s40
      %p54 = scmp.eq.s32.totalorder %s32, 1
      %p55 = por %p53, %p54
      %p57 = scmp.ne.s32.totalorder %s40, %s56
      %p58 = scmp.eq.s32.totalorder %s32, 0
      %p59 = por %p57, %p58
      %s61 = sadd.s32 %s60, 1
      %p64 = scmp.eq.s32.totalorder %s26, 1
      %p65 = scmp.ne.s32.totalorder %s60, %s62
      %p66 = scmp.eq.s32.totalorder %s26, 0
      %p67 = por %p65, %p66
      %p68 = scmp.ne.s32.totalorder %s60, %s62
      %p69 = scmp.eq.s32.totalorder %s31, 1
      %p70 = por %p68, %p69
      %p71 = scmp.ne.s32.totalorder %s62, %s63
      %p72 = scmp.eq.s32.totalorder %s31, 0
      %p73 = por %p71, %p72
      %p74 = scmp.ne.s32.totalorder %s62, %s63
      %p75 = scmp.eq.s32.totalorder %s32, 1
      %p76 = por %p74, %p75
      %p78 = scmp.ne.s32.totalorder %s63, %s77
      %p79 = scmp.eq.s32.totalorder %s32, 0
      %p80 = por %p78, %p79
      %s82 = sadd.s32 %s81, 1
      %p85 = scmp.eq.s32.totalorder %s26, 1
      %p86 = scmp.ne.s32.totalorder %s81, %s83
      %p87 = scmp.eq.s32.totalorder %s26, 0
      %p88 = por %p86, %p87
      %p89 = scmp.ne.s32.totalorder %s81, %s83
      %p90 = scmp.eq.s32.totalorder %s31, 1
      %p91 = por %p89, %p90
      %p92 = scmp.ne.s32.totalorder %s83, %s84
      %p93 = scmp.eq.s32.totalorder %s31, 0
      %p94 = por %p92, %p93
      %p95 = scmp.ne.s32.totalorder %s83, %s84
      %p96 = scmp.eq.s32.totalorder %s32, 1
      %p97 = por %p95, %p96
      %p99 = scmp.ne.s32.totalorder %s84, %s98
      %p100 = scmp.eq.s32.totalorder %s32, 0
      %p101 = por %p99, %p100
      %s103 = sadd.s32 %s102, 1
      %p106 = scmp.eq.s32.totalorder %s26, 1
      %p107 = scmp.ne.s32.totalorder %s102, %s104
      %p108 = scmp.eq.s32.totalorder %s26, 0
      %p109 = por %p107, %p108
      %p110 = scmp.ne.s32.totalorder %s102, %s104
      %p111 = scmp.eq.s32.totalorder %s31, 1
      %p112 = por %p110, %p111
      %p113 = scmp.ne.s32.totalorder %s104, %s105
      %p114 = scmp.eq.s32.totalorder %s31, 0
      %p115 = por %p113, %p114
      %p116 = scmp.ne.s32.totalorder %s104, %s105
      %p117 = scmp.eq.s32.totalorder %s32, 1
      %p118 = por %p116, %p117
      %p120 = scmp.ne.s32.totalorder %s105, %s119
      %p121 = scmp.eq.s32.totalorder %s32, 0
      %p122 = por %p120, %p121
      %s124 = sadd.s32 %s123, 1
      %p127 = scmp.eq.s32.totalorder %s26, 1
      %p128 = scmp.ne.s32.totalorder %s123, %s125
      %p129 = scmp.eq.s32.totalorder %s26, 0
      %p130 = por %p128, %p129
      %p131 = scmp.ne.s32.totalorder %s123, %s125
      %p132 = scmp.eq.s32.totalorder %s31, 1
      %p133 = por %p131, %p132
      %p134 = scmp.ne.s32.totalorder %s125, %s126
      %p135 = scmp.eq.s32.totalorder %s31, 0
      %p136 = por %p134, %p135
      %p137 = scmp.ne.s32.totalorder %s125, %s126
      %p138 = scmp.eq.s32.totalorder %s32, 1
      %p139 = por %p137, %p138
      %p141 = scmp.ne.s32.totalorder %s126, %s140
      %p142 = scmp.eq.s32.totalorder %s32, 0
      %p143 = por %p141, %p142
      %s145 = sadd.s32 %s144, 1
      %p148 = scmp.eq.s32.totalorder %s26, 1
      %p149 = scmp.ne.s32.totalorder %s144, %s146
      %p150 = scmp.eq.s32.totalorder %s26, 0
      %p151 = por %p149, %p150
      %p152 = scmp.ne.s32.totalorder %s144, %s146
      %p153 = scmp.eq.s32.totalorder %s31, 1
      %p154 = por %p152, %p153
      %p155 = scmp.ne.s32.totalorder %s146, %s147
      %p156 = scmp.eq.s32.totalorder %s31, 0
      %p157 = por %p155, %p156
      %p158 = scmp.ne.s32.totalorder %s146, %s147
      %p159 = scmp.eq.s32.totalorder %s32, 1
      %p160 = por %p158, %p159
      %p162 = scmp.ne.s32.totalorder %s147, %s161
      %p163 = scmp.eq.s32.totalorder %s32, 0
      %p164 = por %p162, %p163
      %s166 = sadd.s32 %s165, 1
      %p169 = scmp.eq.s32.totalorder %s26, 1
      %p170 = scmp.ne.s32.totalorder %s165, %s167
      %p171 = scmp.eq.s32.totalorder %s26, 0
      %p172 = por %p170, %p171
      %p173 = scmp.ne.s32.totalorder %s165, %s167
      %p174 = scmp.eq.s32.totalorder %s31, 1
      %p175 = por %p173, %p174
      %p176 = scmp.ne.s32.totalorder %s167, %s168
      %p177 = scmp.eq.s32.totalorder %s31, 0
      %p178 = por %p176, %p177
      %p179 = scmp.ne.s32.totalorder %s167, %s168
      %p180 = scmp.eq.s32.totalorder %s32, 1
      %p181 = por %p179, %p180
      %p183 = scmp.ne.s32.totalorder %s168, %s182
      %p184 = scmp.eq.s32.totalorder %s32, 0
      %p185 = por %p183, %p184
      %s187 = sadd.s32 %s186, 1
      %p190 = scmp.eq.s32.totalorder %s26, 1
      %p191 = scmp.ne.s32.totalorder %s186, %s188
      %p192 = scmp.eq.s32.totalorder %s26, 0
      %p193 = por %p191, %p192
      %p194 = scmp.ne.s32.totalorder %s186, %s188
      %p195 = scmp.eq.s32.totalorder %s31, 1
      %p196 = por %p194, %p195
      %p197 = scmp.ne.s32.totalorder %s188, %s189
      %p198 = scmp.eq.s32.totalorder %s31, 0
      %p199 = por %p197, %p198
      %p200 = scmp.ne.s32.totalorder %s188, %s189
      %p201 = scmp.eq.s32.totalorder %s32, 1
      %p202 = por %p200, %p201
      %p204 = scmp.ne.s32.totalorder %s189, %s203
      %p205 = scmp.eq.s32.totalorder %s32, 0
      %p206 = por %p204, %p205
      %s208 = sadd.s32 %s207, 1
      %p211 = scmp.eq.s32.totalorder %s26, 1
      %p212 = scmp.ne.s32.totalorder %s207, %s209
      %p213 = scmp.eq.s32.totalorder %s26, 0
      %p214 = por %p212, %p213
      %p215 = scmp.ne.s32.totalorder %s207, %s209
      %p216 = scmp.eq.s32.totalorder %s31, 1
      %p217 = por %p215, %p216
      %p218 = scmp.ne.s32.totalorder %s209, %s210
      %p219 = scmp.eq.s32.totalorder %s31, 0
      %p220 = por %p218, %p219
      %p221 = scmp.ne.s32.totalorder %s209, %s210
      %p222 = scmp.eq.s32.totalorder %s32, 1
      %p223 = por %p221, %p222
      %p225 = scmp.ne.s32.totalorder %s210, %s224
      %p226 = scmp.eq.s32.totalorder %s32, 0
      %p227 = por %p225, %p226
      %s229 = sadd.s32 %s228, 1
      %p232 = scmp.eq.s32.totalorder %s26, 1
      %p233 = scmp.ne.s32.totalorder %s228, %s230
      %p234 = scmp.eq.s32.totalorder %s26, 0
      %p235 = por %p233, %p234
      %p236 = scmp.ne.s32.totalorder %s228, %s230
      %p237 = scmp.eq.s32.totalorder %s31, 1
      %p238 = por %p236, %p237
      %p239 = scmp.ne.s32.totalorder %s230, %s231
      %p240 = scmp.eq.s32.totalorder %s31, 0
      %p241 = por %p239, %p240
      %p242 = scmp.ne.s32.totalorder %s230, %s231
      %p243 = scmp.eq.s32.totalorder %s32, 1
      %p244 = por %p242, %p243
      %p246 = scmp.ne.s32.totalorder %s231, %s245
      %p247 = scmp.eq.s32.totalorder %s32, 0
      %p248 = por %p246, %p247
      %s250 = sadd.s32 %s249, 1
      %p253 = scmp.eq.s32.totalorder %s26, 1
      %p254 = scmp.ne.s32.totalorder %s249, %s251
      %p255 = scmp.eq.s32.totalorder %s26, 0
      %p256 = por %p254, %p255
      %p257 = scmp.ne.s32.totalorder %s249, %s251
      %p258 = scmp.eq.s32.totalorder %s31, 1
      %p259 = por %p257, %p258
      %p260 = scmp.ne.s32.totalorder %s251, %s252
      %p261 = scmp.eq.s32.totalorder %s31, 0
      %p262 = por %p260, %p261
      %p263 = scmp.ne.s32.totalorder %s251, %s252
      %p264 = scmp.eq.s32.totalorder %s32, 1
      %p265 = por %p263, %p264
      %p267 = scmp.ne.s32.totalorder %s252, %s266
      %p268 = scmp.eq.s32.totalorder %s32, 0
      %p269 = por %p267, %p268
      %s270 = ssub.s32 %s26, %s33
      %p271 = scmp.eq.s32.totalorder %s270, 0
      %s273 = sadd.s32 %s272, 1
      %s274 = scalar_select %p271, %s272, %s273
      %p277 = pneg %p271
      %p278 = scmp.eq.s32.totalorder %s26, 1
      %p279 = por %p277, %p278
      %p280 = scmp.ne.s32.totalorder %s272, %s275
      %p281 = scmp.eq.s32.totalorder %s26, 0
      %p282 = por %p280, %p281
      %p283 = scmp.ne.s32.totalorder %s272, %s275
      %p284 = scmp.eq.s32.totalorder %s31, 1
      %p285 = por %p283, %p284
      %p286 = scmp.ne.s32.totalorder %s275, %s276
      %p287 = scmp.eq.s32.totalorder %s31, 0
      %p288 = por %p286, %p287
      %p289 = scmp.ne.s32.totalorder %s275, %s276
      %p290 = scmp.eq.s32.totalorder %s32, 1
      %p291 = por %p289, %p290
      %p293 = scmp.ne.s32.totalorder %s276, %s292
      %p294 = scmp.eq.s32.totalorder %s32, 0
      %p295 = por %p293, %p294
      %p296 = scmp.le.s32.totalorder 1, %s26
      %p297 = scmp.lt.s32.totalorder %s26, 3
      %p298 = pnand %p296, %p297
      %p299 = pneg %p298
      // Predicated region
      $region9: #{tpu_custom_call.1} parent=5 // pred_check
        _
      $region10: #{tpu_custom_call.1} parent=5 // pred_check_branch
        %301 = sbr.rel (%p298) target = $region12
      $region11: #{tpu_custom_call.1} parent=5 // pred_region
        %s302 = ssub.s32 %s26, 1
        // Predicated region
        $region13: #{tpu_custom_call.1} parent=11 // pred_check
          %p303 = pneg %p73
        $region14: #{tpu_custom_call.1} parent=11 // pred_check_branch
          %305 = sbr.rel (%p303) target = $region16
        $region15: #{tpu_custom_call.1} parent=11 // pred_region
          %s307 = ssub.s32 3072, 3072
          %308 = vsyncadd [#allocation6], %s307
          %s309 = sshll.u32 [#allocation5], 4
          %s310 = int_to_ptr.vmem [resolvable:$true] %s309
          %315 = dma.hbm_to_vmem [thread:$0]  %s1, 3072, %s310, [#allocation6], 128, 128, 8
        $region16: #{tpu_custom_call.1} parent=11 // pred_fallthru
          _
        // Predicated region
        $region17: #{tpu_custom_call.1} parent=11 // pred_check
          %p316 = pneg %p94
        $region18: #{tpu_custom_call.1} parent=11 // pred_check_branch
          %318 = sbr.rel (%p316) target = $region20
        $region19: #{tpu_custom_call.1} parent=11 // pred_region
          %s320 = ssub.s32 6144, 6144
          %321 = vsyncadd [#allocation6], %s320
          %s322 = sshll.u32 [#allocation7], 4
          %s323 = int_to_ptr.vmem [resolvable:$true] %s322
          %328 = dma.hbm_to_vmem [thread:$0]  %s2, 6144, %s323, [#allocation6], 128, 128, 8
        $region20: #{tpu_custom_call.1} parent=11 // pred_fallthru
          _
        // Predicated region
        $region21: #{tpu_custom_call.1} parent=11 // pred_check
          %p329 = pneg %p115
        $region22: #{tpu_custom_call.1} parent=11 // pred_check_branch
          %331 = sbr.rel (%p329) target = $region24
        $region23: #{tpu_custom_call.1} parent=11 // pred_region
          _
        $region24: #{tpu_custom_call.1} parent=11 // pred_fallthru
          _
        // Predicated region
        $region25: #{tpu_custom_call.1} parent=11 // pred_check
          %p332 = pneg %p136
        $region26: #{tpu_custom_call.1} parent=11 // pred_check_branch
          %334 = sbr.rel (%p332) target = $region28
        $region27: #{tpu_custom_call.1} parent=11 // pred_region
          _
        $region28: #{tpu_custom_call.1} parent=11 // pred_fallthru
          _
        // Predicated region
        $region29: #{tpu_custom_call.1} parent=11 // pred_check
          %p335 = pneg %p157
        $region30: #{tpu_custom_call.1} parent=11 // pred_check_branch
          %337 = sbr.rel (%p335) target = $region32
        $region31: #{tpu_custom_call.1} parent=11 // pred_region
          %s339 = ssub.s32 16, 16
          %340 = vsyncadd [#allocation9], %s339
          %s342 = sshll.u32 [#allocation8], 4
          %s343 = int_to_ptr.vmem [resolvable:$true] %s342
          %345 = dma.hbm_to_vmem [thread:$0]  %s5, 16, %s343, [#allocation9]
        $region32: #{tpu_custom_call.1} parent=11 // pred_fallthru
          _
        // Predicated region
        $region33: #{tpu_custom_call.1} parent=11 // pred_check
          %p346 = pneg %p178
        $region34: #{tpu_custom_call.1} parent=11 // pred_check_branch
          %348 = sbr.rel (%p346) target = $region36
        $region35: #{tpu_custom_call.1} parent=11 // pred_region
          %s350 = ssub.s32 16, 16
          %351 = vsyncadd [#allocation9], %s350
          %s353 = sshll.u32 [#allocation10], 4
          %s354 = int_to_ptr.vmem [resolvable:$true] %s353
          %356 = dma.hbm_to_vmem [thread:$0]  %s6, 16, %s354, [#allocation9]
        $region36: #{tpu_custom_call.1} parent=11 // pred_fallthru
          _
        // Predicated region
        $region37: #{tpu_custom_call.1} parent=11 // pred_check
          %p357 = pneg %p199
        $region38: #{tpu_custom_call.1} parent=11 // pred_check_branch
          %359 = sbr.rel (%p357) target = $region40
        $region39: #{tpu_custom_call.1} parent=11 // pred_region
          %s361 = ssub.s32 16, 16
          %362 = vsyncadd [#allocation12], %s361
          %s364 = sshll.u32 [#allocation11], 4
          %s365 = int_to_ptr.vmem [resolvable:$true] %s364
          %367 = dma.hbm_to_vmem [thread:$0]  %s7, 16, %s365, [#allocation12]
        $region40: #{tpu_custom_call.1} parent=11 // pred_fallthru
          _
        // Predicated region
        $region41: #{tpu_custom_call.1} parent=11 // pred_check
          %p368 = pneg %p220
        $region42: #{tpu_custom_call.1} parent=11 // pred_check_branch
          %370 = sbr.rel (%p368) target = $region44
        $region43: #{tpu_custom_call.1} parent=11 // pred_region
          %s372 = ssub.s32 16, 16
          %373 = vsyncadd [#allocation12], %s372
          %s375 = sshll.u32 [#allocation13], 4
          %s376 = int_to_ptr.vmem [resolvable:$true] %s375
          %378 = dma.hbm_to_vmem [thread:$0]  %s8, 16, %s376, [#allocation12]
        $region44: #{tpu_custom_call.1} parent=11 // pred_fallthru
          _
        // Predicated region
        $region45: #{tpu_custom_call.1} parent=11 // pred_check
          %p379 = pneg %p241
        $region46: #{tpu_custom_call.1} parent=11 // pred_check_branch
          %381 = sbr.rel (%p379) target = $region48
        $region47: #{tpu_custom_call.1} parent=11 // pred_region
          _
        $region48: #{tpu_custom_call.1} parent=11 // pred_fallthru
          _
        // Predicated region
        $region49: #{tpu_custom_call.1} parent=11 // pred_check
          %p382 = pneg %p262
        $region50: #{tpu_custom_call.1} parent=11 // pred_check_branch
          %384 = sbr.rel (%p382) target = $region52
        $region51: #{tpu_custom_call.1} parent=11 // pred_region
          _
        $region52: #{tpu_custom_call.1} parent=11 // pred_fallthru
          _
      $region12: #{tpu_custom_call.1} parent=5 // pred_fallthru
        _
      %p385 = scmp.lt.s32.totalorder %s26, 2
      // Predicated region
      $region53: #{tpu_custom_call.1} parent=5 // pred_check
        %p386 = pneg %p385
      $region54: #{tpu_custom_call.1} parent=5 // pred_check_branch
        %388 = sbr.rel (%p386) target = $region56
      $region55: #{tpu_custom_call.1} parent=5 // pred_region
        // Predicated region
        $region57: #{tpu_custom_call.1} parent=55 // pred_check
          %p389 = pneg %p46
        $region58: #{tpu_custom_call.1} parent=55 // pred_check_branch
          %391 = sbr.rel (%p389) target = $region60
        $region59: #{tpu_custom_call.1} parent=55 // pred_region
          %s392 = sand.u32 %s36, 1
          %s393 = scalar_lea.sflag [#allocation3], %s392
          %s394 = sand.u32 %s36, 1
          %s395 = smul.addr %s394, 16
          %s396 = scalar_lea.vmem [#allocation2], %s395
          %s398 = ssub.s32 256, 256
          %399 = vsyncadd %s393, %s398
          %s400 = smul.addr %s26, 2
          %s401 = smul.addr %s400, 128
          %s402 = scalar_lea.hbm %s0, %s401
          %s404 = sshll.u32 %s396, 4
          %s405 = int_to_ptr.vmem [resolvable:$true] %s404
          %407 = dma.hbm_to_vmem [thread:$0]  %s402, 256, %s405, %s393
        $region60: #{tpu_custom_call.1} parent=55 // pred_fallthru
          _
      $region56: #{tpu_custom_call.1} parent=5 // pred_fallthru
        _
      %p408 = scmp.le.s32.totalorder 1, %s26
      %p409 = scmp.lt.s32.totalorder %s26, 3
      %p410 = pnand %p408, %p409
      %p411 = pneg %p410
      // Predicated region
      $region61: #{tpu_custom_call.1} parent=5 // pred_check
        _
      $region62: #{tpu_custom_call.1} parent=5 // pred_check_branch
        %413 = sbr.rel (%p410) target = $region64
      $region63: #{tpu_custom_call.1} parent=5 // pred_region
        %s414 = ssub.s32 %s26, 1
        %s415 = sand.u32 %s39, 1
        %s416 = scalar_lea.sflag [#allocation3], %s415
        %s417 = sand.u32 %s39, 1
        %s418 = smul.addr %s417, 16
        %s419 = scalar_lea.vmem [#allocation2], %s418
        // Predicated region
        $region65: #{tpu_custom_call.1} parent=63 // pred_check
          %p420 = pneg %p52
        $region66: #{tpu_custom_call.1} parent=63 // pred_check_branch
          %422 = sbr.rel (%p420) target = $region68
        $region67: #{tpu_custom_call.1} parent=63 // pred_region
          %423 = dma.done %s416, 256
        $region68: #{tpu_custom_call.1} parent=63 // pred_fallthru
          _
        // Predicated region
        $region69: #{tpu_custom_call.1} parent=63 // pred_check
          %p424 = pneg %p73
        $region70: #{tpu_custom_call.1} parent=63 // pred_check_branch
          %426 = sbr.rel (%p424) target = $region72
        $region71: #{tpu_custom_call.1} parent=63 // pred_region
          %427 = dma.done [#allocation6], 3072
        $region72: #{tpu_custom_call.1} parent=63 // pred_fallthru
          _
        // Predicated region
        $region73: #{tpu_custom_call.1} parent=63 // pred_check
          %p428 = pneg %p94
        $region74: #{tpu_custom_call.1} parent=63 // pred_check_branch
          %430 = sbr.rel (%p428) target = $region76
        $region75: #{tpu_custom_call.1} parent=63 // pred_region
          %431 = dma.done [#allocation6], 6144
        $region76: #{tpu_custom_call.1} parent=63 // pred_fallthru
          _
        // Predicated region
        $region77: #{tpu_custom_call.1} parent=63 // pred_check
          %p432 = pneg %p157
        $region78: #{tpu_custom_call.1} parent=63 // pred_check_branch
          %434 = sbr.rel (%p432) target = $region80
        $region79: #{tpu_custom_call.1} parent=63 // pred_region
          %435 = dma.done [#allocation9], 16
        $region80: #{tpu_custom_call.1} parent=63 // pred_fallthru
          _
        // Predicated region
        $region81: #{tpu_custom_call.1} parent=63 // pred_check
          %p436 = pneg %p178
        $region82: #{tpu_custom_call.1} parent=63 // pred_check_branch
          %438 = sbr.rel (%p436) target = $region84
        $region83: #{tpu_custom_call.1} parent=63 // pred_region
          %439 = dma.done [#allocation9], 16
        $region84: #{tpu_custom_call.1} parent=63 // pred_fallthru
          _
        // Predicated region
        $region85: #{tpu_custom_call.1} parent=63 // pred_check
          %p440 = pneg %p199
        $region86: #{tpu_custom_call.1} parent=63 // pred_check_branch
          %442 = sbr.rel (%p440) target = $region88
        $region87: #{tpu_custom_call.1} parent=63 // pred_region
          %443 = dma.done [#allocation12], 16
        $region88: #{tpu_custom_call.1} parent=63 // pred_fallthru
          _
        // Predicated region
        $region89: #{tpu_custom_call.1} parent=63 // pred_check
          %p444 = pneg %p220
        $region90: #{tpu_custom_call.1} parent=63 // pred_check_branch
          %446 = sbr.rel (%p444) target = $region92
        $region91: #{tpu_custom_call.1} parent=63 // pred_region
          %447 = dma.done [#allocation12], 16
        $region92: #{tpu_custom_call.1} parent=63 // pred_fallthru
          _
        %s448 = sand.u32 %s39, 1
        %s449 = scalar_lea.sflag [#allocation3], %s448
        %s450 = sand.u32 %s39, 1
        %s451 = smul.addr %s450, 16
        %s452 = scalar_lea.vmem [#allocation2], %s451
        %p453 = pneg %p52
        %p454 = pneg %p49
        %p455 = pneg %p73
        %p456 = pneg %p70
        %p457 = pneg %p94
        %p458 = pneg %p91
        %p459 = pneg %p115
        %p460 = pneg %p112
        %p461 = pneg %p136
        %p462 = pneg %p133
        %p463 = pneg %p157
        %p464 = pneg %p154
        %p465 = pneg %p178
        %p466 = pneg %p175
        %p467 = pneg %p199
        %p468 = pneg %p196
        %p469 = pneg %p220
        %p470 = pneg %p217
        %p471 = pneg %p241
        %p472 = pneg %p238
        %p473 = pneg %p262
        %p474 = pneg %p259
        %p475 = pneg %p288
        %p476 = pneg %p285
        %s477 = sand.u32 %s275, 1
        %s478 = scalar_lea.sflag [#allocation4], %s477
        %s479 = sand.u32 %s275, 1
        %s480 = smul.addr %s479, 8
        %s481 = scalar_lea.vmem [#allocation14], %s480
        %v482 = vlaneseq
        %v483 = vshrl.u32 %v482, 7
        %vm484 = vcmp.lt.s32.totalorder %v483, 0
        %v485 = vsub.s32 0, %v483
        %v486 = vsel %vm484, %v485, %v483
        %v487 = vshrl.u32 %v486, 3
        %v488 = vand.u32 %v486, 7
        %v489 = vsub.s32 0, %v488
        %v490 = vsel %vm484, %v489, %v488
        %vm491 = vcmp.ne.s32.totalorder %v490, 0
        %vm492 = vcmp.lt.s32.totalorder %v490, 0
        %vm493 = vmand %vm492, %vm491
        %v494 = vadd.s32 %v490, 8
        %v495 = vsel %vm493, %v494, %v490
        %v496 = vld [vmem:[%s419] sm:$0xff]
        %v497 = vld [vmem:[%s419 + $0x8] sm:$0xff]
        %v498 = vld [vmem:[#allocation5] sm:$0xff]
        %v499 = vld [vmem:[#allocation5 + $0x8] sm:$0xff]
        %v500 = vld [vmem:[#allocation5 + $0x10] sm:$0xff]
        %v501 = vld [vmem:[#allocation5 + $0x18] sm:$0xff]
        %v502 = vld [vmem:[#allocation5 + $0x20] sm:$0xff]
        %v503 = vld [vmem:[#allocation5 + $0x28] sm:$0xff]
        %v504 = vld [vmem:[#allocation5 + $0x30] sm:$0xff]
        %v505 = vld [vmem:[#allocation5 + $0x38] sm:$0xff]
        %v506 = vld [vmem:[#allocation5 + $0x40] sm:$0xff]
        %v507 = vld [vmem:[#allocation5 + $0x48] sm:$0xff]
        %v508 = vld [vmem:[#allocation5 + $0x50] sm:$0xff]
        %v509 = vld [vmem:[#allocation5 + $0x58] sm:$0xff]
        %v510 = vld [vmem:[#allocation5 + $0x60] sm:$0xff]
        %v511 = vld [vmem:[#allocation5 + $0x68] sm:$0xff]
        %v512 = vld [vmem:[#allocation5 + $0x70] sm:$0xff]
        %v513 = vld [vmem:[#allocation5 + $0x78] sm:$0xff]
        %v514 = vld [vmem:[#allocation5 + $0x80] sm:$0xff]
        %v515 = vld [vmem:[#allocation5 + $0x88] sm:$0xff]
        %v516 = vld [vmem:[#allocation5 + $0x90] sm:$0xff]
        %v517 = vld [vmem:[#allocation5 + $0x98] sm:$0xff]
        %v518 = vld [vmem:[#allocation5 + $0xa0] sm:$0xff]
        %v519 = vld [vmem:[#allocation5 + $0xa8] sm:$0xff]
        %v520 = vld [vmem:[#allocation5 + $0xb0] sm:$0xff]
        %v521 = vld [vmem:[#allocation5 + $0xb8] sm:$0xff]
        %v522 = vld [vmem:[%s3] sm:$0x1]
        %v524 = vlaneseq
        %v525 = vshrl.u32 %v524, 7
        %v526 = vsub.s32 0, %v525
        %v527 = vrot.slane %v522, %v526
        %vm529 = vcmask 523264
        %v531 = vsel %vm529, %v497, 0
        %533 = vmatprep.subr.mxu0 0.0
        %534 = vmatpush1.msra.mxu0 %v498
        %535 = vmatprep.subr.mxu0 0.0
        %536 = vmatpush1.msra.mxu0 %v499
        %537 = vmatprep.subr.mxu0 0.0
        %538 = vmatpush1.msra.mxu0 %v500
        %539 = vmatprep.subr.mxu0 0.0
        %540 = vmatpush1.msra.mxu0 %v501
        %541 = vmatprep.subr.mxu0 0.0
        %542 = vmatpush1.msra.mxu0 %v502
        %543 = vmatprep.subr.mxu0 0.0
        %544 = vmatpush1.msra.mxu0 %v503
        %545 = vmatprep.subr.mxu0 0.0
        %546 = vmatpush1.msra.mxu0 %v504
        %547 = vmatprep.subr.mxu0 0.0
        %548 = vmatpush1.msra.mxu0 %v505
        %549 = vmatprep.subr.mxu0 0.0
        %550 = vmatpush1.msra.mxu0 %v506
        %551 = vmatprep.subr.mxu0 0.0
        %552 = vmatpush1.msra.mxu0 %v507
        %553 = vmatprep.subr.mxu0 0.0
        %554 = vmatpush1.msra.mxu0 %v508
        %555 = vmatprep.subr.mxu0 0.0
        %556 = vmatpush1.msra.mxu0 %v509
        %557 = vmatprep.subr.mxu0 0.0
        %558 = vmatpush1.msra.mxu0 %v510
        %559 = vmatprep.subr.mxu0 0.0
        %560 = vmatpush1.msra.mxu0 %v511
        %561 = vmatprep.subr.mxu0 0.0
        %562 = vmatpush1.msra.mxu0 %v512
        %563 = vmatprep.subr.mxu0 0.0
        %564 = vmatpush1.msra.mxu0 %v513
        %565 = vmatprep.subr.mxu0 0.0
        %566 = vmatpush1.msra.mxu0 %v514
        %567 = vmatprep.subr.mxu0 0.0
        %568 = vmatpush1.msra.mxu0 %v515
        %569 = vmatprep.subr.mxu0 0.0
        %570 = vmatpush1.msra.mxu0 %v516
        %571 = vmatprep.subr.mxu0 0.0
        %572 = vmatpush1.msra.mxu0 %v517
        %573 = vmatprep.subr.mxu0 0.0
        %574 = vmatpush1.msra.mxu0 %v518
        %575 = vmatprep.subr.mxu0 0.0
        %576 = vmatpush1.msra.mxu0 %v519
        %577 = vmatprep.subr.mxu0 0.0
        %578 = vmatpush1.msra.mxu0 %v520
        %579 = vmatprep.subr.mxu0 0.0
        %580 = vmatpush1.msra.mxu0 %v521
        %581 = vmatprep.subr.mxu0 0.0
        %582 = vmatpush1.msra.mxu0 0.0
        %583 = vmatprep.subr.mxu0 0.0
        %584 = vmatpush1.msra.mxu0 0.0
        %585 = vmatprep.subr.mxu0 0.0
        %586 = vmatpush1.msra.mxu0 0.0
        %587 = vmatprep.subr.mxu0 0.0
        %588 = vmatpush1.msra.mxu0 0.0
        %589 = vmatprep.subr.mxu0 0.0
        %590 = vmatpush1.msra.mxu0 0.0
        %591 = vmatprep.subr.mxu0 0.0
        %592 = vmatpush1.msra.mxu0 0.0
        %593 = vmatprep.subr.mxu0 0.0
        %594 = vmatpush1.msra.mxu0 0.0
        %595 = vmatprep.subr.mxu0 0.0
        %596 = vmatpush1.msra.mxu0 0.0
        %597 = vmatprep.mubr.f32.mxu0 %v531
        %598 = vmatmul.mubr.f32.gmra.mrb[0].mxu0 %v496
        %v599 = vpop.f32.mrb[0].mxu0
        %v600 = vadd.f32 %v527, %v599
        %v601 = vpop.f32.mrb[0].mxu0
        %602 = vdwg.mxu0
        %v603 = vld [vmem:[%s4] sm:$0x1]
        %v604 = vld [vmem:[#allocation8] sm:$0x1]
        %v605 = vld [vmem:[%s9] sm:$0xff]
        %v606 = vld [vmem:[%s9 + $0x8] sm:$0xff]
        %v607 = vmul.f32 %v600, %v600
        %v608 = vrot.slane %v600, 4
        %v609 = vadd.f32 %v600, %v608
        %v610 = vrot.slane %v609, 2
        %v611 = vadd.f32 %v609, %v610
        %v612 = vrot.slane %v611, 1
        %v613 = vadd.f32 %v611, %v612
        %v614 = vrot.slane %v607, 4
        %v615 = vadd.f32 %v607, %v614
        %v616 = vrot.slane %v615, 2
        %v617 = vadd.f32 %v615, %v616
        %v618 = vrot.slane %v617, 1
        %v619 = vadd.f32 %v617, %v618
        %620 = vmatprep.subr.mxu0 %v606
        %621 = vmatpush1.xpose.msra.mxu0 %v605
        %622 = vmatprep.subr.mxu0 0.0
        %623 = vmatpush1.xpose.msra.mxu0 0.0
        %624 = vmatprep.subr.mxu0 0.0
        %625 = vmatpush1.xpose.msra.mxu0 0.0
        %626 = vmatprep.subr.mxu0 0.0
        %627 = vmatpush1.xpose.msra.mxu0 0.0
        %628 = vmatprep.subr.mxu0 0.0
        %629 = vmatpush1.xpose.msra.mxu0 0.0
        %630 = vmatprep.subr.mxu0 0.0
        %631 = vmatpush1.xpose.msra.mxu0 0.0
        %632 = vmatprep.subr.mxu0 0.0
        %633 = vmatpush1.xpose.msra.mxu0 0.0
        %634 = vmatprep.subr.mxu0 0.0
        %635 = vmatpush1.xpose.msra.mxu0 0.0
        %636 = vmatprep.subr.mxu0 0.0
        %637 = vmatpush1.xpose.msra.mxu0 0.0
        %638 = vmatprep.subr.mxu0 0.0
        %639 = vmatpush1.xpose.msra.mxu0 0.0
        %640 = vmatprep.subr.mxu0 0.0
        %641 = vmatpush1.xpose.msra.mxu0 0.0
        %642 = vmatprep.subr.mxu0 0.0
        %643 = vmatpush1.xpose.msra.mxu0 0.0
        %644 = vmatprep.subr.mxu0 0.0
        %645 = vmatpush1.xpose.msra.mxu0 0.0
        %646 = vmatprep.subr.mxu0 0.0
        %647 = vmatpush1.xpose.msra.mxu0 0.0
        %648 = vmatprep.subr.mxu0 0.0
        %649 = vmatpush1.xpose.msra.mxu0 0.0
        %650 = vmatprep.subr.mxu0 0.0
        %651 = vmatpush1.xpose.msra.mxu0 0.0
        %652 = vmatprep.subr.mxu0 0.0
        %653 = vmatpush1.xpose.msra.mxu0 0.0
        %654 = vmatprep.subr.mxu0 0.0
        %655 = vmatpush1.xpose.msra.mxu0 0.0
        %656 = vmatprep.subr.mxu0 0.0
        %657 = vmatpush1.xpose.msra.mxu0 0.0
        %658 = vmatprep.subr.mxu0 0.0
        %659 = vmatpush1.xpose.msra.mxu0 0.0
        %660 = vmatprep.subr.mxu0 0.0
        %661 = vmatpush1.xpose.msra.mxu0 0.0
        %662 = vmatprep.subr.mxu0 0.0
        %663 = vmatpush1.xpose.msra.mxu0 0.0
        %664 = vmatprep.subr.mxu0 0.0
        %665 = vmatpush1.xpose.msra.mxu0 0.0
        %666 = vmatprep.subr.mxu0 0.0
        %667 = vmatpush1.xpose.msra.mxu0 0.0
        %668 = vmatprep.subr.mxu0 0.0
        %669 = vmatpush1.xpose.msra.mxu0 0.0
        %670 = vmatprep.subr.mxu0 0.0
        %671 = vmatpush1.xpose.msra.mxu0 0.0
        %672 = vmatprep.subr.mxu0 0.0
        %673 = vmatpush1.xpose.msra.mxu0 0.0
        %674 = vmatprep.subr.mxu0 0.0
        %675 = vmatpush1.xpose.msra.mxu0 0.0
        %676 = vmatprep.subr.mxu0 0.0
        %677 = vmatpush1.xpose.msra.mxu0 0.0
        %678 = vmatprep.subr.mxu0 0.0
        %679 = vmatpush1.xpose.msra.mxu0 0.0
        %680 = vmatprep.subr.mxu0 0.0
        %681 = vmatpush1.xpose.msra.mxu0 0.0
        %682 = vmatprep.subr.mxu0 0.0
        %683 = vmatpush1.xpose.msra.mxu0 0.0
        %684 = vmatprep.mubr.f32.mxu0 %v619
        %685 = vmatmul.mubr.f32.gmra.mrb[0].mxu0 %v613
        %v686 = vpop.f32.mrb[0].mxu0
        %v687 = vadd.f32 0.0, %v686
        %v688 = vpop.f32.mrb[0].mxu0
        %689 = vdwg.mxu0
        %v690 = vmul.f32 %v687, 0.0078125
        %v691 = vmul.f32 %v690, %v690
        %693 = vrot.lane.b32.xlu0 %v691, 4
        %v694 = vpop.permute.xlu0 %693
        %v696 = vsub.f32 %v690, %v694
        %v697 = vmax.f32 %v696, 0.0
        %v698 = vadd.f32 %v697, 1e-05
        %v699 = vrsqrt.pop %v698
        %vm700 = vcmask 31744
        %v702 = vsel %vm700, %v690, 0
        %vm704 = vcmask 1043456
        %v706 = vsel %vm704, %v605, 0
        %708 = vmatprep.subr.mxu0 0.0
        %709 = vmatpush1.msra.mxu0 %v706
        %710 = vmatprep.subr.mxu0 0.0
        %711 = vmatpush1.msra.mxu0 0.0
        %712 = vmatprep.subr.mxu0 0.0
        %713 = vmatpush1.msra.mxu0 0.0
        %714 = vmatprep.subr.mxu0 0.0
        %715 = vmatpush1.msra.mxu0 0.0
        %716 = vmatprep.subr.mxu0 0.0
        %717 = vmatpush1.msra.mxu0 0.0
        %718 = vmatprep.subr.mxu0 0.0
        %719 = vmatpush1.msra.mxu0 0.0
        %720 = vmatprep.subr.mxu0 0.0
        %721 = vmatpush1.msra.mxu0 0.0
        %722 = vmatprep.subr.mxu0 0.0
        %723 = vmatpush1.msra.mxu0 0.0
        %724 = vmatprep.subr.mxu0 0.0
        %725 = vmatpush1.msra.mxu0 0.0
        %726 = vmatprep.subr.mxu0 0.0
        %727 = vmatpush1.msra.mxu0 0.0
        %728 = vmatprep.subr.mxu0 0.0
        %729 = vmatpush1.msra.mxu0 0.0
        %730 = vmatprep.subr.mxu0 0.0
        %731 = vmatpush1.msra.mxu0 0.0
        %732 = vmatprep.subr.mxu0 0.0
        %733 = vmatpush1.msra.mxu0 0.0
        %734 = vmatprep.subr.mxu0 0.0
        %735 = vmatpush1.msra.mxu0 0.0
        %736 = vmatprep.subr.mxu0 0.0
        %737 = vmatpush1.msra.mxu0 0.0
        %738 = vmatprep.subr.mxu0 0.0
        %739 = vmatpush1.msra.mxu0 0.0
        %740 = vmatprep.subr.mxu0 0.0
        %741 = vmatpush1.msra.mxu0 0.0
        %742 = vmatprep.subr.mxu0 0.0
        %743 = vmatpush1.msra.mxu0 0.0
        %744 = vmatprep.subr.mxu0 0.0
        %745 = vmatpush1.msra.mxu0 0.0
        %746 = vmatprep.subr.mxu0 0.0
        %747 = vmatpush1.msra.mxu0 0.0
        %748 = vmatprep.subr.mxu0 0.0
        %749 = vmatpush1.msra.mxu0 0.0
        %750 = vmatprep.subr.mxu0 0.0
        %751 = vmatpush1.msra.mxu0 0.0
        %752 = vmatprep.subr.mxu0 0.0
        %753 = vmatpush1.msra.mxu0 0.0
        %754 = vmatprep.subr.mxu0 0.0
        %755 = vmatpush1.msra.mxu0 0.0
        %756 = vmatprep.subr.mxu0 0.0
        %757 = vmatpush1.msra.mxu0 0.0
        %758 = vmatprep.subr.mxu0 0.0
        %759 = vmatpush1.msra.mxu0 0.0
        %760 = vmatprep.subr.mxu0 0.0
        %761 = vmatpush1.msra.mxu0 0.0
        %762 = vmatprep.subr.mxu0 0.0
        %763 = vmatpush1.msra.mxu0 0.0
        %764 = vmatprep.subr.mxu0 0.0
        %765 = vmatpush1.msra.mxu0 0.0
        %766 = vmatprep.subr.mxu0 0.0
        %767 = vmatpush1.msra.mxu0 0.0
        %768 = vmatprep.subr.mxu0 0.0
        %769 = vmatpush1.msra.mxu0 0.0
        %770 = vmatprep.subr.mxu0 0.0
        %771 = vmatpush1.msra.mxu0 0.0
        %772 = vmatprep.mubr.f32.mxu0 0.0
        %773 = vmatmul.mubr.f32.gmra.mrb[0].mxu0 %v702
        %v774 = vpop.f32.mrb[0].mxu0
        %v775 = vadd.f32 0.0, %v774
        %v776 = vpop.f32.mrb[0].mxu0
        %777 = vdwg.mxu0
        %779 = vrot.lane.b32.xlu0 %v699, 124
        %v780 = vpop.permute.xlu0 %779
        %v781 = vsel %vm700, %v780, 0
        %783 = vmatprep.subr.mxu0 0.0
        %784 = vmatpush1.msra.mxu0 %v706
        %785 = vmatprep.subr.mxu0 0.0
        %786 = vmatpush1.msra.mxu0 0.0
        %787 = vmatprep.subr.mxu0 0.0
        %788 = vmatpush1.msra.mxu0 0.0
        %789 = vmatprep.subr.mxu0 0.0
        %790 = vmatpush1.msra.mxu0 0.0
        %791 = vmatprep.subr.mxu0 0.0
        %792 = vmatpush1.msra.mxu0 0.0
        %793 = vmatprep.subr.mxu0 0.0
        %794 = vmatpush1.msra.mxu0 0.0
        %795 = vmatprep.subr.mxu0 0.0
        %796 = vmatpush1.msra.mxu0 0.0
        %797 = vmatprep.subr.mxu0 0.0
        %798 = vmatpush1.msra.mxu0 0.0
        %799 = vmatprep.subr.mxu0 0.0
        %800 = vmatpush1.msra.mxu0 0.0
        %801 = vmatprep.subr.mxu0 0.0
        %802 = vmatpush1.msra.mxu0 0.0
        %803 = vmatprep.subr.mxu0 0.0
        %804 = vmatpush1.msra.mxu0 0.0
        %805 = vmatprep.subr.mxu0 0.0
        %806 = vmatpush1.msra.mxu0 0.0
        %807 = vmatprep.subr.mxu0 0.0
        %808 = vmatpush1.msra.mxu0 0.0
        %809 = vmatprep.subr.mxu0 0.0
        %810 = vmatpush1.msra.mxu0 0.0
        %811 = vmatprep.subr.mxu0 0.0
        %812 = vmatpush1.msra.mxu0 0.0
        %813 = vmatprep.subr.mxu0 0.0
        %814 = vmatpush1.msra.mxu0 0.0
        %815 = vmatprep.subr.mxu0 0.0
        %816 = vmatpush1.msra.mxu0 0.0
        %817 = vmatprep.subr.mxu0 0.0
        %818 = vmatpush1.msra.mxu0 0.0
        %819 = vmatprep.subr.mxu0 0.0
        %820 = vmatpush1.msra.mxu0 0.0
        %821 = vmatprep.subr.mxu0 0.0
        %822 = vmatpush1.msra.mxu0 0.0
        %823 = vmatprep.subr.mxu0 0.0
        %824 = vmatpush1.msra.mxu0 0.0
        %825 = vmatprep.subr.mxu0 0.0
        %826 = vmatpush1.msra.mxu0 0.0
        %827 = vmatprep.subr.mxu0 0.0
        %828 = vmatpush1.msra.mxu0 0.0
        %829 = vmatprep.subr.mxu0 0.0
        %830 = vmatpush1.msra.mxu0 0.0
        %831 = vmatprep.subr.mxu0 0.0
        %832 = vmatpush1.msra.mxu0 0.0
        %833 = vmatprep.subr.mxu0 0.0
        %834 = vmatpush1.msra.mxu0 0.0
        %835 = vmatprep.subr.mxu0 0.0
        %836 = vmatpush1.msra.mxu0 0.0
        %837 = vmatprep.subr.mxu0 0.0
        %838 = vmatpush1.msra.mxu0 0.0
        %839 = vmatprep.subr.mxu0 0.0
        %840 = vmatpush1.msra.mxu0 0.0
        %841 = vmatprep.subr.mxu0 0.0
        %842 = vmatpush1.msra.mxu0 0.0
        %843 = vmatprep.subr.mxu0 0.0
        %844 = vmatpush1.msra.mxu0 0.0
        %845 = vmatprep.subr.mxu0 0.0
        %846 = vmatpush1.msra.mxu0 0.0
        %847 = vmatprep.mubr.f32.mxu0 0.0
        %848 = vmatmul.mubr.f32.gmra.mrb[0].mxu0 %v781
        %v849 = vpop.f32.mrb[0].mxu0
        %v850 = vadd.f32 0.0, %v849
        %v851 = vpop.f32.mrb[0].mxu0
        %852 = vdwg.mxu0
        %v853 = vmul.f32 %v603, %v850
        %v854 = vmul.f32 %v775, %v853
        %v855 = vsub.f32 %v604, %v854
        %v857 = vlaneseq
        %v858 = vshrl.u32 %v857, 7
        %v859 = vsub.s32 0, %v858
        %v860 = vrot.slane %v853, %v859
        %v862 = vmul.f32 %v600, %v860
        %v864 = vlaneseq
        %v865 = vshrl.u32 %v864, 7
        %v866 = vsub.s32 0, %v865
        %v867 = vrot.slane %v855, %v866
        %v869 = vadd.f32 %v862, %v867
        %v870 = vmax.f32 %v869, 0.0
        %vm871 = vcmp.eq.s32.totalorder %v495, 0
        %v872 = vrot.slane %v870, 7
        %v873 = vsel %vm871, 1, 0
        %vm874 = vcmp.eq.s32.totalorder %v873, 1
        %v875 = vsel %vm874, 0.0, %v872
        %vm876 = vcmp.eq.s32.totalorder %v495, 7
        %v877 = vrot.slane %v870, 1
        %v878 = vsel %vm876, 1, 0
        %vm879 = vcmp.eq.s32.totalorder %v878, 1
        %v880 = vsel %vm879, 0.0, %v877
        %v881 = vld [vmem:[#allocation7] sm:$0xff]
        %v882 = vld [vmem:[#allocation7 + $0x8] sm:$0xff]
        %v883 = vld [vmem:[#allocation7 + $0x10] sm:$0xff]
        %v884 = vld [vmem:[#allocation7 + $0x18] sm:$0xff]
        %v885 = vld [vmem:[#allocation7 + $0x20] sm:$0xff]
        %v886 = vld [vmem:[#allocation7 + $0x28] sm:$0xff]
        %v887 = vld [vmem:[#allocation7 + $0x30] sm:$0xff]
        %v888 = vld [vmem:[#allocation7 + $0x38] sm:$0xff]
        %v889 = vld [vmem:[#allocation7 + $0x40] sm:$0xff]
        %v890 = vld [vmem:[#allocation7 + $0x48] sm:$0xff]
        %v891 = vld [vmem:[#allocation7 + $0x50] sm:$0xff]
        %v892 = vld [vmem:[#allocation7 + $0x58] sm:$0xff]
        %v893 = vld [vmem:[#allocation7 + $0x60] sm:$0xff]
        %v894 = vld [vmem:[#allocation7 + $0x68] sm:$0xff]
        %v895 = vld [vmem:[#allocation7 + $0x70] sm:$0xff]
        %v896 = vld [vmem:[#allocation7 + $0x78] sm:$0xff]
        %v897 = vld [vmem:[#allocation7 + $0x80] sm:$0xff]
        %v898 = vld [vmem:[#allocation7 + $0x88] sm:$0xff]
        %v899 = vld [vmem:[#allocation7 + $0x90] sm:$0xff]
        %v900 = vld [vmem:[#allocation7 + $0x98] sm:$0xff]
        %v901 = vld [vmem:[#allocation7 + $0xa0] sm:$0xff]
        %v902 = vld [vmem:[#allocation7 + $0xa8] sm:$0xff]
        %v903 = vld [vmem:[#allocation7 + $0xb0] sm:$0xff]
        %v904 = vld [vmem:[#allocation7 + $0xb8] sm:$0xff]
        %v905 = vld [vmem:[#allocation7 + $0xc0] sm:$0xff]
        %v906 = vld [vmem:[#allocation7 + $0xc8] sm:$0xff]
        %v907 = vld [vmem:[#allocation7 + $0xd0] sm:$0xff]
        %v908 = vld [vmem:[#allocation7 + $0xd8] sm:$0xff]
        %v909 = vld [vmem:[#allocation7 + $0xe0] sm:$0xff]
        %v910 = vld [vmem:[#allocation7 + $0xe8] sm:$0xff]
        %v911 = vld [vmem:[#allocation7 + $0xf0] sm:$0xff]
        %v912 = vld [vmem:[#allocation7 + $0xf8] sm:$0xff]
        %v913 = vld [vmem:[#allocation7 + $0x100] sm:$0xff]
        %v914 = vld [vmem:[#allocation7 + $0x108] sm:$0xff]
        %v915 = vld [vmem:[#allocation7 + $0x110] sm:$0xff]
        %v916 = vld [vmem:[#allocation7 + $0x118] sm:$0xff]
        %v917 = vld [vmem:[#allocation7 + $0x120] sm:$0xff]
        %v918 = vld [vmem:[#allocation7 + $0x128] sm:$0xff]
        %v919 = vld [vmem:[#allocation7 + $0x130] sm:$0xff]
        %v920 = vld [vmem:[#allocation7 + $0x138] sm:$0xff]
        %v921 = vld [vmem:[#allocation7 + $0x140] sm:$0xff]
        %v922 = vld [vmem:[#allocation7 + $0x148] sm:$0xff]
        %v923 = vld [vmem:[#allocation7 + $0x150] sm:$0xff]
        %v924 = vld [vmem:[#allocation7 + $0x158] sm:$0xff]
        %v925 = vld [vmem:[#allocation7 + $0x160] sm:$0xff]
        %v926 = vld [vmem:[#allocation7 + $0x168] sm:$0xff]
        %v927 = vld [vmem:[#allocation7 + $0x170] sm:$0xff]
        %v928 = vld [vmem:[#allocation7 + $0x178] sm:$0xff]
        %v929 = vld [vmem:[#allocation10] sm:$0x1]
        %v931 = vlaneseq
        %v932 = vshrl.u32 %v931, 7
        %v933 = vsub.s32 0, %v932
        %v934 = vrot.slane %v929, %v933
        %936 = vmatprep.subr.mxu0 0.0
        %937 = vmatpush1.msra.mxu0 %v881
        %938 = vmatprep.subr.mxu0 0.0
        %939 = vmatpush1.msra.mxu0 %v882
        %940 = vmatprep.subr.mxu0 0.0
        %941 = vmatpush1.msra.mxu0 %v883
        %942 = vmatprep.subr.mxu0 0.0
        %943 = vmatpush1.msra.mxu0 %v884
        %944 = vmatprep.subr.mxu0 0.0
        %945 = vmatpush1.msra.mxu0 %v885
        %946 = vmatprep.subr.mxu0 0.0
        %947 = vmatpush1.msra.mxu0 %v886
        %948 = vmatprep.subr.mxu0 0.0
        %949 = vmatpush1.msra.mxu0 %v887
        %950 = vmatprep.subr.mxu0 0.0
        %951 = vmatpush1.msra.mxu0 %v888
        %952 = vmatprep.subr.mxu0 0.0
        %953 = vmatpush1.msra.mxu0 %v889
        %954 = vmatprep.subr.mxu0 0.0
        %955 = vmatpush1.msra.mxu0 %v890
        %956 = vmatprep.subr.mxu0 0.0
        %957 = vmatpush1.msra.mxu0 %v891
        %958 = vmatprep.subr.mxu0 0.0
        %959 = vmatpush1.msra.mxu0 %v892
        %960 = vmatprep.subr.mxu0 0.0
        %961 = vmatpush1.msra.mxu0 %v893
        %962 = vmatprep.subr.mxu0 0.0
        %963 = vmatpush1.msra.mxu0 %v894
        %964 = vmatprep.subr.mxu0 0.0
        %965 = vmatpush1.msra.mxu0 %v895
        %966 = vmatprep.subr.mxu0 0.0
        %967 = vmatpush1.msra.mxu0 %v896
        %968 = vmatprep.subr.mxu0 0.0
        %969 = vmatpush1.msra.mxu0 %v897
        %970 = vmatprep.subr.mxu0 0.0
        %971 = vmatpush1.msra.mxu0 %v898
        %972 = vmatprep.subr.mxu0 0.0
        %973 = vmatpush1.msra.mxu0 %v899
        %974 = vmatprep.subr.mxu0 0.0
        %975 = vmatpush1.msra.mxu0 %v900
        %976 = vmatprep.subr.mxu0 0.0
        %977 = vmatpush1.msra.mxu0 %v901
        %978 = vmatprep.subr.mxu0 0.0
        %979 = vmatpush1.msra.mxu0 %v902
        %980 = vmatprep.subr.mxu0 0.0
        %981 = vmatpush1.msra.mxu0 %v903
        %982 = vmatprep.subr.mxu0 0.0
        %983 = vmatpush1.msra.mxu0 %v904
        %984 = vmatprep.subr.mxu0 0.0
        %985 = vmatpush1.msra.mxu0 %v905
        %986 = vmatprep.subr.mxu0 0.0
        %987 = vmatpush1.msra.mxu0 %v906
        %988 = vmatprep.subr.mxu0 0.0
        %989 = vmatpush1.msra.mxu0 %v907
        %990 = vmatprep.subr.mxu0 0.0
        %991 = vmatpush1.msra.mxu0 %v908
        %992 = vmatprep.subr.mxu0 0.0
        %993 = vmatpush1.msra.mxu0 %v909
        %994 = vmatprep.subr.mxu0 0.0
        %995 = vmatpush1.msra.mxu0 %v910
        %996 = vmatprep.subr.mxu0 0.0
        %997 = vmatpush1.msra.mxu0 %v911
        %998 = vmatprep.subr.mxu0 0.0
        %999 = vmatpush1.msra.mxu0 %v912
        %1000 = vmatprep.mubr.f32.mxu0 %v870
        %1001 = vmatmul.mubr.f32.gmra.mrb[0].mxu0 %v875
        %v1002 = vpop.f32.mrb[0].mxu0
        %v1003 = vadd.f32 %v934, %v1002
        %v1004 = vpop.f32.mrb[0].mxu0
        %1005 = vdwg.mxu0
        %1006 = vmatprep.subr.mxu0 0.0
        %1007 = vmatpush1.msra.mxu0 %v913
        %1008 = vmatprep.subr.mxu0 0.0
        %1009 = vmatpush1.msra.mxu0 %v914
        %1010 = vmatprep.subr.mxu0 0.0
        %1011 = vmatpush1.msra.mxu0 %v915
        %1012 = vmatprep.subr.mxu0 0.0
        %1013 = vmatpush1.msra.mxu0 %v916
        %1014 = vmatprep.subr.mxu0 0.0
        %1015 = vmatpush1.msra.mxu0 %v917
        %1016 = vmatprep.subr.mxu0 0.0
        %1017 = vmatpush1.msra.mxu0 %v918
        %1018 = vmatprep.subr.mxu0 0.0
        %1019 = vmatpush1.msra.mxu0 %v919
        %1020 = vmatprep.subr.mxu0 0.0
        %1021 = vmatpush1.msra.mxu0 %v920
        %1022 = vmatprep.subr.mxu0 0.0
        %1023 = vmatpush1.msra.mxu0 %v921
        %1024 = vmatprep.subr.mxu0 0.0
        %1025 = vmatpush1.msra.mxu0 %v922
        %1026 = vmatprep.subr.mxu0 0.0
        %1027 = vmatpush1.msra.mxu0 %v923
        %1028 = vmatprep.subr.mxu0 0.0
        %1029 = vmatpush1.msra.mxu0 %v924
        %1030 = vmatprep.subr.mxu0 0.0
        %1031 = vmatpush1.msra.mxu0 %v925
        %1032 = vmatprep.subr.mxu0 0.0
        %1033 = vmatpush1.msra.mxu0 %v926
        %1034 = vmatprep.subr.mxu0 0.0
        %1035 = vmatpush1.msra.mxu0 %v927
        %1036 = vmatprep.subr.mxu0 0.0
        %1037 = vmatpush1.msra.mxu0 %v928
        %1038 = vmatprep.subr.mxu0 0.0
        %1039 = vmatpush1.msra.mxu0 0.0
        %1040 = vmatprep.subr.mxu0 0.0
        %1041 = vmatpush1.msra.mxu0 0.0
        %1042 = vmatprep.subr.mxu0 0.0
        %1043 = vmatpush1.msra.mxu0 0.0
        %1044 = vmatprep.subr.mxu0 0.0
        %1045 = vmatpush1.msra.mxu0 0.0
        %1046 = vmatprep.subr.mxu0 0.0
        %1047 = vmatpush1.msra.mxu0 0.0
        %1048 = vmatprep.subr.mxu0 0.0
        %1049 = vmatpush1.msra.mxu0 0.0
        %1050 = vmatprep.subr.mxu0 0.0
        %1051 = vmatpush1.msra.mxu0 0.0
        %1052 = vmatprep.subr.mxu0 0.0
        %1053 = vmatpush1.msra.mxu0 0.0
        %1054 = vmatprep.subr.mxu0 0.0
        %1055 = vmatpush1.msra.mxu0 0.0
        %1056 = vmatprep.subr.mxu0 0.0
        %1057 = vmatpush1.msra.mxu0 0.0
        %1058 = vmatprep.subr.mxu0 0.0
        %1059 = vmatpush1.msra.mxu0 0.0
        %1060 = vmatprep.subr.mxu0 0.0
        %1061 = vmatpush1.msra.mxu0 0.0
        %1062 = vmatprep.subr.mxu0 0.0
        %1063 = vmatpush1.msra.mxu0 0.0
        %1064 = vmatprep.subr.mxu0 0.0
        %1065 = vmatpush1.msra.mxu0 0.0
        %1066 = vmatprep.subr.mxu0 0.0
        %1067 = vmatpush1.msra.mxu0 0.0
        %1068 = vmatprep.subr.mxu0 0.0
        %1069 = vmatpush1.msra.mxu0 0.0
        %1070 = vmatprep.mubr.f32.mxu0 0.0
        %1071 = vmatmul.mubr.f32.gmra.mrb[0].mxu0 %v880
        %v1072 = vpop.f32.mrb[0].mxu0
        %v1073 = vadd.f32 %v1003, %v1072
        %v1074 = vpop.f32.mrb[0].mxu0
        %1075 = vdwg.mxu0
        %v1076 = vld [vmem:[#allocation11] sm:$0x1]
        %v1077 = vld [vmem:[#allocation13] sm:$0x1]
        %v1078 = vld [vmem:[%s10] sm:$0xff]
        %v1079 = vld [vmem:[%s10 + $0x8] sm:$0xff]
        %v1080 = vmul.f32 %v1073, %v1073
        %v1081 = vrot.slane %v1073, 4
        %v1082 = vadd.f32 %v1073, %v1081
        %v1083 = vrot.slane %v1082, 2
        %v1084 = vadd.f32 %v1082, %v1083
        %v1085 = vrot.slane %v1084, 1
        %v1086 = vadd.f32 %v1084, %v1085
        %v1087 = vrot.slane %v1080, 4
        %v1088 = vadd.f32 %v1080, %v1087
        %v1089 = vrot.slane %v1088, 2
        %v1090 = vadd.f32 %v1088, %v1089
        %v1091 = vrot.slane %v1090, 1
        %v1092 = vadd.f32 %v1090, %v1091
        %1093 = vmatprep.subr.mxu0 %v1079
        %1094 = vmatpush1.xpose.msra.mxu0 %v1078
        %1095 = vmatprep.subr.mxu0 0.0
        %1096 = vmatpush1.xpose.msra.mxu0 0.0
        %1097 = vmatprep.subr.mxu0 0.0
        %1098 = vmatpush1.xpose.msra.mxu0 0.0
        %1099 = vmatprep.subr.mxu0 0.0
        %1100 = vmatpush1.xpose.msra.mxu0 0.0
        %1101 = vmatprep.subr.mxu0 0.0
        %1102 = vmatpush1.xpose.msra.mxu0 0.0
        %1103 = vmatprep.subr.mxu0 0.0
        %1104 = vmatpush1.xpose.msra.mxu0 0.0
        %1105 = vmatprep.subr.mxu0 0.0
        %1106 = vmatpush1.xpose.msra.mxu0 0.0
        %1107 = vmatprep.subr.mxu0 0.0
        %1108 = vmatpush1.xpose.msra.mxu0 0.0
        %1109 = vmatprep.subr.mxu0 0.0
        %1110 = vmatpush1.xpose.msra.mxu0 0.0
        %1111 = vmatprep.subr.mxu0 0.0
        %1112 = vmatpush1.xpose.msra.mxu0 0.0
        %1113 = vmatprep.subr.mxu0 0.0
        %1114 = vmatpush1.xpose.msra.mxu0 0.0
        %1115 = vmatprep.subr.mxu0 0.0
        %1116 = vmatpush1.xpose.msra.mxu0 0.0
        %1117 = vmatprep.subr.mxu0 0.0
        %1118 = vmatpush1.xpose.msra.mxu0 0.0
        %1119 = vmatprep.subr.mxu0 0.0
        %1120 = vmatpush1.xpose.msra.mxu0 0.0
        %1121 = vmatprep.subr.mxu0 0.0
        %1122 = vmatpush1.xpose.msra.mxu0 0.0
        %1123 = vmatprep.subr.mxu0 0.0
        %1124 = vmatpush1.xpose.msra.mxu0 0.0
        %1125 = vmatprep.subr.mxu0 0.0
        %1126 = vmatpush1.xpose.msra.mxu0 0.0
        %1127 = vmatprep.subr.mxu0 0.0
        %1128 = vmatpush1.xpose.msra.mxu0 0.0
        %1129 = vmatprep.subr.mxu0 0.0
        %1130 = vmatpush1.xpose.msra.mxu0 0.0
        %1131 = vmatprep.subr.mxu0 0.0
        %1132 = vmatpush1.xpose.msra.mxu0 0.0
        %1133 = vmatprep.subr.mxu0 0.0
        %1134 = vmatpush1.xpose.msra.mxu0 0.0
        %1135 = vmatprep.subr.mxu0 0.0
        %1136 = vmatpush1.xpose.msra.mxu0 0.0
        %1137 = vmatprep.subr.mxu0 0.0
        %1138 = vmatpush1.xpose.msra.mxu0 0.0
        %1139 = vmatprep.subr.mxu0 0.0
        %1140 = vmatpush1.xpose.msra.mxu0 0.0
        %1141 = vmatprep.subr.mxu0 0.0
        %1142 = vmatpush1.xpose.msra.mxu0 0.0
        %1143 = vmatprep.subr.mxu0 0.0
        %1144 = vmatpush1.xpose.msra.mxu0 0.0
        %1145 = vmatprep.subr.mxu0 0.0
        %1146 = vmatpush1.xpose.msra.mxu0 0.0
        %1147 = vmatprep.subr.mxu0 0.0
        %1148 = vmatpush1.xpose.msra.mxu0 0.0
        %1149 = vmatprep.subr.mxu0 0.0
        %1150 = vmatpush1.xpose.msra.mxu0 0.0
        %1151 = vmatprep.subr.mxu0 0.0
        %1152 = vmatpush1.xpose.msra.mxu0 0.0
        %1153 = vmatprep.subr.mxu0 0.0
        %1154 = vmatpush1.xpose.msra.mxu0 0.0
        %1155 = vmatprep.subr.mxu0 0.0
        %1156 = vmatpush1.xpose.msra.mxu0 0.0
        %1157 = vmatprep.mubr.f32.mxu0 %v1092
        %1158 = vmatmul.mubr.f32.gmra.mrb[0].mxu0 %v1086
        %v1159 = vpop.f32.mrb[0].mxu0
        %v1160 = vadd.f32 0.0, %v1159
        %v1161 = vpop.f32.mrb[0].mxu0
        %1162 = vdwg.mxu0
        %v1163 = vmul.f32 %v1160, 0.0078125
        %v1164 = vmul.f32 %v1163, %v1163
        %1166 = vrot.lane.b32.xlu0 %v1164, 4
        %v1167 = vpop.permute.xlu0 %1166
        %v1169 = vsub.f32 %v1163, %v1167
        %v1170 = vmax.f32 %v1169, 0.0
        %v1171 = vadd.f32 %v1170, 1e-05
        %v1172 = vrsqrt.pop %v1171
        %v1174 = vsel %vm700, %v1163, 0
        %v1177 = vsel %vm704, %v1078, 0
        %1179 = vmatprep.subr.mxu0 0.0
        %1180 = vmatpush1.msra.mxu0 %v1177
        %1181 = vmatprep.subr.mxu0 0.0
        %1182 = vmatpush1.msra.mxu0 0.0
        %1183 = vmatprep.subr.mxu0 0.0
        %1184 = vmatpush1.msra.mxu0 0.0
        %1185 = vmatprep.subr.mxu0 0.0
        %1186 = vmatpush1.msra.mxu0 0.0
        %1187 = vmatprep.subr.mxu0 0.0
        %1188 = vmatpush1.msra.mxu0 0.0
        %1189 = vmatprep.subr.mxu0 0.0
        %1190 = vmatpush1.msra.mxu0 0.0
        %1191 = vmatprep.subr.mxu0 0.0
        %1192 = vmatpush1.msra.mxu0 0.0
        %1193 = vmatprep.subr.mxu0 0.0
        %1194 = vmatpush1.msra.mxu0 0.0
        %1195 = vmatprep.subr.mxu0 0.0
        %1196 = vmatpush1.msra.mxu0 0.0
        %1197 = vmatprep.subr.mxu0 0.0
        %1198 = vmatpush1.msra.mxu0 0.0
        %1199 = vmatprep.subr.mxu0 0.0
        %1200 = vmatpush1.msra.mxu0 0.0
        %1201 = vmatprep.subr.mxu0 0.0
        %1202 = vmatpush1.msra.mxu0 0.0
        %1203 = vmatprep.subr.mxu0 0.0
        %1204 = vmatpush1.msra.mxu0 0.0
        %1205 = vmatprep.subr.mxu0 0.0
        %1206 = vmatpush1.msra.mxu0 0.0
        %1207 = vmatprep.subr.mxu0 0.0
        %1208 = vmatpush1.msra.mxu0 0.0
        %1209 = vmatprep.subr.mxu0 0.0
        %1210 = vmatpush1.msra.mxu0 0.0
        %1211 = vmatprep.subr.mxu0 0.0
        %1212 = vmatpush1.msra.mxu0 0.0
        %1213 = vmatprep.subr.mxu0 0.0
        %1214 = vmatpush1.msra.mxu0 0.0
        %1215 = vmatprep.subr.mxu0 0.0
        %1216 = vmatpush1.msra.mxu0 0.0
        %1217 = vmatprep.subr.mxu0 0.0
        %1218 = vmatpush1.msra.mxu0 0.0
        %1219 = vmatprep.subr.mxu0 0.0
        %1220 = vmatpush1.msra.mxu0 0.0
        %1221 = vmatprep.subr.mxu0 0.0
        %1222 = vmatpush1.msra.mxu0 0.0
        %1223 = vmatprep.subr.mxu0 0.0
        %1224 = vmatpush1.msra.mxu0 0.0
        %1225 = vmatprep.subr.mxu0 0.0
        %1226 = vmatpush1.msra.mxu0 0.0
        %1227 = vmatprep.subr.mxu0 0.0
        %1228 = vmatpush1.msra.mxu0 0.0
        %1229 = vmatprep.subr.mxu0 0.0
        %1230 = vmatpush1.msra.mxu0 0.0
        %1231 = vmatprep.subr.mxu0 0.0
        %1232 = vmatpush1.msra.mxu0 0.0
        %1233 = vmatprep.subr.mxu0 0.0
        %1234 = vmatpush1.msra.mxu0 0.0
        %1235 = vmatprep.subr.mxu0 0.0
        %1236 = vmatpush1.msra.mxu0 0.0
        %1237 = vmatprep.subr.mxu0 0.0
        %1238 = vmatpush1.msra.mxu0 0.0
        %1239 = vmatprep.subr.mxu0 0.0
        %1240 = vmatpush1.msra.mxu0 0.0
        %1241 = vmatprep.subr.mxu0 0.0
        %1242 = vmatpush1.msra.mxu0 0.0
        %1243 = vmatprep.mubr.f32.mxu0 0.0
        %1244 = vmatmul.mubr.f32.gmra.mrb[0].mxu0 %v1174
        %v1245 = vpop.f32.mrb[0].mxu0
        %v1246 = vadd.f32 0.0, %v1245
        %v1247 = vpop.f32.mrb[0].mxu0
        %1248 = vdwg.mxu0
        %1250 = vrot.lane.b32.xlu0 %v1172, 124
        %v1251 = vpop.permute.xlu0 %1250
        %v1252 = vsel %vm700, %v1251, 0
        %1254 = vmatprep.subr.mxu0 0.0
        %1255 = vmatpush1.msra.mxu0 %v1177
        %1256 = vmatprep.subr.mxu0 0.0
        %1257 = vmatpush1.msra.mxu0 0.0
        %1258 = vmatprep.subr.mxu0 0.0
        %1259 = vmatpush1.msra.mxu0 0.0
        %1260 = vmatprep.subr.mxu0 0.0
        %1261 = vmatpush1.msra.mxu0 0.0
        %1262 = vmatprep.subr.mxu0 0.0
        %1263 = vmatpush1.msra.mxu0 0.0
        %1264 = vmatprep.subr.mxu0 0.0
        %1265 = vmatpush1.msra.mxu0 0.0
        %1266 = vmatprep.subr.mxu0 0.0
        %1267 = vmatpush1.msra.mxu0 0.0
        %1268 = vmatprep.subr.mxu0 0.0
        %1269 = vmatpush1.msra.mxu0 0.0
        %1270 = vmatprep.subr.mxu0 0.0
        %1271 = vmatpush1.msra.mxu0 0.0
        %1272 = vmatprep.subr.mxu0 0.0
        %1273 = vmatpush1.msra.mxu0 0.0
        %1274 = vmatprep.subr.mxu0 0.0
        %1275 = vmatpush1.msra.mxu0 0.0
        %1276 = vmatprep.subr.mxu0 0.0
        %1277 = vmatpush1.msra.mxu0 0.0
        %1278 = vmatprep.subr.mxu0 0.0
        %1279 = vmatpush1.msra.mxu0 0.0
        %1280 = vmatprep.subr.mxu0 0.0
        %1281 = vmatpush1.msra.mxu0 0.0
        %1282 = vmatprep.subr.mxu0 0.0
        %1283 = vmatpush1.msra.mxu0 0.0
        %1284 = vmatprep.subr.mxu0 0.0
        %1285 = vmatpush1.msra.mxu0 0.0
        %1286 = vmatprep.subr.mxu0 0.0
        %1287 = vmatpush1.msra.mxu0 0.0
        %1288 = vmatprep.subr.mxu0 0.0
        %1289 = vmatpush1.msra.mxu0 0.0
        %1290 = vmatprep.subr.mxu0 0.0
        %1291 = vmatpush1.msra.mxu0 0.0
        %1292 = vmatprep.subr.mxu0 0.0
        %1293 = vmatpush1.msra.mxu0 0.0
        %1294 = vmatprep.subr.mxu0 0.0
        %1295 = vmatpush1.msra.mxu0 0.0
        %1296 = vmatprep.subr.mxu0 0.0
        %1297 = vmatpush1.msra.mxu0 0.0
        %1298 = vmatprep.subr.mxu0 0.0
        %1299 = vmatpush1.msra.mxu0 0.0
        %1300 = vmatprep.subr.mxu0 0.0
        %1301 = vmatpush1.msra.mxu0 0.0
        %1302 = vmatprep.subr.mxu0 0.0
        %1303 = vmatpush1.msra.mxu0 0.0
        %1304 = vmatprep.subr.mxu0 0.0
        %1305 = vmatpush1.msra.mxu0 0.0
        %1306 = vmatprep.subr.mxu0 0.0
        %1307 = vmatpush1.msra.mxu0 0.0
        %1308 = vmatprep.subr.mxu0 0.0
        %1309 = vmatpush1.msra.mxu0 0.0
        %1310 = vmatprep.subr.mxu0 0.0
        %1311 = vmatpush1.msra.mxu0 0.0
        %1312 = vmatprep.subr.mxu0 0.0
        %1313 = vmatpush1.msra.mxu0 0.0
        %1314 = vmatprep.subr.mxu0 0.0
        %1315 = vmatpush1.msra.mxu0 0.0
        %1316 = vmatprep.subr.mxu0 0.0
        %1317 = vmatpush1.msra.mxu0 0.0
        %1318 = vmatprep.mubr.f32.mxu0 0.0
        %1319 = vmatmul.mubr.f32.gmra.mrb[0].mxu0 %v1252
        %v1320 = vpop.f32.mrb[0].mxu0
        %v1321 = vadd.f32 0.0, %v1320
        %v1322 = vpop.f32.mrb[0].mxu0
        %1323 = vdwg.mxu0
        %v1324 = vmul.f32 %v1076, %v1321
        %v1325 = vmul.f32 %v1246, %v1324
        %v1326 = vsub.f32 %v1077, %v1325
        %v1328 = vlaneseq
        %v1329 = vshrl.u32 %v1328, 7
        %v1330 = vsub.s32 0, %v1329
        %v1331 = vrot.slane %v1324, %v1330
        %v1333 = vmul.f32 %v1073, %v1331
        %v1335 = vlaneseq
        %v1336 = vshrl.u32 %v1335, 7
        %v1337 = vsub.s32 0, %v1336
        %v1338 = vrot.slane %v1326, %v1337
        %v1340 = vadd.f32 %v1333, %v1338
        %v1341 = vmax.f32 %v1340, 0.0
        %1342 = vst [vmem:[%s481] sm:$0xff] %v1341
        %s1343 = sand.u32 %s275, 1
        %s1344 = scalar_lea.sflag [#allocation4], %s1343
        %s1345 = sand.u32 %s275, 1
        %s1346 = smul.addr %s1345, 8
        %s1347 = scalar_lea.vmem [#allocation14], %s1346
        // Predicated region
        $region93: #{tpu_custom_call.1} parent=63 // pred_check
          %p1348 = pneg %p285
        $region94: #{tpu_custom_call.1} parent=63 // pred_check_branch
          %1350 = sbr.rel (%p1348) target = $region96
        $region95: #{tpu_custom_call.1} parent=63 // pred_region
          %s1352 = ssub.s32 128, 128
          %1353 = vsyncadd %s1344, %s1352
          %s1354 = smul.addr %s31, 128
          %s1355 = scalar_lea.hbm %s11, %s1354
          %s1357 = sshll.u32 %s1347, 4
          %s1358 = int_to_ptr.vmem [resolvable:$true] %s1357
          %1360 = dma.vmem_to_hbm [thread:$0]  %s1358, 128, %s1355, %s1344
        $region96: #{tpu_custom_call.1} parent=63 // pred_fallthru
          _
      $region64: #{tpu_custom_call.1} parent=5 // pred_fallthru
        _
      %p1361 = scmp.le.s32.totalorder 2, %s26
      // Predicated region
      $region97: #{tpu_custom_call.1} parent=5 // pred_check
        %p1362 = pneg %p1361
      $region98: #{tpu_custom_call.1} parent=5 // pred_check_branch
        %1364 = sbr.rel (%p1362) target = $region100
      $region99: #{tpu_custom_call.1} parent=5 // pred_region
        %s1365 = ssub.s32 %s26, 2
        // Predicated region
        $region101: #{tpu_custom_call.1} parent=99 // pred_check
          %p1366 = pneg %p291
        $region102: #{tpu_custom_call.1} parent=99 // pred_check_branch
          %1368 = sbr.rel (%p1366) target = $region104
        $region103: #{tpu_custom_call.1} parent=99 // pred_region
          %s1369 = sand.u32 %s276, 1
          %s1370 = scalar_lea.sflag [#allocation4], %s1369
          %s1371 = sand.u32 %s276, 1
          %s1372 = smul.addr %s1371, 8
          %s1373 = scalar_lea.vmem [#allocation14], %s1372
          %1374 = dma.done %s1370, 128
        $region104: #{tpu_custom_call.1} parent=99 // pred_fallthru
          _
      $region100: #{tpu_custom_call.1} parent=5 // pred_fallthru
        _
    $region6: #{tpu_custom_call.1} parent=1 // loop_footer
      %s30 = sadd.s32 1, %s26
    $region7: #{tpu_custom_call.1} parent=1 // loop_footer_branch
      %25 = sbr.rel target = $region3
    $region8: #{tpu_custom_call.1} parent=1 // loop_exit
      _
    %1375 = vsyncpa [#allocation3], 1
    %s1376 = scalar_lea.sflag [#allocation3], 1
    %1377 = vsyncpa %s1376, 1
    %1378 = vsyncpa [#allocation6], 1
    %1379 = vsyncpa [#allocation9], 1
    %1380 = vsyncpa [#allocation12], 1
    %1381 = vsyncpa [#allocation4], 1
    %s1382 = scalar_lea.sflag [#allocation4], 1
    %1383 = vsyncpa %s1382, 1

// kernel: tpu_custom_call.1
$region0: #{tpu_custom_call.1}
  #allocation0 [shape = 'u32[]', space=smem, size = 0x4, offset = 0x4, fixed_abs, tag = 'smem constant byte address 0x4 - core index']
  #allocation1 [shape = 'u32[144,128]{1,0:T(1,128)}', space=vmem, size = 0x12000, scoped, tag = 'internal scratch']
  %s0 = inlined_call_operand.hbm [shape: f32[2,8,192], index: 0, kind: input, shape index: {}]
  %s1 = inlined_call_operand.hbm [shape: f32[192,128], index: 1, kind: input, shape index: {}]
  %s2 = inlined_call_operand.hbm [shape: f32[384,128], index: 2, kind: input, shape index: {}]
  %s3 = inlined_call_operand.vmem [shape: f32[1,128], index: 3, kind: input, shape index: {}]
  %s4 = inlined_call_operand.vmem [shape: f32[1,128], index: 4, kind: input, shape index: {}]
  %s5 = inlined_call_operand.hbm [shape: f32[1,128], index: 5, kind: input, shape index: {}]
  %s6 = inlined_call_operand.hbm [shape: f32[1,128], index: 6, kind: input, shape index: {}]
  %s7 = inlined_call_operand.hbm [shape: f32[1,128], index: 7, kind: input, shape index: {}]
  %s8 = inlined_call_operand.hbm [shape: f32[1,128], index: 8, kind: input, shape index: {}]
  %s9 = inlined_call_operand.vmem [shape: f32[8,256], index: 9, kind: input, shape index: {}]
  %s10 = inlined_call_operand.vmem [shape: f32[8,256], index: 10, kind: input, shape index: {}]
  %s11 = inlined_call_operand.hbm [shape: f32[2,8,128], index: 11, kind: output, shape index: {}]
  %s12 = sld [smem:[#allocation0]]
  $region105: #{tpu_custom_call.1} parent=0
    _
  %s14 = ssub.s32 1, %s12
  %s15 = scalar_select 0, %s14, %s12
  $region1: #{tpu_custom_call.1} parent=0
    #allocation2 [shape = 'u8[16384]{0}', space=vmem, size = 0x4000, scoped, tag = 'input window, operand 0']
    #allocation3 [shape = 's32[2]{0}', space=sflag, size = 0x8, scoped, tag = 'scoped memory for tpu_custom_call.1']
    #allocation4 [shape = 's32[2]{0}', space=sflag, size = 0x8, scoped, tag = 'scoped memory for tpu_custom_call.1']
    #allocation5 [shape = 'u8[98304]{0}', space=vmem, size = 0x18000, scoped, tag = 'input window, operand 1, single buffered']
    #allocation6 [shape = 's32[1]{0}', space=sflag, size = 0x4, scoped, tag = 'scoped memory for tpu_custom_call.1']
    #allocation7 [shape = 'u8[196608]{0}', space=vmem, size = 0x30000, scoped, tag = 'input window, operand 2, single buffered']
    #allocation8 [shape = 'u8[512]{0}', space=vmem, size = 0x400, scoped, tag = 'input window, operand 5, single buffered']
    #allocation9 [shape = 's32[1]{0}', space=sflag, size = 0x4, scoped, tag = 'scoped memory for tpu_custom_call.1']
    #allocation10 [shape = 'u8[512]{0}', space=vmem, size = 0x400, scoped, tag = 'input window, operand 6, single buffered']
    #allocation11 [shape = 'u8[512]{0}', space=vmem, size = 0x400, scoped, tag = 'input window, operand 7, single buffered']
    #allocation12 [shape = 's32[1]{0}', space=sflag, size = 0x4, scoped, tag = 'scoped memory for tpu_custom_call.1']
    #allocation13 [shape = 'u8[512]{0}', space=vmem, size = 0x400, scoped, tag = 'input window, operand 8, single buffered']
    #allocation14 [shape = 'u8[8192]{0}', space=vmem, size = 0x2000, scoped, tag = 'output window, operand 0']
    %16 = vsyncpa [#allocation3], 0
    %s17 = scalar_lea.sflag [#allocation3], 1
    %18 = vsyncpa %s17, 0
    %19 = vsyncpa [#allocation6], 0
    %20 = vsyncpa [#allocation9], 0
    %21 = vsyncpa [#allocation12], 0
    %22 = vsyncpa [#allocation4], 0
    %s23 = scalar_lea.sflag [#allocation4], 1
    %24 = vsyncpa %s23, 0
    loop: start=0, step=1, limit=4
    $region2: #{tpu_custom_call.1} parent=1 // loop_pre_header
      _
    $region3: #{tpu_custom_call.1} parent=1 // loop_header
      %s26 = sphi 0, %s30
      %p27 = scmp.ge.s32.totalorder %s26, 4
      %s36 = sphi 0, %s38
      %s39 = sphi 0, %s36
      %s40 = sphi 0, %s39
      %s56 = sphi 0, %s40
      %s60 = sphi 0, %s60
      %s62 = sphi 0, %s60
      %s63 = sphi 0, %s62
      %s77 = sphi 0, %s63
      %s81 = sphi 0, %s81
      %s83 = sphi 0, %s81
      %s84 = sphi 0, %s83
      %s98 = sphi 0, %s84
      %s102 = sphi 0, %s102
      %s104 = sphi 0, %s102
      %s105 = sphi 0, %s104
      %s119 = sphi 0, %s105
      %s123 = sphi 0, %s123
      %s125 = sphi 0, %s123
      %s126 = sphi 0, %s125
      %s140 = sphi 0, %s126
      %s144 = sphi 0, %s144
      %s146 = sphi 0, %s144
      %s147 = sphi 0, %s146
      %s161 = sphi 0, %s147
      %s165 = sphi 0, %s165
      %s167 = sphi 0, %s165
      %s168 = sphi 0, %s167
      %s182 = sphi 0, %s168
      %s186 = sphi 0, %s186
      %s188 = sphi 0, %s186
      %s189 = sphi 0, %s188
      %s203 = sphi 0, %s189
      %s207 = sphi 0, %s207
      %s209 = sphi 0, %s207
      %s210 = sphi 0, %s209
      %s224 = sphi 0, %s210
      %s228 = sphi 0, %s228
      %s230 = sphi 0, %s228
      %s231 = sphi 0, %s230
      %s245 = sphi 0, %s231
      %s249 = sphi 0, %s249
      %s251 = sphi 0, %s249
      %s252 = sphi 0, %s251
      %s266 = sphi 0, %s252
      %s272 = sphi 0, %s274
      %s275 = sphi 0, %s272
      %s276 = sphi 0, %s275
      %s292 = sphi 0, %s276
    $region4: #{tpu_custom_call.1} parent=1 // loop_header_branch
      %29 = sbr.rel (%p27) target = $region8
    $region5: #{tpu_custom_call.1} parent=1 // loop_body
      %s31 = ssub.s32 %s26, 1
      %s32 = ssub.s32 %s26, 2
      %s33 = sadd.s32 %s26, 1
      %s34 = ssub.s32 %s26, %s33
      %p35 = scmp.eq.s32.totalorder %s34, 0
      %s37 = sadd.s32 %s36, 1
      %s38 = scalar_select %p35, %s36, %s37
      %p41 = pneg %p35
      %p42 = scmp.eq.s32.totalorder %s26, 1
      %p43 = por %p41, %p42
      %p44 = scmp.ne.s32.totalorder %s36, %s39
      %p45 = scmp.eq.s32.totalorder %s26, 0
      %p46 = por %p44, %p45
      %p47 = scmp.ne.s32.totalorder %s36, %s39
      %p48 = scmp.eq.s32.totalorder %s31, 1
      %p49 = por %p47, %p48
      %p50 = scmp.ne.s32.totalorder %s39, %s40
      %p51 = scmp.eq.s32.totalorder %s31, 0
      %p52 = por %p50, %p51
      %p53 = scmp.ne.s32.totalorder %s39, %s40
      %p54 = scmp.eq.s32.totalorder %s32, 1
      %p55 = por %p53, %p54
      %p57 = scmp.ne.s32.totalorder %s40, %s56
      %p58 = scmp.eq.s32.totalorder %s32, 0
      %p59 = por %p57, %p58
      %s61 = sadd.s32 %s60, 1
      %p64 = scmp.eq.s32.totalorder %s26, 1
      %p65 = scmp.ne.s32.totalorder %s60, %s62
      %p66 = scmp.eq.s32.totalorder %s26, 0
      %p67 = por %p65, %p66
      %p68 = scmp.ne.s32.totalorder %s60, %s62
      %p69 = scmp.eq.s32.totalorder %s31, 1
      %p70 = por %p68, %p69
      %p71 = scmp.ne.s32.totalorder %s62, %s63
      %p72 = scmp.eq.s32.totalorder %s31, 0
      %p73 = por %p71, %p72
      %p74 = scmp.ne.s32.totalorder %s62, %s63
      %p75 = scmp.eq.s32.totalorder %s32, 1
      %p76 = por %p74, %p75
      %p78 = scmp.ne.s32.totalorder %s63, %s77
      %p79 = scmp.eq.s32.totalorder %s32, 0
      %p80 = por %p78, %p79
      %s82 = sadd.s32 %s81, 1
      %p85 = scmp.eq.s32.totalorder %s26, 1
      %p86 = scmp.ne.s32.totalorder %s81, %s83
      %p87 = scmp.eq.s32.totalorder %s26, 0
      %p88 = por %p86, %p87
      %p89 = scmp.ne.s32.totalorder %s81, %s83
      %p90 = scmp.eq.s32.totalorder %s31, 1
      %p91 = por %p89, %p90
      %p92 = scmp.ne.s32.totalorder %s83, %s84
      %p93 = scmp.eq.s32.totalorder %s31, 0
      %p94 = por %p92, %p93
      %p95 = scmp.ne.s32.totalorder %s83, %s84
      %p96 = scmp.eq.s32.totalorder %s32, 1
      %p97 = por %p95, %p96
      %p99 = scmp.ne.s32.totalorder %s84, %s98
      %p100 = scmp.eq.s32.totalorder %s32, 0
      %p101 = por %p99, %p100
      %s103 = sadd.s32 %s102, 1
      %p106 = scmp.eq.s32.totalorder %s26, 1
      %p107 = scmp.ne.s32.totalorder %s102, %s104
      %p108 = scmp.eq.s32.totalorder %s26, 0
      %p109 = por %p107, %p108
      %p110 = scmp.ne.s32.totalorder %s102, %s104
      %p111 = scmp.eq.s32.totalorder %s31, 1
      %p112 = por %p110, %p111
      %p113 = scmp.ne.s32.totalorder %s104, %s105
      %p114 = scmp.eq.s32.totalorder %s31, 0
      %p115 = por %p113, %p114
      %p116 = scmp.ne.s32.totalorder %s104, %s105
      %p117 = scmp.eq.s32.totalorder %s32, 1
      %p118 = por %p116, %p117
      %p120 = scmp.ne.s32.totalorder %s105, %s119
      %p121 = scmp.eq.s32.totalorder %s32, 0
      %p122 = por %p120, %p121
      %s124 = sadd.s32 %s123, 1
      %p127 = scmp.eq.s32.totalorder %s26, 1
      %p128 = scmp.ne.s32.totalorder %s123, %s125
      %p129 = scmp.eq.s32.totalorder %s26, 0
      %p130 = por %p128, %p129
      %p131 = scmp.ne.s32.totalorder %s123, %s125
      %p132 = scmp.eq.s32.totalorder %s31, 1
      %p133 = por %p131, %p132
      %p134 = scmp.ne.s32.totalorder %s125, %s126
      %p135 = scmp.eq.s32.totalorder %s31, 0
      %p136 = por %p134, %p135
      %p137 = scmp.ne.s32.totalorder %s125, %s126
      %p138 = scmp.eq.s32.totalorder %s32, 1
      %p139 = por %p137, %p138
      %p141 = scmp.ne.s32.totalorder %s126, %s140
      %p142 = scmp.eq.s32.totalorder %s32, 0
      %p143 = por %p141, %p142
      %s145 = sadd.s32 %s144, 1
      %p148 = scmp.eq.s32.totalorder %s26, 1
      %p149 = scmp.ne.s32.totalorder %s144, %s146
      %p150 = scmp.eq.s32.totalorder %s26, 0
      %p151 = por %p149, %p150
      %p152 = scmp.ne.s32.totalorder %s144, %s146
      %p153 = scmp.eq.s32.totalorder %s31, 1
      %p154 = por %p152, %p153
      %p155 = scmp.ne.s32.totalorder %s146, %s147
      %p156 = scmp.eq.s32.totalorder %s31, 0
      %p157 = por %p155, %p156
      %p158 = scmp.ne.s32.totalorder %s146, %s147
      %p159 = scmp.eq.s32.totalorder %s32, 1
      %p160 = por %p158, %p159
      %p162 = scmp.ne.s32.totalorder %s147, %s161
      %p163 = scmp.eq.s32.totalorder %s32, 0
      %p164 = por %p162, %p163
      %s166 = sadd.s32 %s165, 1
      %p169 = scmp.eq.s32.totalorder %s26, 1
      %p170 = scmp.ne.s32.totalorder %s165, %s167
      %p171 = scmp.eq.s32.totalorder %s26, 0
      %p172 = por %p170, %p171
      %p173 = scmp.ne.s32.totalorder %s165, %s167
      %p174 = scmp.eq.s32.totalorder %s31, 1
      %p175 = por %p173, %p174
      %p176 = scmp.ne.s32.totalorder %s167, %s168
      %p177 = scmp.eq.s32.totalorder %s31, 0
      %p178 = por %p176, %p177
      %p179 = scmp.ne.s32.totalorder %s167, %s168
      %p180 = scmp.eq.s32.totalorder %s32, 1
      %p181 = por %p179, %p180
      %p183 = scmp.ne.s32.totalorder %s168, %s182
      %p184 = scmp.eq.s32.totalorder %s32, 0
      %p185 = por %p183, %p184
      %s187 = sadd.s32 %s186, 1
      %p190 = scmp.eq.s32.totalorder %s26, 1
      %p191 = scmp.ne.s32.totalorder %s186, %s188
      %p192 = scmp.eq.s32.totalorder %s26, 0
      %p193 = por %p191, %p192
      %p194 = scmp.ne.s32.totalorder %s186, %s188
      %p195 = scmp.eq.s32.totalorder %s31, 1
      %p196 = por %p194, %p195
      %p197 = scmp.ne.s32.totalorder %s188, %s189
      %p198 = scmp.eq.s32.totalorder %s31, 0
      %p199 = por %p197, %p198
      %p200 = scmp.ne.s32.totalorder %s188, %s189
      %p201 = scmp.eq.s32.totalorder %s32, 1
      %p202 = por %p200, %p201
      %p204 = scmp.ne.s32.totalorder %s189, %s203
      %p205 = scmp.eq.s32.totalorder %s32, 0
      %p206 = por %p204, %p205
      %s208 = sadd.s32 %s207, 1
      %p211 = scmp.eq.s32.totalorder %s26, 1
      %p212 = scmp.ne.s32.totalorder %s207, %s209
      %p213 = scmp.eq.s32.totalorder %s26, 0
      %p214 = por %p212, %p213
      %p215 = scmp.ne.s32.totalorder %s207, %s209
      %p216 = scmp.eq.s32.totalorder %s31, 1
      %p217 = por %p215, %p216
      %p218 = scmp.ne.s32.totalorder %s209, %s210
      %p219 = scmp.eq.s32.totalorder %s31, 0
      %p220 = por %p218, %p219
      %p221 = scmp.ne.s32.totalorder %s209, %s210
      %p222 = scmp.eq.s32.totalorder %s32, 1
      %p223 = por %p221, %p222
      %p225 = scmp.ne.s32.totalorder %s210, %s224
      %p226 = scmp.eq.s32.totalorder %s32, 0
      %p227 = por %p225, %p226
      %s229 = sadd.s32 %s228, 1
      %p232 = scmp.eq.s32.totalorder %s26, 1
      %p233 = scmp.ne.s32.totalorder %s228, %s230
      %p234 = scmp.eq.s32.totalorder %s26, 0
      %p235 = por %p233, %p234
      %p236 = scmp.ne.s32.totalorder %s228, %s230
      %p237 = scmp.eq.s32.totalorder %s31, 1
      %p238 = por %p236, %p237
      %p239 = scmp.ne.s32.totalorder %s230, %s231
      %p240 = scmp.eq.s32.totalorder %s31, 0
      %p241 = por %p239, %p240
      %p242 = scmp.ne.s32.totalorder %s230, %s231
      %p243 = scmp.eq.s32.totalorder %s32, 1
      %p244 = por %p242, %p243
      %p246 = scmp.ne.s32.totalorder %s231, %s245
      %p247 = scmp.eq.s32.totalorder %s32, 0
      %p248 = por %p246, %p247
      %s250 = sadd.s32 %s249, 1
      %p253 = scmp.eq.s32.totalorder %s26, 1
      %p254 = scmp.ne.s32.totalorder %s249, %s251
      %p255 = scmp.eq.s32.totalorder %s26, 0
      %p256 = por %p254, %p255
      %p257 = scmp.ne.s32.totalorder %s249, %s251
      %p258 = scmp.eq.s32.totalorder %s31, 1
      %p259 = por %p257, %p258
      %p260 = scmp.ne.s32.totalorder %s251, %s252
      %p261 = scmp.eq.s32.totalorder %s31, 0
      %p262 = por %p260, %p261
      %p263 = scmp.ne.s32.totalorder %s251, %s252
      %p264 = scmp.eq.s32.totalorder %s32, 1
      %p265 = por %p263, %p264
      %p267 = scmp.ne.s32.totalorder %s252, %s266
      %p268 = scmp.eq.s32.totalorder %s32, 0
      %p269 = por %p267, %p268
      %s270 = ssub.s32 %s26, %s33
      %p271 = scmp.eq.s32.totalorder %s270, 0
      %s273 = sadd.s32 %s272, 1
      %s274 = scalar_select %p271, %s272, %s273
      %p277 = pneg %p271
      %p278 = scmp.eq.s32.totalorder %s26, 1
      %p279 = por %p277, %p278
      %p280 = scmp.ne.s32.totalorder %s272, %s275
      %p281 = scmp.eq.s32.totalorder %s26, 0
      %p282 = por %p280, %p281
      %p283 = scmp.ne.s32.totalorder %s272, %s275
      %p284 = scmp.eq.s32.totalorder %s31, 1
      %p285 = por %p283, %p284
      %p286 = scmp.ne.s32.totalorder %s275, %s276
      %p287 = scmp.eq.s32.totalorder %s31, 0
      %p288 = por %p286, %p287
      %p289 = scmp.ne.s32.totalorder %s275, %s276
      %p290 = scmp.eq.s32.totalorder %s32, 1
      %p291 = por %p289, %p290
      %p293 = scmp.ne.s32.totalorder %s276, %s292
      %p294 = scmp.eq.s32.totalorder %s32, 0
      %p295 = por %p293, %p294
      %p296 = scmp.le.s32.totalorder 1, %s26
      %p297 = scmp.lt.s32.totalorder %s26, 3
      %p298 = pnand %p296, %p297
      %p299 = pneg %p298
      // Predicated region
      $region9: #{tpu_custom_call.1} parent=5 // pred_check
        _
      $region10: #{tpu_custom_call.1} parent=5 // pred_check_branch
        %301 = sbr.rel (%p298) target = $region12
      $region11: #{tpu_custom_call.1} parent=5 // pred_region
        %s302 = ssub.s32 %s26, 1
        // Predicated region
        $region13: #{tpu_custom_call.1} parent=11 // pred_check
          %p303 = pneg %p73
        $region14: #{tpu_custom_call.1} parent=11 // pred_check_branch
          %305 = sbr.rel (%p303) target = $region16
        $region15: #{tpu_custom_call.1} parent=11 // pred_region
          %s307 = ssub.s32 3072, 3072
          %308 = vsyncadd [#allocation6], %s307
          %s309 = sshll.u32 [#allocation5], 4
          %s310 = int_to_ptr.vmem [resolvable:$true] %s309
          %315 = dma.hbm_to_vmem [thread:$0]  %s1, 3072, %s310, [#allocation6], 128, 128, 8
        $region16: #{tpu_custom_call.1} parent=11 // pred_fallthru
          _
        // Predicated region
        $region17: #{tpu_custom_call.1} parent=11 // pred_check
          %p316 = pneg %p94
        $region18: #{tpu_custom_call.1} parent=11 // pred_check_branch
          %318 = sbr.rel (%p316) target = $region20
        $region19: #{tpu_custom_call.1} parent=11 // pred_region
          %s320 = ssub.s32 6144, 6144
          %321 = vsyncadd [#allocation6], %s320
          %s322 = sshll.u32 [#allocation7], 4
          %s323 = int_to_ptr.vmem [resolvable:$true] %s322
          %328 = dma.hbm_to_vmem [thread:$0]  %s2, 6144, %s323, [#allocation6], 128, 128, 8
        $region20: #{tpu_custom_call.1} parent=11 // pred_fallthru
          _
        // Predicated region
        $region21: #{tpu_custom_call.1} parent=11 // pred_check
          %p329 = pneg %p115
        $region22: #{tpu_custom_call.1} parent=11 // pred_check_branch
          %331 = sbr.rel (%p329) target = $region24
        $region23: #{tpu_custom_call.1} parent=11 // pred_region
          _
        $region24: #{tpu_custom_call.1} parent=11 // pred_fallthru
          _
        // Predicated region
        $region25: #{tpu_custom_call.1} parent=11 // pred_check
          %p332 = pneg %p136
        $region26: #{tpu_custom_call.1} parent=11 // pred_check_branch
          %334 = sbr.rel (%p332) target = $region28
        $region27: #{tpu_custom_call.1} parent=11 // pred_region
          _
        $region28: #{tpu_custom_call.1} parent=11 // pred_fallthru
          _
        // Predicated region
        $region29: #{tpu_custom_call.1} parent=11 // pred_check
          %p335 = pneg %p157
        $region30: #{tpu_custom_call.1} parent=11 // pred_check_branch
          %337 = sbr.rel (%p335) target = $region32
        $region31: #{tpu_custom_call.1} parent=11 // pred_region
          %s339 = ssub.s32 16, 16
          %340 = vsyncadd [#allocation9], %s339
          %s342 = sshll.u32 [#allocation8], 4
          %s343 = int_to_ptr.vmem [resolvable:$true] %s342
          %345 = dma.hbm_to_vmem [thread:$0]  %s5, 16, %s343, [#allocation9]
        $region32: #{tpu_custom_call.1} parent=11 // pred_fallthru
          _
        // Predicated region
        $region33: #{tpu_custom_call.1} parent=11 // pred_check
          %p346 = pneg %p178
        $region34: #{tpu_custom_call.1} parent=11 // pred_check_branch
          %348 = sbr.rel (%p346) target = $region36
        $region35: #{tpu_custom_call.1} parent=11 // pred_region
          %s350 = ssub.s32 16, 16
          %351 = vsyncadd [#allocation9], %s350
          %s353 = sshll.u32 [#allocation10], 4
          %s354 = int_to_ptr.vmem [resolvable:$true] %s353
          %356 = dma.hbm_to_vmem [thread:$0]  %s6, 16, %s354, [#allocation9]
        $region36: #{tpu_custom_call.1} parent=11 // pred_fallthru
          _
        // Predicated region
        $region37: #{tpu_custom_call.1} parent=11 // pred_check
          %p357 = pneg %p199
        $region38: #{tpu_custom_call.1} parent=11 // pred_check_branch
          %359 = sbr.rel (%p357) target = $region40
        $region39: #{tpu_custom_call.1} parent=11 // pred_region
          %s361 = ssub.s32 16, 16
          %362 = vsyncadd [#allocation12], %s361
          %s364 = sshll.u32 [#allocation11], 4
          %s365 = int_to_ptr.vmem [resolvable:$true] %s364
          %367 = dma.hbm_to_vmem [thread:$0]  %s7, 16, %s365, [#allocation12]
        $region40: #{tpu_custom_call.1} parent=11 // pred_fallthru
          _
        // Predicated region
        $region41: #{tpu_custom_call.1} parent=11 // pred_check
          %p368 = pneg %p220
        $region42: #{tpu_custom_call.1} parent=11 // pred_check_branch
          %370 = sbr.rel (%p368) target = $region44
        $region43: #{tpu_custom_call.1} parent=11 // pred_region
          %s372 = ssub.s32 16, 16
          %373 = vsyncadd [#allocation12], %s372
          %s375 = sshll.u32 [#allocation13], 4
          %s376 = int_to_ptr.vmem [resolvable:$true] %s375
          %378 = dma.hbm_to_vmem [thread:$0]  %s8, 16, %s376, [#allocation12]
        $region44: #{tpu_custom_call.1} parent=11 // pred_fallthru
          _
        // Predicated region
        $region45: #{tpu_custom_call.1} parent=11 // pred_check
          %p379 = pneg %p241
        $region46: #{tpu_custom_call.1} parent=11 // pred_check_branch
          %381 = sbr.rel (%p379) target = $region48
        $region47: #{tpu_custom_call.1} parent=11 // pred_region
          _
        $region48: #{tpu_custom_call.1} parent=11 // pred_fallthru
          _
        // Predicated region
        $region49: #{tpu_custom_call.1} parent=11 // pred_check
          %p382 = pneg %p262
        $region50: #{tpu_custom_call.1} parent=11 // pred_check_branch
          %384 = sbr.rel (%p382) target = $region52
        $region51: #{tpu_custom_call.1} parent=11 // pred_region
          _
        $region52: #{tpu_custom_call.1} parent=11 // pred_fallthru
          _
      $region12: #{tpu_custom_call.1} parent=5 // pred_fallthru
        _
      %p385 = scmp.lt.s32.totalorder %s26, 2
      // Predicated region
      $region53: #{tpu_custom_call.1} parent=5 // pred_check
        %p386 = pneg %p385
      $region54: #{tpu_custom_call.1} parent=5 // pred_check_branch
        %388 = sbr.rel (%p386) target = $region56
      $region55: #{tpu_custom_call.1} parent=5 // pred_region
        // Predicated region
        $region57: #{tpu_custom_call.1} parent=55 // pred_check
          %p389 = pneg %p46
        $region58: #{tpu_custom_call.1} parent=55 // pred_check_branch
          %391 = sbr.rel (%p389) target = $region60
        $region59: #{tpu_custom_call.1} parent=55 // pred_region
          %s392 = sand.u32 %s36, 1
          %s393 = scalar_lea.sflag [#allocation3], %s392
          %s394 = sand.u32 %s36, 1
          %s395 = smul.addr %s394, 16
          %s396 = scalar_lea.vmem [#allocation2], %s395
          %s398 = ssub.s32 256, 256
          %399 = vsyncadd %s393, %s398
          %s400 = smul.addr %s26, 2
          %s401 = smul.addr %s400, 128
          %s402 = scalar_lea.hbm %s0, %s401
          %s404 = sshll.u32 %s396, 4
          %s405 = int_to_ptr.vmem [resolvable:$true] %s404
          %407 = dma.hbm_to_vmem [thread:$0]  %s402, 256, %s405, %s393
        $region60: #{tpu_custom_call.1} parent=55 // pred_fallthru
          _
      $region56: #{tpu_custom_call.1} parent=5 // pred_fallthru
        _
      %p408 = scmp.le.s32.totalorder 1, %s26
      %p409 = scmp.lt.s32.totalorder %s26, 3
      %p410 = pnand %p408, %p409
      %p411 = pneg %p410
      // Predicated region
      $region61: #{tpu_custom_call.1} parent=5 // pred_check
        _
      $region62: #{tpu_custom_call.1} parent=5 // pred_check_branch
        %413 = sbr.rel (%p410) target = $region64
      $region63: #{tpu_custom_call.1} parent=5 // pred_region
        %s414 = ssub.s32 %s26, 1
        %s415 = sand.u32 %s39, 1
        %s416 = scalar_lea.sflag [#allocation3], %s415
        %s417 = sand.u32 %s39, 1
        %s418 = smul.addr %s417, 16
        %s419 = scalar_lea.vmem [#allocation2], %s418
        // Predicated region
        $region65: #{tpu_custom_call.1} parent=63 // pred_check
          %p420 = pneg %p52
        $region66: #{tpu_custom_call.1} parent=63 // pred_check_branch
          %422 = sbr.rel (%p420) target = $region68
        $region67: #{tpu_custom_call.1} parent=63 // pred_region
          %423 = dma.done %s416, 256
        $region68: #{tpu_custom_call.1} parent=63 // pred_fallthru
          _
        // Predicated region
        $region69: #{tpu_custom_call.1} parent=63 // pred_check
          %p424 = pneg %p73
        $region70: #{tpu_custom_call.1} parent=63 // pred_check_branch
          %426 = sbr.rel (%p424) target = $region72
        $region71: #{tpu_custom_call.1} parent=63 // pred_region
          %427 = dma.done [#allocation6], 3072
        $region72: #{tpu_custom_call.1} parent=63 // pred_fallthru
          _
        // Predicated region
        $region73: #{tpu_custom_call.1} parent=63 // pred_check
          %p428 = pneg %p94
        $region74: #{tpu_custom_call.1} parent=63 // pred_check_branch
          %430 = sbr.rel (%p428) target = $region76
        $region75: #{tpu_custom_call.1} parent=63 // pred_region
          %431 = dma.done [#allocation6], 6144
        $region76: #{tpu_custom_call.1} parent=63 // pred_fallthru
          _
        // Predicated region
        $region77: #{tpu_custom_call.1} parent=63 // pred_check
          %p432 = pneg %p157
        $region78: #{tpu_custom_call.1} parent=63 // pred_check_branch
          %434 = sbr.rel (%p432) target = $region80
        $region79: #{tpu_custom_call.1} parent=63 // pred_region
          %435 = dma.done [#allocation9], 16
        $region80: #{tpu_custom_call.1} parent=63 // pred_fallthru
          _
        // Predicated region
        $region81: #{tpu_custom_call.1} parent=63 // pred_check
          %p436 = pneg %p178
        $region82: #{tpu_custom_call.1} parent=63 // pred_check_branch
          %438 = sbr.rel (%p436) target = $region84
        $region83: #{tpu_custom_call.1} parent=63 // pred_region
          %439 = dma.done [#allocation9], 16
        $region84: #{tpu_custom_call.1} parent=63 // pred_fallthru
          _
        // Predicated region
        $region85: #{tpu_custom_call.1} parent=63 // pred_check
          %p440 = pneg %p199
        $region86: #{tpu_custom_call.1} parent=63 // pred_check_branch
          %442 = sbr.rel (%p440) target = $region88
        $region87: #{tpu_custom_call.1} parent=63 // pred_region
          %443 = dma.done [#allocation12], 16
        $region88: #{tpu_custom_call.1} parent=63 // pred_fallthru
          _
        // Predicated region
        $region89: #{tpu_custom_call.1} parent=63 // pred_check
          %p444 = pneg %p220
        $region90: #{tpu_custom_call.1} parent=63 // pred_check_branch
          %446 = sbr.rel (%p444) target = $region92
        $region91: #{tpu_custom_call.1} parent=63 // pred_region
          %447 = dma.done [#allocation12], 16
        $region92: #{tpu_custom_call.1} parent=63 // pred_fallthru
          _
        %s448 = sand.u32 %s39, 1
        %s449 = scalar_lea.sflag [#allocation3], %s448
        %s450 = sand.u32 %s39, 1
        %s451 = smul.addr %s450, 16
        %s452 = scalar_lea.vmem [#allocation2], %s451
        %p453 = pneg %p52
        %p454 = pneg %p49
        %p455 = pneg %p73
        %p456 = pneg %p70
        %p457 = pneg %p94
        %p458 = pneg %p91
        %p459 = pneg %p115
        %p460 = pneg %p112
        %p461 = pneg %p136
        %p462 = pneg %p133
        %p463 = pneg %p157
        %p464 = pneg %p154
        %p465 = pneg %p178
        %p466 = pneg %p175
        %p467 = pneg %p199
        %p468 = pneg %p196
        %p469 = pneg %p220
        %p470 = pneg %p217
        %p471 = pneg %p241
        %p472 = pneg %p238
        %p473 = pneg %p262
        %p474 = pneg %p259
        %p475 = pneg %p288
        %p476 = pneg %p285
        %s477 = sand.u32 %s275, 1
        %s478 = scalar_lea.sflag [#allocation4], %s477
        %s479 = sand.u32 %s275, 1
        %s480 = smul.addr %s479, 8
        %s481 = scalar_lea.vmem [#allocation14], %s480
        %v482 = vlaneseq
        %v483 = vshrl.u32 %v482, 7
        %vm484 = vcmp.lt.s32.totalorder %v483, 0
        %v485 = vsub.s32 0, %v483
        %v486 = vsel %vm484, %v485, %v483
        %v487 = vshrl.u32 %v486, 3
        %v488 = vand.u32 %v486, 7
        %v489 = vsub.s32 0, %v488
        %v490 = vsel %vm484, %v489, %v488
        %vm491 = vcmp.ne.s32.totalorder %v490, 0
        %vm492 = vcmp.lt.s32.totalorder %v490, 0
        %vm493 = vmand %vm492, %vm491
        %v494 = vadd.s32 %v490, 8
        %v495 = vsel %vm493, %v494, %v490
        %v496 = vld [vmem:[%s419] sm:$0xff]
        %v497 = vld [vmem:[%s419 + $0x8] sm:$0xff]
        %v498 = vld [vmem:[#allocation5] sm:$0xff]
        %v499 = vld [vmem:[#allocation5 + $0x8] sm:$0xff]
        %v500 = vld [vmem:[#allocation5 + $0x10] sm:$0xff]
        %v501 = vld [vmem:[#allocation5 + $0x18] sm:$0xff]
        %v502 = vld [vmem:[#allocation5 + $0x20] sm:$0xff]
        %v503 = vld [vmem:[#allocation5 + $0x28] sm:$0xff]
        %v504 = vld [vmem:[#allocation5 + $0x30] sm:$0xff]
        %v505 = vld [vmem:[#allocation5 + $0x38] sm:$0xff]
        %v506 = vld [vmem:[#allocation5 + $0x40] sm:$0xff]
        %v507 = vld [vmem:[#allocation5 + $0x48] sm:$0xff]
        %v508 = vld [vmem:[#allocation5 + $0x50] sm:$0xff]
        %v509 = vld [vmem:[#allocation5 + $0x58] sm:$0xff]
        %v510 = vld [vmem:[#allocation5 + $0x60] sm:$0xff]
        %v511 = vld [vmem:[#allocation5 + $0x68] sm:$0xff]
        %v512 = vld [vmem:[#allocation5 + $0x70] sm:$0xff]
        %v513 = vld [vmem:[#allocation5 + $0x78] sm:$0xff]
        %v514 = vld [vmem:[#allocation5 + $0x80] sm:$0xff]
        %v515 = vld [vmem:[#allocation5 + $0x88] sm:$0xff]
        %v516 = vld [vmem:[#allocation5 + $0x90] sm:$0xff]
        %v517 = vld [vmem:[#allocation5 + $0x98] sm:$0xff]
        %v518 = vld [vmem:[#allocation5 + $0xa0] sm:$0xff]
        %v519 = vld [vmem:[#allocation5 + $0xa8] sm:$0xff]
        %v520 = vld [vmem:[#allocation5 + $0xb0] sm:$0xff]
        %v521 = vld [vmem:[#allocation5 + $0xb8] sm:$0xff]
        %v522 = vld [vmem:[%s3] sm:$0x1]
        %v524 = vlaneseq
        %v525 = vshrl.u32 %v524, 7
        %v526 = vsub.s32 0, %v525
        %v527 = vrot.slane %v522, %v526
        %vm529 = vcmask 523264
        %v531 = vsel %vm529, %v497, 0
        %533 = vmatprep.subr.mxu0 0.0
        %534 = vmatpush1.msra.mxu0 %v498
        %535 = vmatprep.subr.mxu0 0.0
        %536 = vmatpush1.msra.mxu0 %v499
        %537 = vmatprep.subr.mxu0 0.0
        %538 = vmatpush1.msra.mxu0 %v500
        %539 = vmatprep.subr.mxu0 0.0
        %540 = vmatpush1.msra.mxu0 %v501
        %541 = vmatprep.subr.mxu0 0.0
        %542 = vmatpush1.msra.mxu0 %v502
        %543 = vmatprep.subr.mxu0 0.0
        %544 = vmatpush1.msra.mxu0 %v503
        %545 = vmatprep.subr.mxu0 0.0
        %546 = vmatpush1.msra.mxu0 %v504
        %547 = vmatprep.subr.mxu0 0.0
        %548 = vmatpush1.msra.mxu0 %v505
        %549 = vmatprep.subr.mxu0 0.0
        %550 = vmatpush1.msra.mxu0 %v506
        %551 = vmatprep.subr.mxu0 0.0
        %552 = vmatpush1.msra.mxu0 %v507
        %553 = vmatprep.subr.mxu0 0.0
        %554 = vmatpush1.msra.mxu0 %v508
        %555 = vmatprep.subr.mxu0 0.0
        %556 = vmatpush1.msra.mxu0 %v509
        %557 = vmatprep.subr.mxu0 0.0
        %558 = vmatpush1.msra.mxu0 %v510
        %559 = vmatprep.subr.mxu0 0.0
        %560 = vmatpush1.msra.mxu0 %v511
        %561 = vmatprep.subr.mxu0 0.0
        %562 = vmatpush1.msra.mxu0 %v512
        %563 = vmatprep.subr.mxu0 0.0
        %564 = vmatpush1.msra.mxu0 %v513
        %565 = vmatprep.subr.mxu0 0.0
        %566 = vmatpush1.msra.mxu0 %v514
        %567 = vmatprep.subr.mxu0 0.0
        %568 = vmatpush1.msra.mxu0 %v515
        %569 = vmatprep.subr.mxu0 0.0
        %570 = vmatpush1.msra.mxu0 %v516
        %571 = vmatprep.subr.mxu0 0.0
        %572 = vmatpush1.msra.mxu0 %v517
        %573 = vmatprep.subr.mxu0 0.0
        %574 = vmatpush1.msra.mxu0 %v518
        %575 = vmatprep.subr.mxu0 0.0
        %576 = vmatpush1.msra.mxu0 %v519
        %577 = vmatprep.subr.mxu0 0.0
        %578 = vmatpush1.msra.mxu0 %v520
        %579 = vmatprep.subr.mxu0 0.0
        %580 = vmatpush1.msra.mxu0 %v521
        %581 = vmatprep.subr.mxu0 0.0
        %582 = vmatpush1.msra.mxu0 0.0
        %583 = vmatprep.subr.mxu0 0.0
        %584 = vmatpush1.msra.mxu0 0.0
        %585 = vmatprep.subr.mxu0 0.0
        %586 = vmatpush1.msra.mxu0 0.0
        %587 = vmatprep.subr.mxu0 0.0
        %588 = vmatpush1.msra.mxu0 0.0
        %589 = vmatprep.subr.mxu0 0.0
        %590 = vmatpush1.msra.mxu0 0.0
        %591 = vmatprep.subr.mxu0 0.0
        %592 = vmatpush1.msra.mxu0 0.0
        %593 = vmatprep.subr.mxu0 0.0
        %594 = vmatpush1.msra.mxu0 0.0
        %595 = vmatprep.subr.mxu0 0.0
        %596 = vmatpush1.msra.mxu0 0.0
        %597 = vmatprep.mubr.f32.mxu0 %v531
        %598 = vmatmul.mubr.f32.gmra.mrb[0].mxu0 %v496
        %v599 = vpop.f32.mrb[0].mxu0
        %v600 = vadd.f32 %v527, %v599
        %v601 = vpop.f32.mrb[0].mxu0
        %602 = vdwg.mxu0
        %v603 = vld [vmem:[%s4] sm:$0x1]
        %v604 = vld [vmem:[#allocation8] sm:$0x1]
        %v605 = vld [vmem:[%s9] sm:$0xff]
        %v606 = vld [vmem:[%s9 + $0x8] sm:$0xff]
        %v607 = vmul.f32 %v600, %v600
        %v608 = vrot.slane %v600, 4
        %v609 = vadd.f32 %v600, %v608
        %v610 = vrot.slane %v609, 2
        %v611 = vadd.f32 %v609, %v610
        %v612 = vrot.slane %v611, 1
        %v613 = vadd.f32 %v611, %v612
        %v614 = vrot.slane %v607, 4
        %v615 = vadd.f32 %v607, %v614
        %v616 = vrot.slane %v615, 2
        %v617 = vadd.f32 %v615, %v616
        %v618 = vrot.slane %v617, 1
        %v619 = vadd.f32 %v617, %v618
        %620 = vmatprep.subr.mxu0 %v606
        %621 = vmatpush1.xpose.msra.mxu0 %v605
        %622 = vmatprep.subr.mxu0 0.0
        %623 = vmatpush1.xpose.msra.mxu0 0.0
        %624 = vmatprep.subr.mxu0 0.0
        %625 = vmatpush1.xpose.msra.mxu0 0.0
        %626 = vmatprep.subr.mxu0 0.0
        %627 = vmatpush1.xpose.msra.mxu0 0.0
        %628 = vmatprep.subr.mxu0 0.0
        %629 = vmatpush1.xpose.msra.mxu0 0.0
        %630 = vmatprep.subr.mxu0 0.0
        %631 = vmatpush1.xpose.msra.mxu0 0.0
        %632 = vmatprep.subr.mxu0 0.0
        %633 = vmatpush1.xpose.msra.mxu0 0.0
        %634 = vmatprep.subr.mxu0 0.0
        %635 = vmatpush1.xpose.msra.mxu0 0.0
        %636 = vmatprep.subr.mxu0 0.0
        %637 = vmatpush1.xpose.msra.mxu0 0.0
        %638 = vmatprep.subr.mxu0 0.0
        %639 = vmatpush1.xpose.msra.mxu0 0.0
        %640 = vmatprep.subr.mxu0 0.0
        %641 = vmatpush1.xpose.msra.mxu0 0.0
        %642 = vmatprep.subr.mxu0 0.0
        %643 = vmatpush1.xpose.msra.mxu0 0.0
        %644 = vmatprep.subr.mxu0 0.0
        %645 = vmatpush1.xpose.msra.mxu0 0.0
        %646 = vmatprep.subr.mxu0 0.0
        %647 = vmatpush1.xpose.msra.mxu0 0.0
        %648 = vmatprep.subr.mxu0 0.0
        %649 = vmatpush1.xpose.msra.mxu0 0.0
        %650 = vmatprep.subr.mxu0 0.0
        %651 = vmatpush1.xpose.msra.mxu0 0.0
        %652 = vmatprep.subr.mxu0 0.0
        %653 = vmatpush1.xpose.msra.mxu0 0.0
        %654 = vmatprep.subr.mxu0 0.0
        %655 = vmatpush1.xpose.msra.mxu0 0.0
        %656 = vmatprep.subr.mxu0 0.0
        %657 = vmatpush1.xpose.msra.mxu0 0.0
        %658 = vmatprep.subr.mxu0 0.0
        %659 = vmatpush1.xpose.msra.mxu0 0.0
        %660 = vmatprep.subr.mxu0 0.0
        %661 = vmatpush1.xpose.msra.mxu0 0.0
        %662 = vmatprep.subr.mxu0 0.0
        %663 = vmatpush1.xpose.msra.mxu0 0.0
        %664 = vmatprep.subr.mxu0 0.0
        %665 = vmatpush1.xpose.msra.mxu0 0.0
        %666 = vmatprep.subr.mxu0 0.0
        %667 = vmatpush1.xpose.msra.mxu0 0.0
        %668 = vmatprep.subr.mxu0 0.0
        %669 = vmatpush1.xpose.msra.mxu0 0.0
        %670 = vmatprep.subr.mxu0 0.0
        %671 = vmatpush1.xpose.msra.mxu0 0.0
        %672 = vmatprep.subr.mxu0 0.0
        %673 = vmatpush1.xpose.msra.mxu0 0.0
        %674 = vmatprep.subr.mxu0 0.0
        %675 = vmatpush1.xpose.msra.mxu0 0.0
        %676 = vmatprep.subr.mxu0 0.0
        %677 = vmatpush1.xpose.msra.mxu0 0.0
        %678 = vmatprep.subr.mxu0 0.0
        %679 = vmatpush1.xpose.msra.mxu0 0.0
        %680 = vmatprep.subr.mxu0 0.0
        %681 = vmatpush1.xpose.msra.mxu0 0.0
        %682 = vmatprep.subr.mxu0 0.0
        %683 = vmatpush1.xpose.msra.mxu0 0.0
        %684 = vmatprep.mubr.f32.mxu0 %v619
        %685 = vmatmul.mubr.f32.gmra.mrb[0].mxu0 %v613
        %v686 = vpop.f32.mrb[0].mxu0
        %v687 = vadd.f32 0.0, %v686
        %v688 = vpop.f32.mrb[0].mxu0
        %689 = vdwg.mxu0
        %v690 = vmul.f32 %v687, 0.0078125
        %v691 = vmul.f32 %v690, %v690
        %693 = vrot.lane.b32.xlu0 %v691, 4
        %v694 = vpop.permute.xlu0 %693
        %v696 = vsub.f32 %v690, %v694
        %v697 = vmax.f32 %v696, 0.0
        %v698 = vadd.f32 %v697, 1e-05
        %v699 = vrsqrt.pop %v698
        %vm700 = vcmask 31744
        %v702 = vsel %vm700, %v690, 0
        %vm704 = vcmask 1043456
        %v706 = vsel %vm704, %v605, 0
        %708 = vmatprep.subr.mxu0 0.0
        %709 = vmatpush1.msra.mxu0 %v706
        %710 = vmatprep.subr.mxu0 0.0
        %711 = vmatpush1.msra.mxu0 0.0
        %712 = vmatprep.subr.mxu0 0.0
        %713 = vmatpush1.msra.mxu0 0.0
        %714 = vmatprep.subr.mxu0 0.0
        %715 = vmatpush1.msra.mxu0 0.0
        %716 = vmatprep.subr.mxu0 0.0
        %717 = vmatpush1.msra.mxu0 0.0
        %718 = vmatprep.subr.mxu0 0.0
        %719 = vmatpush1.msra.mxu0 0.0
        %720 = vmatprep.subr.mxu0 0.0
        %721 = vmatpush1.msra.mxu0 0.0
        %722 = vmatprep.subr.mxu0 0.0
        %723 = vmatpush1.msra.mxu0 0.0
        %724 = vmatprep.subr.mxu0 0.0
        %725 = vmatpush1.msra.mxu0 0.0
        %726 = vmatprep.subr.mxu0 0.0
        %727 = vmatpush1.msra.mxu0 0.0
        %728 = vmatprep.subr.mxu0 0.0
        %729 = vmatpush1.msra.mxu0 0.0
        %730 = vmatprep.subr.mxu0 0.0
        %731 = vmatpush1.msra.mxu0 0.0
        %732 = vmatprep.subr.mxu0 0.0
        %733 = vmatpush1.msra.mxu0 0.0
        %734 = vmatprep.subr.mxu0 0.0
        %735 = vmatpush1.msra.mxu0 0.0
        %736 = vmatprep.subr.mxu0 0.0
        %737 = vmatpush1.msra.mxu0 0.0
        %738 = vmatprep.subr.mxu0 0.0
        %739 = vmatpush1.msra.mxu0 0.0
        %740 = vmatprep.subr.mxu0 0.0
        %741 = vmatpush1.msra.mxu0 0.0
        %742 = vmatprep.subr.mxu0 0.0
        %743 = vmatpush1.msra.mxu0 0.0
        %744 = vmatprep.subr.mxu0 0.0
        %745 = vmatpush1.msra.mxu0 0.0
        %746 = vmatprep.subr.mxu0 0.0
        %747 = vmatpush1.msra.mxu0 0.0
        %748 = vmatprep.subr.mxu0 0.0
        %749 = vmatpush1.msra.mxu0 0.0
        %750 = vmatprep.subr.mxu0 0.0
        %751 = vmatpush1.msra.mxu0 0.0
        %752 = vmatprep.subr.mxu0 0.0
        %753 = vmatpush1.msra.mxu0 0.0
        %754 = vmatprep.subr.mxu0 0.0
        %755 = vmatpush1.msra.mxu0 0.0
        %756 = vmatprep.subr.mxu0 0.0
        %757 = vmatpush1.msra.mxu0 0.0
        %758 = vmatprep.subr.mxu0 0.0
        %759 = vmatpush1.msra.mxu0 0.0
        %760 = vmatprep.subr.mxu0 0.0
        %761 = vmatpush1.msra.mxu0 0.0
        %762 = vmatprep.subr.mxu0 0.0
        %763 = vmatpush1.msra.mxu0 0.0
        %764 = vmatprep.subr.mxu0 0.0
        %765 = vmatpush1.msra.mxu0 0.0
        %766 = vmatprep.subr.mxu0 0.0
        %767 = vmatpush1.msra.mxu0 0.0
        %768 = vmatprep.subr.mxu0 0.0
        %769 = vmatpush1.msra.mxu0 0.0
        %770 = vmatprep.subr.mxu0 0.0
        %771 = vmatpush1.msra.mxu0 0.0
        %772 = vmatprep.mubr.f32.mxu0 0.0
        %773 = vmatmul.mubr.f32.gmra.mrb[0].mxu0 %v702
        %v774 = vpop.f32.mrb[0].mxu0
        %v775 = vadd.f32 0.0, %v774
        %v776 = vpop.f32.mrb[0].mxu0
        %777 = vdwg.mxu0
        %779 = vrot.lane.b32.xlu0 %v699, 124
        %v780 = vpop.permute.xlu0 %779
        %v781 = vsel %vm700, %v780, 0
        %783 = vmatprep.subr.mxu0 0.0
        %784 = vmatpush1.msra.mxu0 %v706
        %785 = vmatprep.subr.mxu0 0.0
        %786 = vmatpush1.msra.mxu0 0.0
        %787 = vmatprep.subr.mxu0 0.0
        %788 = vmatpush1.msra.mxu0 0.0
        %789 = vmatprep.subr.mxu0 0.0
        %790 = vmatpush1.msra.mxu0 0.0
        %791 = vmatprep.subr.mxu0 0.0
        %792 = vmatpush1.msra.mxu0 0.0
        %793 = vmatprep.subr.mxu0 0.0
        %794 = vmatpush1.msra.mxu0 0.0
        %795 = vmatprep.subr.mxu0 0.0
        %796 = vmatpush1.msra.mxu0 0.0
        %797 = vmatprep.subr.mxu0 0.0
        %798 = vmatpush1.msra.mxu0 0.0
        %799 = vmatprep.subr.mxu0 0.0
        %800 = vmatpush1.msra.mxu0 0.0
        %801 = vmatprep.subr.mxu0 0.0
        %802 = vmatpush1.msra.mxu0 0.0
        %803 = vmatprep.subr.mxu0 0.0
        %804 = vmatpush1.msra.mxu0 0.0
        %805 = vmatprep.subr.mxu0 0.0
        %806 = vmatpush1.msra.mxu0 0.0
        %807 = vmatprep.subr.mxu0 0.0
        %808 = vmatpush1.msra.mxu0 0.0
        %809 = vmatprep.subr.mxu0 0.0
        %810 = vmatpush1.msra.mxu0 0.0
        %811 = vmatprep.subr.mxu0 0.0
        %812 = vmatpush1.msra.mxu0 0.0
        %813 = vmatprep.subr.mxu0 0.0
        %814 = vmatpush1.msra.mxu0 0.0
        %815 = vmatprep.subr.mxu0 0.0
        %816 = vmatpush1.msra.mxu0 0.0
        %817 = vmatprep.subr.mxu0 0.0
        %818 = vmatpush1.msra.mxu0 0.0
        %819 = vmatprep.subr.mxu0 0.0
        %820 = vmatpush1.msra.mxu0 0.0
        %821 = vmatprep.subr.mxu0 0.0
        %822 = vmatpush1.msra.mxu0 0.0
        %823 = vmatprep.subr.mxu0 0.0
        %824 = vmatpush1.msra.mxu0 0.0
        %825 = vmatprep.subr.mxu0 0.0
        %826 = vmatpush1.msra.mxu0 0.0
        %827 = vmatprep.subr.mxu0 0.0
        %828 = vmatpush1.msra.mxu0 0.0
        %829 = vmatprep.subr.mxu0 0.0
        %830 = vmatpush1.msra.mxu0 0.0
        %831 = vmatprep.subr.mxu0 0.0
        %832 = vmatpush1.msra.mxu0 0.0
        %833 = vmatprep.subr.mxu0 0.0
        %834 = vmatpush1.msra.mxu0 0.0
        %835 = vmatprep.subr.mxu0 0.0
        %836 = vmatpush1.msra.mxu0 0.0
        %837 = vmatprep.subr.mxu0 0.0
        %838 = vmatpush1.msra.mxu0 0.0
        %839 = vmatprep.subr.mxu0 0.0
        %840 = vmatpush1.msra.mxu0 0.0
        %841 = vmatprep.subr.mxu0 0.0
        %842 = vmatpush1.msra.mxu0 0.0
        %843 = vmatprep.subr.mxu0 0.0
        %844 = vmatpush1.msra.mxu0 0.0
        %845 = vmatprep.subr.mxu0 0.0
        %846 = vmatpush1.msra.mxu0 0.0
        %847 = vmatprep.mubr.f32.mxu0 0.0
        %848 = vmatmul.mubr.f32.gmra.mrb[0].mxu0 %v781
        %v849 = vpop.f32.mrb[0].mxu0
        %v850 = vadd.f32 0.0, %v849
        %v851 = vpop.f32.mrb[0].mxu0
        %852 = vdwg.mxu0
        %v853 = vmul.f32 %v603, %v850
        %v854 = vmul.f32 %v775, %v853
        %v855 = vsub.f32 %v604, %v854
        %v857 = vlaneseq
        %v858 = vshrl.u32 %v857, 7
        %v859 = vsub.s32 0, %v858
        %v860 = vrot.slane %v853, %v859
        %v862 = vmul.f32 %v600, %v860
        %v864 = vlaneseq
        %v865 = vshrl.u32 %v864, 7
        %v866 = vsub.s32 0, %v865
        %v867 = vrot.slane %v855, %v866
        %v869 = vadd.f32 %v862, %v867
        %v870 = vmax.f32 %v869, 0.0
        %vm871 = vcmp.eq.s32.totalorder %v495, 0
        %v872 = vrot.slane %v870, 7
        %v873 = vsel %vm871, 1, 0
        %vm874 = vcmp.eq.s32.totalorder %v873, 1
        %v875 = vsel %vm874, 0.0, %v872
        %vm876 = vcmp.eq.s32.totalorder %v495, 7
        %v877 = vrot.slane %v870, 1
        %v878 = vsel %vm876, 1, 0
        %vm879 = vcmp.eq.s32.totalorder %v878, 1
        %v880 = vsel %vm879, 0.0, %v877
        %v881 = vld [vmem:[#allocation7] sm:$0xff]
        %v882 = vld [vmem:[#allocation7 + $0x8] sm:$0xff]
        %v883 = vld [vmem:[#allocation7 + $0x10] sm:$0xff]
        %v884 = vld [vmem:[#allocation7 + $0x18] sm:$0xff]
        %v885 = vld [vmem:[#allocation7 + $0x20] sm:$0xff]
        %v886 = vld [vmem:[#allocation7 + $0x28] sm:$0xff]
        %v887 = vld [vmem:[#allocation7 + $0x30] sm:$0xff]
        %v888 = vld [vmem:[#allocation7 + $0x38] sm:$0xff]
        %v889 = vld [vmem:[#allocation7 + $0x40] sm:$0xff]
        %v890 = vld [vmem:[#allocation7 + $0x48] sm:$0xff]
        %v891 = vld [vmem:[#allocation7 + $0x50] sm:$0xff]
        %v892 = vld [vmem:[#allocation7 + $0x58] sm:$0xff]
        %v893 = vld [vmem:[#allocation7 + $0x60] sm:$0xff]
        %v894 = vld [vmem:[#allocation7 + $0x68] sm:$0xff]
        %v895 = vld [vmem:[#allocation7 + $0x70] sm:$0xff]
        %v896 = vld [vmem:[#allocation7 + $0x78] sm:$0xff]
        %v897 = vld [vmem:[#allocation7 + $0x80] sm:$0xff]
        %v898 = vld [vmem:[#allocation7 + $0x88] sm:$0xff]
        %v899 = vld [vmem:[#allocation7 + $0x90] sm:$0xff]
        %v900 = vld [vmem:[#allocation7 + $0x98] sm:$0xff]
        %v901 = vld [vmem:[#allocation7 + $0xa0] sm:$0xff]
        %v902 = vld [vmem:[#allocation7 + $0xa8] sm:$0xff]
        %v903 = vld [vmem:[#allocation7 + $0xb0] sm:$0xff]
        %v904 = vld [vmem:[#allocation7 + $0xb8] sm:$0xff]
        %v905 = vld [vmem:[#allocation7 + $0xc0] sm:$0xff]
        %v906 = vld [vmem:[#allocation7 + $0xc8] sm:$0xff]
        %v907 = vld [vmem:[#allocation7 + $0xd0] sm:$0xff]
        %v908 = vld [vmem:[#allocation7 + $0xd8] sm:$0xff]
        %v909 = vld [vmem:[#allocation7 + $0xe0] sm:$0xff]
        %v910 = vld [vmem:[#allocation7 + $0xe8] sm:$0xff]
        %v911 = vld [vmem:[#allocation7 + $0xf0] sm:$0xff]
        %v912 = vld [vmem:[#allocation7 + $0xf8] sm:$0xff]
        %v913 = vld [vmem:[#allocation7 + $0x100] sm:$0xff]
        %v914 = vld [vmem:[#allocation7 + $0x108] sm:$0xff]
        %v915 = vld [vmem:[#allocation7 + $0x110] sm:$0xff]
        %v916 = vld [vmem:[#allocation7 + $0x118] sm:$0xff]
        %v917 = vld [vmem:[#allocation7 + $0x120] sm:$0xff]
        %v918 = vld [vmem:[#allocation7 + $0x128] sm:$0xff]
        %v919 = vld [vmem:[#allocation7 + $0x130] sm:$0xff]
        %v920 = vld [vmem:[#allocation7 + $0x138] sm:$0xff]
        %v921 = vld [vmem:[#allocation7 + $0x140] sm:$0xff]
        %v922 = vld [vmem:[#allocation7 + $0x148] sm:$0xff]
        %v923 = vld [vmem:[#allocation7 + $0x150] sm:$0xff]
        %v924 = vld [vmem:[#allocation7 + $0x158] sm:$0xff]
        %v925 = vld [vmem:[#allocation7 + $0x160] sm:$0xff]
        %v926 = vld [vmem:[#allocation7 + $0x168] sm:$0xff]
        %v927 = vld [vmem:[#allocation7 + $0x170] sm:$0xff]
        %v928 = vld [vmem:[#allocation7 + $0x178] sm:$0xff]
        %v929 = vld [vmem:[#allocation10] sm:$0x1]
        %v931 = vlaneseq
        %v932 = vshrl.u32 %v931, 7
        %v933 = vsub.s32 0, %v932
        %v934 = vrot.slane %v929, %v933
        %936 = vmatprep.subr.mxu0 0.0
        %937 = vmatpush1.msra.mxu0 %v881
        %938 = vmatprep.subr.mxu0 0.0
        %939 = vmatpush1.msra.mxu0 %v882
        %940 = vmatprep.subr.mxu0 0.0
        %941 = vmatpush1.msra.mxu0 %v883
        %942 = vmatprep.subr.mxu0 0.0
        %943 = vmatpush1.msra.mxu0 %v884
        %944 = vmatprep.subr.mxu0 0.0
        %945 = vmatpush1.msra.mxu0 %v885
        %946 = vmatprep.subr.mxu0 0.0
        %947 = vmatpush1.msra.mxu0 %v886
        %948 = vmatprep.subr.mxu0 0.0
        %949 = vmatpush1.msra.mxu0 %v887
        %950 = vmatprep.subr.mxu0 0.0
        %951 = vmatpush1.msra.mxu0 %v888
        %952 = vmatprep.subr.mxu0 0.0
        %953 = vmatpush1.msra.mxu0 %v889
        %954 = vmatprep.subr.mxu0 0.0
        %955 = vmatpush1.msra.mxu0 %v890
        %956 = vmatprep.subr.mxu0 0.0
        %957 = vmatpush1.msra.mxu0 %v891
        %958 = vmatprep.subr.mxu0 0.0
        %959 = vmatpush1.msra.mxu0 %v892
        %960 = vmatprep.subr.mxu0 0.0
        %961 = vmatpush1.msra.mxu0 %v893
        %962 = vmatprep.subr.mxu0 0.0
        %963 = vmatpush1.msra.mxu0 %v894
        %964 = vmatprep.subr.mxu0 0.0
        %965 = vmatpush1.msra.mxu0 %v895
        %966 = vmatprep.subr.mxu0 0.0
        %967 = vmatpush1.msra.mxu0 %v896
        %968 = vmatprep.subr.mxu0 0.0
        %969 = vmatpush1.msra.mxu0 %v897
        %970 = vmatprep.subr.mxu0 0.0
        %971 = vmatpush1.msra.mxu0 %v898
        %972 = vmatprep.subr.mxu0 0.0
        %973 = vmatpush1.msra.mxu0 %v899
        %974 = vmatprep.subr.mxu0 0.0
        %975 = vmatpush1.msra.mxu0 %v900
        %976 = vmatprep.subr.mxu0 0.0
        %977 = vmatpush1.msra.mxu0 %v901
        %978 = vmatprep.subr.mxu0 0.0
        %979 = vmatpush1.msra.mxu0 %v902
        %980 = vmatprep.subr.mxu0 0.0
        %981 = vmatpush1.msra.mxu0 %v903
        %982 = vmatprep.subr.mxu0 0.0
        %983 = vmatpush1.msra.mxu0 %v904
        %984 = vmatprep.subr.mxu0 0.0
        %985 = vmatpush1.msra.mxu0 %v905
        %986 = vmatprep.subr.mxu0 0.0
        %987 = vmatpush1.msra.mxu0 %v906
        %988 = vmatprep.subr.mxu0 0.0
        %989 = vmatpush1.msra.mxu0 %v907
        %990 = vmatprep.subr.mxu0 0.0
        %991 = vmatpush1.msra.mxu0 %v908
        %992 = vmatprep.subr.mxu0 0.0
        %993 = vmatpush1.msra.mxu0 %v909
        %994 = vmatprep.subr.mxu0 0.0
        %995 = vmatpush1.msra.mxu0 %v910
        %996 = vmatprep.subr.mxu0 0.0
        %997 = vmatpush1.msra.mxu0 %v911
        %998 = vmatprep.subr.mxu0 0.0
        %999 = vmatpush1.msra.mxu0 %v912
        %1000 = vmatprep.mubr.f32.mxu0 %v870
        %1001 = vmatmul.mubr.f32.gmra.mrb[0].mxu0 %v875
        %v1002 = vpop.f32.mrb[0].mxu0
        %v1003 = vadd.f32 %v934, %v1002
        %v1004 = vpop.f32.mrb[0].mxu0
        %1005 = vdwg.mxu0
        %1006 = vmatprep.subr.mxu0 0.0
        %1007 = vmatpush1.msra.mxu0 %v913
        %1008 = vmatprep.subr.mxu0 0.0
        %1009 = vmatpush1.msra.mxu0 %v914
        %1010 = vmatprep.subr.mxu0 0.0
        %1011 = vmatpush1.msra.mxu0 %v915
        %1012 = vmatprep.subr.mxu0 0.0
        %1013 = vmatpush1.msra.mxu0 %v916
        %1014 = vmatprep.subr.mxu0 0.0
        %1015 = vmatpush1.msra.mxu0 %v917
        %1016 = vmatprep.subr.mxu0 0.0
        %1017 = vmatpush1.msra.mxu0 %v918
        %1018 = vmatprep.subr.mxu0 0.0
        %1019 = vmatpush1.msra.mxu0 %v919
        %1020 = vmatprep.subr.mxu0 0.0
        %1021 = vmatpush1.msra.mxu0 %v920
        %1022 = vmatprep.subr.mxu0 0.0
        %1023 = vmatpush1.msra.mxu0 %v921
        %1024 = vmatprep.subr.mxu0 0.0
        %1025 = vmatpush1.msra.mxu0 %v922
        %1026 = vmatprep.subr.mxu0 0.0
        %1027 = vmatpush1.msra.mxu0 %v923
        %1028 = vmatprep.subr.mxu0 0.0
        %1029 = vmatpush1.msra.mxu0 %v924
        %1030 = vmatprep.subr.mxu0 0.0
        %1031 = vmatpush1.msra.mxu0 %v925
        %1032 = vmatprep.subr.mxu0 0.0
        %1033 = vmatpush1.msra.mxu0 %v926
        %1034 = vmatprep.subr.mxu0 0.0
        %1035 = vmatpush1.msra.mxu0 %v927
        %1036 = vmatprep.subr.mxu0 0.0
        %1037 = vmatpush1.msra.mxu0 %v928
        %1038 = vmatprep.subr.mxu0 0.0
        %1039 = vmatpush1.msra.mxu0 0.0
        %1040 = vmatprep.subr.mxu0 0.0
        %1041 = vmatpush1.msra.mxu0 0.0
        %1042 = vmatprep.subr.mxu0 0.0
        %1043 = vmatpush1.msra.mxu0 0.0
        %1044 = vmatprep.subr.mxu0 0.0
        %1045 = vmatpush1.msra.mxu0 0.0
        %1046 = vmatprep.subr.mxu0 0.0
        %1047 = vmatpush1.msra.mxu0 0.0
        %1048 = vmatprep.subr.mxu0 0.0
        %1049 = vmatpush1.msra.mxu0 0.0
        %1050 = vmatprep.subr.mxu0 0.0
        %1051 = vmatpush1.msra.mxu0 0.0
        %1052 = vmatprep.subr.mxu0 0.0
        %1053 = vmatpush1.msra.mxu0 0.0
        %1054 = vmatprep.subr.mxu0 0.0
        %1055 = vmatpush1.msra.mxu0 0.0
        %1056 = vmatprep.subr.mxu0 0.0
        %1057 = vmatpush1.msra.mxu0 0.0
        %1058 = vmatprep.subr.mxu0 0.0
        %1059 = vmatpush1.msra.mxu0 0.0
        %1060 = vmatprep.subr.mxu0 0.0
        %1061 = vmatpush1.msra.mxu0 0.0
        %1062 = vmatprep.subr.mxu0 0.0
        %1063 = vmatpush1.msra.mxu0 0.0
        %1064 = vmatprep.subr.mxu0 0.0
        %1065 = vmatpush1.msra.mxu0 0.0
        %1066 = vmatprep.subr.mxu0 0.0
        %1067 = vmatpush1.msra.mxu0 0.0
        %1068 = vmatprep.subr.mxu0 0.0
        %1069 = vmatpush1.msra.mxu0 0.0
        %1070 = vmatprep.mubr.f32.mxu0 0.0
        %1071 = vmatmul.mubr.f32.gmra.mrb[0].mxu0 %v880
        %v1072 = vpop.f32.mrb[0].mxu0
        %v1073 = vadd.f32 %v1003, %v1072
        %v1074 = vpop.f32.mrb[0].mxu0
        %1075 = vdwg.mxu0
        %v1076 = vld [vmem:[#allocation11] sm:$0x1]
        %v1077 = vld [vmem:[#allocation13] sm:$0x1]
        %v1078 = vld [vmem:[%s10] sm:$0xff]
        %v1079 = vld [vmem:[%s10 + $0x8] sm:$0xff]
        %v1080 = vmul.f32 %v1073, %v1073
        %v1081 = vrot.slane %v1073, 4
        %v1082 = vadd.f32 %v1073, %v1081
        %v1083 = vrot.slane %v1082, 2
        %v1084 = vadd.f32 %v1082, %v1083
        %v1085 = vrot.slane %v1084, 1
        %v1086 = vadd.f32 %v1084, %v1085
        %v1087 = vrot.slane %v1080, 4
        %v1088 = vadd.f32 %v1080, %v1087
        %v1089 = vrot.slane %v1088, 2
        %v1090 = vadd.f32 %v1088, %v1089
        %v1091 = vrot.slane %v1090, 1
        %v1092 = vadd.f32 %v1090, %v1091
        %1093 = vmatprep.subr.mxu0 %v1079
        %1094 = vmatpush1.xpose.msra.mxu0 %v1078
        %1095 = vmatprep.subr.mxu0 0.0
        %1096 = vmatpush1.xpose.msra.mxu0 0.0
        %1097 = vmatprep.subr.mxu0 0.0
        %1098 = vmatpush1.xpose.msra.mxu0 0.0
        %1099 = vmatprep.subr.mxu0 0.0
        %1100 = vmatpush1.xpose.msra.mxu0 0.0
        %1101 = vmatprep.subr.mxu0 0.0
        %1102 = vmatpush1.xpose.msra.mxu0 0.0
        %1103 = vmatprep.subr.mxu0 0.0
        %1104 = vmatpush1.xpose.msra.mxu0 0.0
        %1105 = vmatprep.subr.mxu0 0.0
        %1106 = vmatpush1.xpose.msra.mxu0 0.0
        %1107 = vmatprep.subr.mxu0 0.0
        %1108 = vmatpush1.xpose.msra.mxu0 0.0
        %1109 = vmatprep.subr.mxu0 0.0
        %1110 = vmatpush1.xpose.msra.mxu0 0.0
        %1111 = vmatprep.subr.mxu0 0.0
        %1112 = vmatpush1.xpose.msra.mxu0 0.0
        %1113 = vmatprep.subr.mxu0 0.0
        %1114 = vmatpush1.xpose.msra.mxu0 0.0
        %1115 = vmatprep.subr.mxu0 0.0
        %1116 = vmatpush1.xpose.msra.mxu0 0.0
        %1117 = vmatprep.subr.mxu0 0.0
        %1118 = vmatpush1.xpose.msra.mxu0 0.0
        %1119 = vmatprep.subr.mxu0 0.0
        %1120 = vmatpush1.xpose.msra.mxu0 0.0
        %1121 = vmatprep.subr.mxu0 0.0
        %1122 = vmatpush1.xpose.msra.mxu0 0.0
        %1123 = vmatprep.subr.mxu0 0.0
        %1124 = vmatpush1.xpose.msra.mxu0 0.0
        %1125 = vmatprep.subr.mxu0 0.0
        %1126 = vmatpush1.xpose.msra.mxu0 0.0
        %1127 = vmatprep.subr.mxu0 0.0
        %1128 = vmatpush1.xpose.msra.mxu0 0.0
        %1129 = vmatprep.subr.mxu0 0.0
        %1130 = vmatpush1.xpose.msra.mxu0 0.0
        %1131 = vmatprep.subr.mxu0 0.0
        %1132 = vmatpush1.xpose.msra.mxu0 0.0
        %1133 = vmatprep.subr.mxu0 0.0
        %1134 = vmatpush1.xpose.msra.mxu0 0.0
        %1135 = vmatprep.subr.mxu0 0.0
        %1136 = vmatpush1.xpose.msra.mxu0 0.0
        %1137 = vmatprep.subr.mxu0 0.0
        %1138 = vmatpush1.xpose.msra.mxu0 0.0
        %1139 = vmatprep.subr.mxu0 0.0
        %1140 = vmatpush1.xpose.msra.mxu0 0.0
        %1141 = vmatprep.subr.mxu0 0.0
        %1142 = vmatpush1.xpose.msra.mxu0 0.0
        %1143 = vmatprep.subr.mxu0 0.0
        %1144 = vmatpush1.xpose.msra.mxu0 0.0
        %1145 = vmatprep.subr.mxu0 0.0
        %1146 = vmatpush1.xpose.msra.mxu0 0.0
        %1147 = vmatprep.subr.mxu0 0.0
        %1148 = vmatpush1.xpose.msra.mxu0 0.0
        %1149 = vmatprep.subr.mxu0 0.0
        %1150 = vmatpush1.xpose.msra.mxu0 0.0
        %1151 = vmatprep.subr.mxu0 0.0
        %1152 = vmatpush1.xpose.msra.mxu0 0.0
        %1153 = vmatprep.subr.mxu0 0.0
        %1154 = vmatpush1.xpose.msra.mxu0 0.0
        %1155 = vmatprep.subr.mxu0 0.0
        %1156 = vmatpush1.xpose.msra.mxu0 0.0
        %1157 = vmatprep.mubr.f32.mxu0 %v1092
        %1158 = vmatmul.mubr.f32.gmra.mrb[0].mxu0 %v1086
        %v1159 = vpop.f32.mrb[0].mxu0
        %v1160 = vadd.f32 0.0, %v1159
        %v1161 = vpop.f32.mrb[0].mxu0
        %1162 = vdwg.mxu0
        %v1163 = vmul.f32 %v1160, 0.0078125
        %v1164 = vmul.f32 %v1163, %v1163
        %1166 = vrot.lane.b32.xlu0 %v1164, 4
        %v1167 = vpop.permute.xlu0 %1166
        %v1169 = vsub.f32 %v1163, %v1167
        %v1170 = vmax.f32 %v1169, 0.0
        %v1171 = vadd.f32 %v1170, 1e-05
        %v1172 = vrsqrt.pop %v1171
        %v1174 = vsel %vm700, %v1163, 0
        %v1177 = vsel %vm704, %v1078, 0
        %1179 = vmatprep.subr.mxu0 0.0
        %1180 = vmatpush1.msra.mxu0 %v1177
        %1181 = vmatprep.subr.mxu0 0.0
        %1182 = vmatpush1.msra.mxu0 0.0
        %1183 = vmatprep.subr.mxu0 0.0
        %1184 = vmatpush1.msra.mxu0 0.0
        %1185 = vmatprep.subr.mxu0 0.0
        %1186 = vmatpush1.msra.mxu0 0.0
        %1187 = vmatprep.subr.mxu0 0.0
        %1188 = vmatpush1.msra.mxu0 0.0
        %1189 = vmatprep.subr.mxu0 0.0
        %1190 = vmatpush1.msra.mxu0 0.0
        %1191 = vmatprep.subr.mxu0 0.0
        %1192 = vmatpush1.msra.mxu0 0.0
        %1193 = vmatprep.subr.mxu0 0.0
        %1194 = vmatpush1.msra.mxu0 0.0
        %1195 = vmatprep.subr.mxu0 0.0
        %1196 = vmatpush1.msra.mxu0 0.0
        %1197 = vmatprep.subr.mxu0 0.0
        %1198 = vmatpush1.msra.mxu0 0.0
        %1199 = vmatprep.subr.mxu0 0.0
        %1200 = vmatpush1.msra.mxu0 0.0
        %1201 = vmatprep.subr.mxu0 0.0
        %1202 = vmatpush1.msra.mxu0 0.0
        %1203 = vmatprep.subr.mxu0 0.0
        %1204 = vmatpush1.msra.mxu0 0.0
        %1205 = vmatprep.subr.mxu0 0.0
        %1206 = vmatpush1.msra.mxu0 0.0
        %1207 = vmatprep.subr.mxu0 0.0
        %1208 = vmatpush1.msra.mxu0 0.0
        %1209 = vmatprep.subr.mxu0 0.0
        %1210 = vmatpush1.msra.mxu0 0.0
        %1211 = vmatprep.subr.mxu0 0.0
        %1212 = vmatpush1.msra.mxu0 0.0
        %1213 = vmatprep.subr.mxu0 0.0
        %1214 = vmatpush1.msra.mxu0 0.0
        %1215 = vmatprep.subr.mxu0 0.0
        %1216 = vmatpush1.msra.mxu0 0.0
        %1217 = vmatprep.subr.mxu0 0.0
        %1218 = vmatpush1.msra.mxu0 0.0
        %1219 = vmatprep.subr.mxu0 0.0
        %1220 = vmatpush1.msra.mxu0 0.0
        %1221 = vmatprep.subr.mxu0 0.0
        %1222 = vmatpush1.msra.mxu0 0.0
        %1223 = vmatprep.subr.mxu0 0.0
        %1224 = vmatpush1.msra.mxu0 0.0
        %1225 = vmatprep.subr.mxu0 0.0
        %1226 = vmatpush1.msra.mxu0 0.0
        %1227 = vmatprep.subr.mxu0 0.0
        %1228 = vmatpush1.msra.mxu0 0.0
        %1229 = vmatprep.subr.mxu0 0.0
        %1230 = vmatpush1.msra.mxu0 0.0
        %1231 = vmatprep.subr.mxu0 0.0
        %1232 = vmatpush1.msra.mxu0 0.0
        %1233 = vmatprep.subr.mxu0 0.0
        %1234 = vmatpush1.msra.mxu0 0.0
        %1235 = vmatprep.subr.mxu0 0.0
        %1236 = vmatpush1.msra.mxu0 0.0
        %1237 = vmatprep.subr.mxu0 0.0
        %1238 = vmatpush1.msra.mxu0 0.0
        %1239 = vmatprep.subr.mxu0 0.0
        %1240 = vmatpush1.msra.mxu0 0.0
        %1241 = vmatprep.subr.mxu0 0.0
        %1242 = vmatpush1.msra.mxu0 0.0
        %1243 = vmatprep.mubr.f32.mxu0 0.0
        %1244 = vmatmul.mubr.f32.gmra.mrb[0].mxu0 %v1174
        %v1245 = vpop.f32.mrb[0].mxu0
        %v1246 = vadd.f32 0.0, %v1245
        %v1247 = vpop.f32.mrb[0].mxu0
        %1248 = vdwg.mxu0
        %1250 = vrot.lane.b32.xlu0 %v1172, 124
        %v1251 = vpop.permute.xlu0 %1250
        %v1252 = vsel %vm700, %v1251, 0
        %1254 = vmatprep.subr.mxu0 0.0
        %1255 = vmatpush1.msra.mxu0 %v1177
        %1256 = vmatprep.subr.mxu0 0.0
        %1257 = vmatpush1.msra.mxu0 0.0
        %1258 = vmatprep.subr.mxu0 0.0
        %1259 = vmatpush1.msra.mxu0 0.0
        %1260 = vmatprep.subr.mxu0 0.0
        %1261 = vmatpush1.msra.mxu0 0.0
        %1262 = vmatprep.subr.mxu0 0.0
        %1263 = vmatpush1.msra.mxu0 0.0
        %1264 = vmatprep.subr.mxu0 0.0
        %1265 = vmatpush1.msra.mxu0 0.0
        %1266 = vmatprep.subr.mxu0 0.0
        %1267 = vmatpush1.msra.mxu0 0.0
        %1268 = vmatprep.subr.mxu0 0.0
        %1269 = vmatpush1.msra.mxu0 0.0
        %1270 = vmatprep.subr.mxu0 0.0
        %1271 = vmatpush1.msra.mxu0 0.0
        %1272 = vmatprep.subr.mxu0 0.0
        %1273 = vmatpush1.msra.mxu0 0.0
        %1274 = vmatprep.subr.mxu0 0.0
        %1275 = vmatpush1.msra.mxu0 0.0
        %1276 = vmatprep.subr.mxu0 0.0
        %1277 = vmatpush1.msra.mxu0 0.0
        %1278 = vmatprep.subr.mxu0 0.0
        %1279 = vmatpush1.msra.mxu0 0.0
        %1280 = vmatprep.subr.mxu0 0.0
        %1281 = vmatpush1.msra.mxu0 0.0
        %1282 = vmatprep.subr.mxu0 0.0
        %1283 = vmatpush1.msra.mxu0 0.0
        %1284 = vmatprep.subr.mxu0 0.0
        %1285 = vmatpush1.msra.mxu0 0.0
        %1286 = vmatprep.subr.mxu0 0.0
        %1287 = vmatpush1.msra.mxu0 0.0
        %1288 = vmatprep.subr.mxu0 0.0
        %1289 = vmatpush1.msra.mxu0 0.0
        %1290 = vmatprep.subr.mxu0 0.0
        %1291 = vmatpush1.msra.mxu0 0.0
        %1292 = vmatprep.subr.mxu0 0.0
        %1293 = vmatpush1.msra.mxu0 0.0
        %1294 = vmatprep.subr.mxu0 0.0
        %1295 = vmatpush1.msra.mxu0 0.0
        %1296 = vmatprep.subr.mxu0 0.0
        %1297 = vmatpush1.msra.mxu0 0.0
        %1298 = vmatprep.subr.mxu0 0.0
        %1299 = vmatpush1.msra.mxu0 0.0
        %1300 = vmatprep.subr.mxu0 0.0
        %1301 = vmatpush1.msra.mxu0 0.0
        %1302 = vmatprep.subr.mxu0 0.0
        %1303 = vmatpush1.msra.mxu0 0.0
        %1304 = vmatprep.subr.mxu0 0.0
        %1305 = vmatpush1.msra.mxu0 0.0
        %1306 = vmatprep.subr.mxu0 0.0
        %1307 = vmatpush1.msra.mxu0 0.0
        %1308 = vmatprep.subr.mxu0 0.0
        %1309 = vmatpush1.msra.mxu0 0.0
        %1310 = vmatprep.subr.mxu0 0.0
        %1311 = vmatpush1.msra.mxu0 0.0
        %1312 = vmatprep.subr.mxu0 0.0
        %1313 = vmatpush1.msra.mxu0 0.0
        %1314 = vmatprep.subr.mxu0 0.0
        %1315 = vmatpush1.msra.mxu0 0.0
        %1316 = vmatprep.subr.mxu0 0.0
        %1317 = vmatpush1.msra.mxu0 0.0
        %1318 = vmatprep.mubr.f32.mxu0 0.0
        %1319 = vmatmul.mubr.f32.gmra.mrb[0].mxu0 %v1252
        %v1320 = vpop.f32.mrb[0].mxu0
        %v1321 = vadd.f32 0.0, %v1320
        %v1322 = vpop.f32.mrb[0].mxu0
        %1323 = vdwg.mxu0
        %v1324 = vmul.f32 %v1076, %v1321
        %v1325 = vmul.f32 %v1246, %v1324
        %v1326 = vsub.f32 %v1077, %v1325
        %v1328 = vlaneseq
        %v1329 = vshrl.u32 %v1328, 7
        %v1330 = vsub.s32 0, %v1329
        %v1331 = vrot.slane %v1324, %v1330
        %v1333 = vmul.f32 %v1073, %v1331
        %v1335 = vlaneseq
        %v1336 = vshrl.u32 %v1335, 7
        %v1337 = vsub.s32 0, %v1336
        %v1338 = vrot.slane %v1326, %v1337
        %v1340 = vadd.f32 %v1333, %v1338
        %v1341 = vmax.f32 %v1340, 0.0
        %1342 = vst [vmem:[%s481] sm:$0xff] %v1341
        %s1343 = sand.u32 %s275, 1
        %s1344 = scalar_lea.sflag [#allocation4], %s1343
        %s1345 = sand.u32 %s275, 1
        %s1346 = smul.addr %s1345, 8
        %s1347 = scalar_lea.vmem [#allocation14], %s1346
        // Predicated region
        $region93: #{tpu_custom_call.1} parent=63 // pred_check
          %p1348 = pneg %p285
        $region94: #{tpu_custom_call.1} parent=63 // pred_check_branch
          %1350 = sbr.rel (%p1348) target = $region96
        $region95: #{tpu_custom_call.1} parent=63 // pred_region
          %s1352 = ssub.s32 128, 128
          %1353 = vsyncadd %s1344, %s1352
          %s1354 = smul.addr %s31, 128
          %s1355 = scalar_lea.hbm %s11, %s1354
          %s1357 = sshll.u32 %s1347, 4
          %s1358 = int_to_ptr.vmem [resolvable:$true] %s1357
          %1360 = dma.vmem_to_hbm [thread:$0]  %s1358, 128, %s1355, %s1344
        $region96: #{tpu_custom_call.1} parent=63 // pred_fallthru
          _
      $region64: #{tpu_custom_call.1} parent=5 // pred_fallthru
        _
      %p1361 = scmp.le.s32.totalorder 2, %s26
      // Predicated region
      $region97: #{tpu_custom_call.1} parent=5 // pred_check
        %p1362 = pneg %p1361
      $region98: #{tpu_custom_call.1} parent=5 // pred_check_branch
        %1364 = sbr.rel (%p1362) target = $region100
      $region99: #{tpu_custom_call.1} parent=5 // pred_region
        %s1365 = ssub.s32 %s26, 2
        // Predicated region
        $region101: #{tpu_custom_call.1} parent=99 // pred_check
          %p1366 = pneg %p291
        $region102: #{tpu_custom_call.1} parent=99 // pred_check_branch
          %1368 = sbr.rel (%p1366) target = $region104
        $region103: #{tpu_custom_call.1} parent=99 // pred_region
          %s1369 = sand.u32 %s276, 1
          %s1370 = scalar_lea.sflag [#allocation4], %s1369
          %s1371 = sand.u32 %s276, 1
          %s1372 = smul.addr %s1371, 8
          %s1373 = scalar_lea.vmem [#allocation14], %s1372
          %1374 = dma.done %s1370, 128
        $region104: #{tpu_custom_call.1} parent=99 // pred_fallthru
          _
      $region100: #{tpu_custom_call.1} parent=5 // pred_fallthru
        _
    $region6: #{tpu_custom_call.1} parent=1 // loop_footer
      %s30 = sadd.s32 1, %s26
    $region7: #{tpu_custom_call.1} parent=1 // loop_footer_branch
      %25 = sbr.rel target = $region3
    $region8: #{tpu_custom_call.1} parent=1 // loop_exit
      _
    %1375 = vsyncpa [#allocation3], 1
    %s1376 = scalar_lea.sflag [#allocation3], 1
    %1377 = vsyncpa %s1376, 1
    %1378 = vsyncpa [#allocation6], 1
    %1379 = vsyncpa [#allocation9], 1
    %1380 = vsyncpa [#allocation12], 1
    %1381 = vsyncpa [#allocation4], 1
    %s1382 = scalar_lea.sflag [#allocation4], 1
    %1383 = vsyncpa %s1382, 1

</llo_original>
